<compile_context>
chip_gen: v5e
topology: v5e:2x2
jax: 0.10.0
libtpu: 0.0.40
codegen_flags: <defaults>
</compile_context>

<pallas_src>
import functools

import numpy as np
import jax
import jax.numpy as jnp
from jax.experimental import pallas as pl
from jax.experimental.pallas import tpu as pltpu

NEG_SLOPE = 0.2                              # PyG GATConv default negative_slope
NEG_INF = -1e30
DIMS = [32, 64, 256, 1024, 256, 64, 3]       # channel sizes of block1_1 .. block1_6


# ----------------------------- fused kernel ---------------------------------
def fused_gat_kernel(*refs, num_layers):
    """All GATConv layers in one kernel.

    refs layout:
      refs[0]            : mask_bias  [N, N]   (0 where edge/self-loop, -1e30 else)
      refs[1]            : x          [N, C0]
      refs[2 + 2*i]      : w_aug_i    [Cin_i, Cout_i + 2]  ([W | W@a_src^T | W@a_dst^T])
      refs[2 + 2*i + 1]  : bias_i     [1, Cout_i]
      refs[-1]           : output     [N, Cout_last]
    """
    mask_ref = refs[0]
    x_ref = refs[1]
    o_ref = refs[-1]
    layer_refs = refs[2:-1]

    mask_bias = mask_ref[...]                 # loaded once, reused by every layer
    h_in = x_ref[...]
    n = h_in.shape[0]

    for i in range(num_layers):
        w_aug = layer_refs[2 * i][...]        # [Cin, Cout + 2]
        bias = layer_refs[2 * i + 1][...]     # [1, Cout]
        cout = bias.shape[-1]

        # One MXU matmul gives h and both per-node attention scalars.
        h_aug = jnp.dot(h_in, w_aug, preferred_element_type=jnp.float32)
        h = h_aug[:, :cout]                   # [N, Cout]
        a_src = h_aug[:, cout:cout + 1]       # [N, 1]  (sum_c h*att_src)
        a_dst = h_aug[:, cout + 1:cout + 2]   # [N, 1]  (sum_c h*att_dst)

        # e[i, j] = leaky_relu(a_dst[i] + a_src[j]), masked via additive bias.
        e = a_dst + a_src.T                   # [N, N]
        e = jnp.where(e > 0, e, NEG_SLOPE * e)
        e = e + mask_bias
        e = e - jnp.max(e, axis=-1, keepdims=True)
        p = jnp.exp(e)                        # masked entries underflow to 0
        r = pl.reciprocal(jnp.sum(p, axis=-1, keepdims=True), approx=True)  # [N,1]

        # out[i] = sum_j alpha[i, j] * h[j] + bias   (MXU matmul). Normalize on
        # whichever side of the matmul has fewer elements.
        if cout >= n:
            out = jnp.dot(p * r, h, preferred_element_type=jnp.float32) + bias
        else:
            out = jnp.dot(p, h, preferred_element_type=jnp.float32) * r + bias
        if i < num_layers - 1:                # ReLU on all but the last layer
            out = jnp.maximum(out, 0.0)
        h_in = out

    o_ref[...] = h_in


# ------------------------------- wrapper -------------------------------------
def gat_model_forward(points, params, mask_bias, in_features=32):
    """Mirrors GATConvModel.forward; single fused pallas_call."""
    b = points.shape[0]
    x = points.reshape(b, -1, in_features).reshape(-1, in_features)
    n = x.shape[0]
    num_layers = len(params)
    cout_final = params[-1][1].shape[-1]

    flat_inputs = [mask_bias, x]
    flops = 0
    transcendentals = 0
    bytes_accessed = (mask_bias.size + x.size) * 4
    for (w_aug, bias) in params:
        flat_inputs += [w_aug, bias]
        cin, cout_p2 = w_aug.shape
        cout = bias.shape[-1]
        flops += 2 * n * cin * cout_p2        # linear (+ attention projections)
        flops += 2 * n * n * cout             # attention-weighted aggregation
        flops += 6 * n * n                    # leaky-relu / softmax elementwise
        transcendentals += n * n + n          # exp + reciprocal
        bytes_accessed += (w_aug.size + bias.size) * 4
    bytes_accessed += n * cout_final * 4

    vmem = lambda: pl.BlockSpec(memory_space=pltpu.MemorySpace.VMEM)
    out = pl.pallas_call(
        functools.partial(fused_gat_kernel, num_layers=num_layers),
        out_shape=jax.ShapeDtypeStruct((n, cout_final), jnp.float32),
        in_specs=[vmem() for _ in flat_inputs],
        out_specs=vmem(),
        compiler_params=pltpu.CompilerParams(vmem_limit_bytes=32 * 1024 * 1024),
        cost_estimate=pl.CostEstimate(flops=int(flops),
                                      transcendentals=int(transcendentals),
                                      bytes_accessed=int(bytes_accessed)),
    )(*flat_inputs)
    return out.reshape(b, -1, cout_final)


# ---------------------------- pure-JAX reference -----------------------------
def gat_model_reference(points, params, mask_bias, in_features=32):
    """Same math (dense masked-softmax GAT) with plain jnp ops, exact division."""
    b = points.shape[0]
    h = points.reshape(b, -1, in_features).reshape(-1, in_features)
    num_layers = len(params)
    for i, (w_aug, bias) in enumerate(params):
        cout = bias.shape[-1]
        h_aug = h @ w_aug
        hh = h_aug[:, :cout]
        a_src = h_aug[:, cout:cout + 1]
        a_dst = h_aug[:, cout + 1:cout + 2]
        e = a_dst + a_src.T
        e = jnp.where(e > 0, e, NEG_SLOPE * e) + mask_bias
        e = e - jnp.max(e, axis=-1, keepdims=True)
        p = jnp.exp(e)
        p = p / jnp.sum(p, axis=-1, keepdims=True)
        out = p @ hh + bias
        if i < num_layers - 1:
            out = jnp.maximum(out, 0.0)
        h = out
    return h.reshape(b, -1, params[-1][1].shape[-1])


# ----------------------------- parameter setup ------------------------------
def _glorot(key, shape):
    fan_in, fan_out = shape[0], shape[-1]
    limit = np.sqrt(6.0 / (fan_in + fan_out))
    return jax.random.uniform(key, shape, jnp.float32, -limit, limit)


def init_params(key):
    """Per layer: (w_aug [Cin, Cout+2], bias [1, Cout]); attention folded into W."""
    params = []
    for i in range(len(DIMS) - 1):
        cin, cout = DIMS[i], DIMS[i + 1]
        key, k1, k2, k3 = jax.random.split(key, 4)
        w = _glorot(k1, (cin, cout))
        att_src = _glorot(k2, (1, cout))
        att_dst = _glorot(k3, (1, cout))
        bias = jnp.zeros((1, cout), jnp.float32)      # PyG GATConv bias init = zeros
        w_aug = jnp.concatenate([w, w @ att_src.T, w @ att_dst.T], axis=1)
        params.append((w_aug, bias))
    return params


# 21-joint hand skeleton edges (undirected -> both directions added below).
HAND_EDGES = [(0, 1), (1, 2), (2, 3), (3, 4),
              (0, 5), (5, 6), (6, 7), (7, 8),
              (0, 9), (9, 10), (10, 11), (11, 12),
              (0, 13), (13, 14), (14, 15), (15, 16),
              (0, 17), (17, 18), (18, 19), (19, 20)]


def build_mask_bias(edge_index, batch):
    """Batched block-diagonal adjacency (PyTorch offset loop + PyG add_self_loops),
    stored as an additive softmax bias: 0 where edge j->i or i==j, -1e30 elsewhere."""
    offset = int(edge_index.max()) + 1
    total = offset * batch
    adj = np.zeros((total, total), np.float32)
    src, dst = edge_index
    for i in range(batch):
        adj[dst + offset * i, src + offset * i] = 1.0
    np.fill_diagonal(adj, 1.0)
    return jnp.asarray(np.where(adj > 0, 0.0, NEG_INF).astype(np.float32))


if __name__ == "__main__":
    key = jax.random.PRNGKey(0)
    k_param, k_x = jax.random.split(key)

    params = init_params(k_param)

    B, V, F = 2, 21, 32                      # batch, hand joints, in_features
    points = jax.random.normal(k_x, (B, V, F), jnp.float32)

    edge_index = np.array(HAND_EDGES, dtype=np.int32).T                   # (2, 20)
    edge_index = np.concatenate([edge_index, edge_index[::-1]], axis=1)   # bidirectional
    mask_bias = build_mask_bias(edge_index, B)                            # (42, 42)

    forward = jax.jit(functools.partial(gat_model_forward, in_features=F))
    out = forward(points, params, mask_bias)
    out = jax.block_until_ready(out)

    assert out.shape == (B, V, 3), out.shape
    assert bool(jnp.all(jnp.isfinite(out)))

    # Correctness vs. a pure-JAX dense-GAT reference (exact softmax division).
    ref = gat_model_reference(points, params, mask_bias, in_features=F)
    np.testing.assert_allclose(np.asarray(out), np.asarray(ref), rtol=2e-2, atol=2e-3)

    print("KERNEL_OK")
</pallas_src>

<mosaic_0001>
module attributes {stable_mosaic.version = 11 : i64} {
  func.func @fused_gat_kernel(%arg0: memref<42x42xf32, #tpu.memory_space<vmem>>, %arg1: memref<42x32xf32, #tpu.memory_space<vmem>>, %arg2: memref<32x66xf32, #tpu.memory_space<vmem>>, %arg3: memref<1x64xf32, #tpu.memory_space<vmem>>, %arg4: memref<64x258xf32, #tpu.memory_space<vmem>>, %arg5: memref<1x256xf32, #tpu.memory_space<vmem>>, %arg6: memref<256x1026xf32, #tpu.memory_space<vmem>>, %arg7: memref<1x1024xf32, #tpu.memory_space<vmem>>, %arg8: memref<1024x258xf32, #tpu.memory_space<vmem>>, %arg9: memref<1x256xf32, #tpu.memory_space<vmem>>, %arg10: memref<256x66xf32, #tpu.memory_space<vmem>>, %arg11: memref<1x64xf32, #tpu.memory_space<vmem>>, %arg12: memref<64x5xf32, #tpu.memory_space<vmem>>, %arg13: memref<1x3xf32, #tpu.memory_space<vmem>>, %arg14: memref<42x3xf32, #tpu.memory_space<vmem>>) attributes {dimension_semantics = [], scalar_prefetch = 0 : i64, scratch_operands = 0 : i64, tpu.core_type = #tpu.core_type<tc>} {
    %c0 = arith.constant 0 : index
    %c0_0 = arith.constant 0 : index
    %0 = vector.load %arg0[%c0, %c0_0] : memref<42x42xf32, #tpu.memory_space<vmem>>, vector<42x42xf32>
    %c0_1 = arith.constant 0 : index
    %c0_2 = arith.constant 0 : index
    %1 = vector.load %arg1[%c0_1, %c0_2] : memref<42x32xf32, #tpu.memory_space<vmem>>, vector<42x32xf32>
    %c0_3 = arith.constant 0 : index
    %c0_4 = arith.constant 0 : index
    %2 = vector.load %arg2[%c0_3, %c0_4] : memref<32x66xf32, #tpu.memory_space<vmem>>, vector<32x66xf32>
    %c0_5 = arith.constant 0 : index
    %c0_6 = arith.constant 0 : index
    %3 = vector.load %arg3[%c0_5, %c0_6] : memref<1x64xf32, #tpu.memory_space<vmem>>, vector<1x64xf32>
    %cst = arith.constant dense<0.000000e+00> : vector<42x66xf32>
    %4 = tpu.matmul %1, %2, %cst {dimension_numbers = #tpu.dot_dimension_numbers<[1], [0], [0], [1], [0, 0, 1, 1], [], []>} : vector<42x32xf32>, vector<32x66xf32>, vector<42x66xf32> -> vector<42x66xf32>
    %5 = vector.extract_strided_slice %4 {offsets = [0, 0], sizes = [42, 64], strides = [1, 1]} : vector<42x66xf32> to vector<42x64xf32>
    %6 = vector.extract_strided_slice %4 {offsets = [0, 64], sizes = [42, 1], strides = [1, 1]} : vector<42x66xf32> to vector<42x1xf32>
    %7 = vector.extract_strided_slice %4 {offsets = [0, 65], sizes = [42, 1], strides = [1, 1]} : vector<42x66xf32> to vector<42x1xf32>
    %8 = tpu.transpose %6, [1, 0] : vector<42x1xf32> -> vector<1x42xf32>
    %9 = vector.broadcast %7 : vector<42x1xf32> to vector<42x42xf32>
    %10 = vector.broadcast %8 : vector<1x42xf32> to vector<42x42xf32>
    %11 = arith.addf %9, %10 : vector<42x42xf32>
    %cst_7 = arith.constant 0.000000e+00 : f32
    %12 = vector.broadcast %cst_7 : f32 to vector<42x42xf32>
    %13 = arith.cmpf ogt, %11, %12 : vector<42x42xf32>
    %cst_8 = arith.constant 2.000000e-01 : f32
    %14 = vector.broadcast %cst_8 : f32 to vector<42x42xf32>
    %15 = arith.mulf %14, %11 : vector<42x42xf32>
    %16 = arith.select %13, %11, %15 : vector<42x42xi1>, vector<42x42xf32>
    %17 = arith.addf %16, %0 : vector<42x42xf32>
    %cst_9 = arith.constant dense<0xFF800000> : vector<42xf32>
    %18 = vector.multi_reduction <maximumf>, %17, %cst_9 [1] : vector<42x42xf32> to vector<42xf32>
    %19 = vector.shape_cast %18 : vector<42xf32> to vector<42x1xf32>
    %20 = vector.broadcast %19 : vector<42x1xf32> to vector<42x42xf32>
    %21 = arith.subf %17, %20 : vector<42x42xf32>
    %22 = math.exp %21 : vector<42x42xf32>
    %cst_10 = arith.constant dense<0.000000e+00> : vector<42xf32>
    %23 = vector.multi_reduction <add>, %22, %cst_10 [1] : vector<42x42xf32> to vector<42xf32>
    %24 = vector.shape_cast %23 : vector<42xf32> to vector<42x1xf32>
    %25 = tpu.reciprocal %24 {approx = true} : vector<42x1xf32> -> vector<42x1xf32>
    %26 = vector.broadcast %25 : vector<42x1xf32> to vector<42x42xf32>
    %27 = arith.mulf %22, %26 : vector<42x42xf32>
    %cst_11 = arith.constant dense<0.000000e+00> : vector<42x64xf32>
    %28 = tpu.matmul %27, %5, %cst_11 {dimension_numbers = #tpu.dot_dimension_numbers<[1], [0], [0], [1], [0, 0, 1, 1], [], []>} : vector<42x42xf32>, vector<42x64xf32>, vector<42x64xf32> -> vector<42x64xf32>
    %29 = vector.broadcast %3 : vector<1x64xf32> to vector<42x64xf32>
    %30 = arith.addf %28, %29 : vector<42x64xf32>
    %cst_12 = arith.constant 0.000000e+00 : f32
    %31 = vector.broadcast %cst_12 : f32 to vector<42x64xf32>
    %32 = arith.maximumf %30, %31 : vector<42x64xf32>
    %c0_13 = arith.constant 0 : index
    %c0_14 = arith.constant 0 : index
    %33 = vector.load %arg4[%c0_13, %c0_14] : memref<64x258xf32, #tpu.memory_space<vmem>>, vector<64x258xf32>
    %c0_15 = arith.constant 0 : index
    %c0_16 = arith.constant 0 : index
    %34 = vector.load %arg5[%c0_15, %c0_16] : memref<1x256xf32, #tpu.memory_space<vmem>>, vector<1x256xf32>
    %cst_17 = arith.constant dense<0.000000e+00> : vector<42x258xf32>
    %35 = tpu.matmul %32, %33, %cst_17 {dimension_numbers = #tpu.dot_dimension_numbers<[1], [0], [0], [1], [0, 0, 1, 1], [], []>} : vector<42x64xf32>, vector<64x258xf32>, vector<42x258xf32> -> vector<42x258xf32>
    %36 = vector.extract_strided_slice %35 {offsets = [0, 0], sizes = [42, 256], strides = [1, 1]} : vector<42x258xf32> to vector<42x256xf32>
    %37 = vector.extract_strided_slice %35 {offsets = [0, 256], sizes = [42, 1], strides = [1, 1]} : vector<42x258xf32> to vector<42x1xf32>
    %38 = vector.extract_strided_slice %35 {offsets = [0, 257], sizes = [42, 1], strides = [1, 1]} : vector<42x258xf32> to vector<42x1xf32>
    %39 = tpu.transpose %37, [1, 0] : vector<42x1xf32> -> vector<1x42xf32>
    %40 = vector.broadcast %38 : vector<42x1xf32> to vector<42x42xf32>
    %41 = vector.broadcast %39 : vector<1x42xf32> to vector<42x42xf32>
    %42 = arith.addf %40, %41 : vector<42x42xf32>
    %cst_18 = arith.constant 0.000000e+00 : f32
    %43 = vector.broadcast %cst_18 : f32 to vector<42x42xf32>
    %44 = arith.cmpf ogt, %42, %43 : vector<42x42xf32>
    %cst_19 = arith.constant 2.000000e-01 : f32
    %45 = vector.broadcast %cst_19 : f32 to vector<42x42xf32>
    %46 = arith.mulf %45, %42 : vector<42x42xf32>
    %47 = arith.select %44, %42, %46 : vector<42x42xi1>, vector<42x42xf32>
    %48 = arith.addf %47, %0 : vector<42x42xf32>
    %cst_20 = arith.constant dense<0xFF800000> : vector<42xf32>
    %49 = vector.multi_reduction <maximumf>, %48, %cst_20 [1] : vector<42x42xf32> to vector<42xf32>
    %50 = vector.shape_cast %49 : vector<42xf32> to vector<42x1xf32>
    %51 = vector.broadcast %50 : vector<42x1xf32> to vector<42x42xf32>
    %52 = arith.subf %48, %51 : vector<42x42xf32>
    %53 = math.exp %52 : vector<42x42xf32>
    %cst_21 = arith.constant dense<0.000000e+00> : vector<42xf32>
    %54 = vector.multi_reduction <add>, %53, %cst_21 [1] : vector<42x42xf32> to vector<42xf32>
    %55 = vector.shape_cast %54 : vector<42xf32> to vector<42x1xf32>
    %56 = tpu.reciprocal %55 {approx = true} : vector<42x1xf32> -> vector<42x1xf32>
    %57 = vector.broadcast %56 : vector<42x1xf32> to vector<42x42xf32>
    %58 = arith.mulf %53, %57 : vector<42x42xf32>
    %cst_22 = arith.constant dense<0.000000e+00> : vector<42x256xf32>
    %59 = tpu.matmul %58, %36, %cst_22 {dimension_numbers = #tpu.dot_dimension_numbers<[1], [0], [0], [1], [0, 0, 1, 1], [], []>} : vector<42x42xf32>, vector<42x256xf32>, vector<42x256xf32> -> vector<42x256xf32>
    %60 = vector.broadcast %34 : vector<1x256xf32> to vector<42x256xf32>
    %61 = arith.addf %59, %60 : vector<42x256xf32>
    %cst_23 = arith.constant 0.000000e+00 : f32
    %62 = vector.broadcast %cst_23 : f32 to vector<42x256xf32>
    %63 = arith.maximumf %61, %62 : vector<42x256xf32>
    %c0_24 = arith.constant 0 : index
    %c0_25 = arith.constant 0 : index
    %64 = vector.load %arg6[%c0_24, %c0_25] : memref<256x1026xf32, #tpu.memory_space<vmem>>, vector<256x1026xf32>
    %c0_26 = arith.constant 0 : index
    %c0_27 = arith.constant 0 : index
    %65 = vector.load %arg7[%c0_26, %c0_27] : memref<1x1024xf32, #tpu.memory_space<vmem>>, vector<1x1024xf32>
    %cst_28 = arith.constant dense<0.000000e+00> : vector<42x1026xf32>
    %66 = tpu.matmul %63, %64, %cst_28 {dimension_numbers = #tpu.dot_dimension_numbers<[1], [0], [0], [1], [0, 0, 1, 1], [], []>} : vector<42x256xf32>, vector<256x1026xf32>, vector<42x1026xf32> -> vector<42x1026xf32>
    %67 = vector.extract_strided_slice %66 {offsets = [0, 0], sizes = [42, 1024], strides = [1, 1]} : vector<42x1026xf32> to vector<42x1024xf32>
    %68 = vector.extract_strided_slice %66 {offsets = [0, 1024], sizes = [42, 1], strides = [1, 1]} : vector<42x1026xf32> to vector<42x1xf32>
    %69 = vector.extract_strided_slice %66 {offsets = [0, 1025], sizes = [42, 1], strides = [1, 1]} : vector<42x1026xf32> to vector<42x1xf32>
    %70 = tpu.transpose %68, [1, 0] : vector<42x1xf32> -> vector<1x42xf32>
    %71 = vector.broadcast %69 : vector<42x1xf32> to vector<42x42xf32>
    %72 = vector.broadcast %70 : vector<1x42xf32> to vector<42x42xf32>
    %73 = arith.addf %71, %72 : vector<42x42xf32>
    %cst_29 = arith.constant 0.000000e+00 : f32
    %74 = vector.broadcast %cst_29 : f32 to vector<42x42xf32>
    %75 = arith.cmpf ogt, %73, %74 : vector<42x42xf32>
    %cst_30 = arith.constant 2.000000e-01 : f32
    %76 = vector.broadcast %cst_30 : f32 to vector<42x42xf32>
    %77 = arith.mulf %76, %73 : vector<42x42xf32>
    %78 = arith.select %75, %73, %77 : vector<42x42xi1>, vector<42x42xf32>
    %79 = arith.addf %78, %0 : vector<42x42xf32>
    %cst_31 = arith.constant dense<0xFF800000> : vector<42xf32>
    %80 = vector.multi_reduction <maximumf>, %79, %cst_31 [1] : vector<42x42xf32> to vector<42xf32>
    %81 = vector.shape_cast %80 : vector<42xf32> to vector<42x1xf32>
    %82 = vector.broadcast %81 : vector<42x1xf32> to vector<42x42xf32>
    %83 = arith.subf %79, %82 : vector<42x42xf32>
    %84 = math.exp %83 : vector<42x42xf32>
    %cst_32 = arith.constant dense<0.000000e+00> : vector<42xf32>
    %85 = vector.multi_reduction <add>, %84, %cst_32 [1] : vector<42x42xf32> to vector<42xf32>
    %86 = vector.shape_cast %85 : vector<42xf32> to vector<42x1xf32>
    %87 = tpu.reciprocal %86 {approx = true} : vector<42x1xf32> -> vector<42x1xf32>
    %88 = vector.broadcast %87 : vector<42x1xf32> to vector<42x42xf32>
    %89 = arith.mulf %84, %88 : vector<42x42xf32>
    %cst_33 = arith.constant dense<0.000000e+00> : vector<42x1024xf32>
    %90 = tpu.matmul %89, %67, %cst_33 {dimension_numbers = #tpu.dot_dimension_numbers<[1], [0], [0], [1], [0, 0, 1, 1], [], []>} : vector<42x42xf32>, vector<42x1024xf32>, vector<42x1024xf32> -> vector<42x1024xf32>
    %91 = vector.broadcast %65 : vector<1x1024xf32> to vector<42x1024xf32>
    %92 = arith.addf %90, %91 : vector<42x1024xf32>
    %cst_34 = arith.constant 0.000000e+00 : f32
    %93 = vector.broadcast %cst_34 : f32 to vector<42x1024xf32>
    %94 = arith.maximumf %92, %93 : vector<42x1024xf32>
    %c0_35 = arith.constant 0 : index
    %c0_36 = arith.constant 0 : index
    %95 = vector.load %arg8[%c0_35, %c0_36] : memref<1024x258xf32, #tpu.memory_space<vmem>>, vector<1024x258xf32>
    %c0_37 = arith.constant 0 : index
    %c0_38 = arith.constant 0 : index
    %96 = vector.load %arg9[%c0_37, %c0_38] : memref<1x256xf32, #tpu.memory_space<vmem>>, vector<1x256xf32>
    %cst_39 = arith.constant dense<0.000000e+00> : vector<42x258xf32>
    %97 = tpu.matmul %94, %95, %cst_39 {dimension_numbers = #tpu.dot_dimension_numbers<[1], [0], [0], [1], [0, 0, 1, 1], [], []>} : vector<42x1024xf32>, vector<1024x258xf32>, vector<42x258xf32> -> vector<42x258xf32>
    %98 = vector.extract_strided_slice %97 {offsets = [0, 0], sizes = [42, 256], strides = [1, 1]} : vector<42x258xf32> to vector<42x256xf32>
    %99 = vector.extract_strided_slice %97 {offsets = [0, 256], sizes = [42, 1], strides = [1, 1]} : vector<42x258xf32> to vector<42x1xf32>
    %100 = vector.extract_strided_slice %97 {offsets = [0, 257], sizes = [42, 1], strides = [1, 1]} : vector<42x258xf32> to vector<42x1xf32>
    %101 = tpu.transpose %99, [1, 0] : vector<42x1xf32> -> vector<1x42xf32>
    %102 = vector.broadcast %100 : vector<42x1xf32> to vector<42x42xf32>
    %103 = vector.broadcast %101 : vector<1x42xf32> to vector<42x42xf32>
    %104 = arith.addf %102, %103 : vector<42x42xf32>
    %cst_40 = arith.constant 0.000000e+00 : f32
    %105 = vector.broadcast %cst_40 : f32 to vector<42x42xf32>
    %106 = arith.cmpf ogt, %104, %105 : vector<42x42xf32>
    %cst_41 = arith.constant 2.000000e-01 : f32
    %107 = vector.broadcast %cst_41 : f32 to vector<42x42xf32>
    %108 = arith.mulf %107, %104 : vector<42x42xf32>
    %109 = arith.select %106, %104, %108 : vector<42x42xi1>, vector<42x42xf32>
    %110 = arith.addf %109, %0 : vector<42x42xf32>
    %cst_42 = arith.constant dense<0xFF800000> : vector<42xf32>
    %111 = vector.multi_reduction <maximumf>, %110, %cst_42 [1] : vector<42x42xf32> to vector<42xf32>
    %112 = vector.shape_cast %111 : vector<42xf32> to vector<42x1xf32>
    %113 = vector.broadcast %112 : vector<42x1xf32> to vector<42x42xf32>
    %114 = arith.subf %110, %113 : vector<42x42xf32>
    %115 = math.exp %114 : vector<42x42xf32>
    %cst_43 = arith.constant dense<0.000000e+00> : vector<42xf32>
    %116 = vector.multi_reduction <add>, %115, %cst_43 [1] : vector<42x42xf32> to vector<42xf32>
    %117 = vector.shape_cast %116 : vector<42xf32> to vector<42x1xf32>
    %118 = tpu.reciprocal %117 {approx = true} : vector<42x1xf32> -> vector<42x1xf32>
    %119 = vector.broadcast %118 : vector<42x1xf32> to vector<42x42xf32>
    %120 = arith.mulf %115, %119 : vector<42x42xf32>
    %cst_44 = arith.constant dense<0.000000e+00> : vector<42x256xf32>
    %121 = tpu.matmul %120, %98, %cst_44 {dimension_numbers = #tpu.dot_dimension_numbers<[1], [0], [0], [1], [0, 0, 1, 1], [], []>} : vector<42x42xf32>, vector<42x256xf32>, vector<42x256xf32> -> vector<42x256xf32>
    %122 = vector.broadcast %96 : vector<1x256xf32> to vector<42x256xf32>
    %123 = arith.addf %121, %122 : vector<42x256xf32>
    %cst_45 = arith.constant 0.000000e+00 : f32
    %124 = vector.broadcast %cst_45 : f32 to vector<42x256xf32>
    %125 = arith.maximumf %123, %124 : vector<42x256xf32>
    %c0_46 = arith.constant 0 : index
    %c0_47 = arith.constant 0 : index
    %126 = vector.load %arg10[%c0_46, %c0_47] : memref<256x66xf32, #tpu.memory_space<vmem>>, vector<256x66xf32>
    %c0_48 = arith.constant 0 : index
    %c0_49 = arith.constant 0 : index
    %127 = vector.load %arg11[%c0_48, %c0_49] : memref<1x64xf32, #tpu.memory_space<vmem>>, vector<1x64xf32>
    %cst_50 = arith.constant dense<0.000000e+00> : vector<42x66xf32>
    %128 = tpu.matmul %125, %126, %cst_50 {dimension_numbers = #tpu.dot_dimension_numbers<[1], [0], [0], [1], [0, 0, 1, 1], [], []>} : vector<42x256xf32>, vector<256x66xf32>, vector<42x66xf32> -> vector<42x66xf32>
    %129 = vector.extract_strided_slice %128 {offsets = [0, 0], sizes = [42, 64], strides = [1, 1]} : vector<42x66xf32> to vector<42x64xf32>
    %130 = vector.extract_strided_slice %128 {offsets = [0, 64], sizes = [42, 1], strides = [1, 1]} : vector<42x66xf32> to vector<42x1xf32>
    %131 = vector.extract_strided_slice %128 {offsets = [0, 65], sizes = [42, 1], strides = [1, 1]} : vector<42x66xf32> to vector<42x1xf32>
    %132 = tpu.transpose %130, [1, 0] : vector<42x1xf32> -> vector<1x42xf32>
    %133 = vector.broadcast %131 : vector<42x1xf32> to vector<42x42xf32>
    %134 = vector.broadcast %132 : vector<1x42xf32> to vector<42x42xf32>
    %135 = arith.addf %133, %134 : vector<42x42xf32>
    %cst_51 = arith.constant 0.000000e+00 : f32
    %136 = vector.broadcast %cst_51 : f32 to vector<42x42xf32>
    %137 = arith.cmpf ogt, %135, %136 : vector<42x42xf32>
    %cst_52 = arith.constant 2.000000e-01 : f32
    %138 = vector.broadcast %cst_52 : f32 to vector<42x42xf32>
    %139 = arith.mulf %138, %135 : vector<42x42xf32>
    %140 = arith.select %137, %135, %139 : vector<42x42xi1>, vector<42x42xf32>
    %141 = arith.addf %140, %0 : vector<42x42xf32>
    %cst_53 = arith.constant dense<0xFF800000> : vector<42xf32>
    %142 = vector.multi_reduction <maximumf>, %141, %cst_53 [1] : vector<42x42xf32> to vector<42xf32>
    %143 = vector.shape_cast %142 : vector<42xf32> to vector<42x1xf32>
    %144 = vector.broadcast %143 : vector<42x1xf32> to vector<42x42xf32>
    %145 = arith.subf %141, %144 : vector<42x42xf32>
    %146 = math.exp %145 : vector<42x42xf32>
    %cst_54 = arith.constant dense<0.000000e+00> : vector<42xf32>
    %147 = vector.multi_reduction <add>, %146, %cst_54 [1] : vector<42x42xf32> to vector<42xf32>
    %148 = vector.shape_cast %147 : vector<42xf32> to vector<42x1xf32>
    %149 = tpu.reciprocal %148 {approx = true} : vector<42x1xf32> -> vector<42x1xf32>
    %150 = vector.broadcast %149 : vector<42x1xf32> to vector<42x42xf32>
    %151 = arith.mulf %146, %150 : vector<42x42xf32>
    %cst_55 = arith.constant dense<0.000000e+00> : vector<42x64xf32>
    %152 = tpu.matmul %151, %129, %cst_55 {dimension_numbers = #tpu.dot_dimension_numbers<[1], [0], [0], [1], [0, 0, 1, 1], [], []>} : vector<42x42xf32>, vector<42x64xf32>, vector<42x64xf32> -> vector<42x64xf32>
    %153 = vector.broadcast %127 : vector<1x64xf32> to vector<42x64xf32>
    %154 = arith.addf %152, %153 : vector<42x64xf32>
    %cst_56 = arith.constant 0.000000e+00 : f32
    %155 = vector.broadcast %cst_56 : f32 to vector<42x64xf32>
    %156 = arith.maximumf %154, %155 : vector<42x64xf32>
    %c0_57 = arith.constant 0 : index
    %c0_58 = arith.constant 0 : index
    %157 = vector.load %arg12[%c0_57, %c0_58] : memref<64x5xf32, #tpu.memory_space<vmem>>, vector<64x5xf32>
    %c0_59 = arith.constant 0 : index
    %c0_60 = arith.constant 0 : index
    %158 = vector.load %arg13[%c0_59, %c0_60] : memref<1x3xf32, #tpu.memory_space<vmem>>, vector<1x3xf32>
    %cst_61 = arith.constant dense<0.000000e+00> : vector<42x5xf32>
    %159 = tpu.matmul %156, %157, %cst_61 {dimension_numbers = #tpu.dot_dimension_numbers<[1], [0], [0], [1], [0, 0, 1, 1], [], []>} : vector<42x64xf32>, vector<64x5xf32>, vector<42x5xf32> -> vector<42x5xf32>
    %160 = vector.extract_strided_slice %159 {offsets = [0, 0], sizes = [42, 3], strides = [1, 1]} : vector<42x5xf32> to vector<42x3xf32>
    %161 = vector.extract_strided_slice %159 {offsets = [0, 3], sizes = [42, 1], strides = [1, 1]} : vector<42x5xf32> to vector<42x1xf32>
    %162 = vector.extract_strided_slice %159 {offsets = [0, 4], sizes = [42, 1], strides = [1, 1]} : vector<42x5xf32> to vector<42x1xf32>
    %163 = tpu.transpose %161, [1, 0] : vector<42x1xf32> -> vector<1x42xf32>
    %164 = vector.broadcast %162 : vector<42x1xf32> to vector<42x42xf32>
    %165 = vector.broadcast %163 : vector<1x42xf32> to vector<42x42xf32>
    %166 = arith.addf %164, %165 : vector<42x42xf32>
    %cst_62 = arith.constant 0.000000e+00 : f32
    %167 = vector.broadcast %cst_62 : f32 to vector<42x42xf32>
    %168 = arith.cmpf ogt, %166, %167 : vector<42x42xf32>
    %cst_63 = arith.constant 2.000000e-01 : f32
    %169 = vector.broadcast %cst_63 : f32 to vector<42x42xf32>
    %170 = arith.mulf %169, %166 : vector<42x42xf32>
    %171 = arith.select %168, %166, %170 : vector<42x42xi1>, vector<42x42xf32>
    %172 = arith.addf %171, %0 : vector<42x42xf32>
    %cst_64 = arith.constant dense<0xFF800000> : vector<42xf32>
    %173 = vector.multi_reduction <maximumf>, %172, %cst_64 [1] : vector<42x42xf32> to vector<42xf32>
    %174 = vector.shape_cast %173 : vector<42xf32> to vector<42x1xf32>
    %175 = vector.broadcast %174 : vector<42x1xf32> to vector<42x42xf32>
    %176 = arith.subf %172, %175 : vector<42x42xf32>
    %177 = math.exp %176 : vector<42x42xf32>
    %cst_65 = arith.constant dense<0.000000e+00> : vector<42xf32>
    %178 = vector.multi_reduction <add>, %177, %cst_65 [1] : vector<42x42xf32> to vector<42xf32>
    %179 = vector.shape_cast %178 : vector<42xf32> to vector<42x1xf32>
    %180 = tpu.reciprocal %179 {approx = true} : vector<42x1xf32> -> vector<42x1xf32>
    %cst_66 = arith.constant dense<0.000000e+00> : vector<42x3xf32>
    %181 = tpu.matmul %177, %160, %cst_66 {dimension_numbers = #tpu.dot_dimension_numbers<[1], [0], [0], [1], [0, 0, 1, 1], [], []>} : vector<42x42xf32>, vector<42x3xf32>, vector<42x3xf32> -> vector<42x3xf32>
    %182 = vector.broadcast %180 : vector<42x1xf32> to vector<42x3xf32>
    %183 = arith.mulf %181, %182 : vector<42x3xf32>
    %184 = vector.broadcast %158 : vector<1x3xf32> to vector<42x3xf32>
    %185 = arith.addf %183, %184 : vector<42x3xf32>
    %c0_67 = arith.constant 0 : index
    %c0_68 = arith.constant 0 : index
    %186 = vector.load %arg14[%c0_67, %c0_68] : memref<42x3xf32, #tpu.memory_space<vmem>>, vector<42x3xf32>
    tpu.vector_store %arg14[%c0_67, %c0_68], %185 {strides = array<i32>} : memref<42x3xf32, #tpu.memory_space<vmem>>, vector<42x3xf32>,
    return
  }
}

</mosaic_0001>

<llo_original>
// kernel: gat_model_forward.1
$region0: #{gat_model_forward.1}
  #allocation0 [shape = 'u32[]', space=smem, size = 0x4, offset = 0x4, fixed_abs, tag = 'smem constant byte address 0x4 - core index']
  #allocation1 [shape = 'u32[72,128]{1,0:T(1,128)}', space=vmem, size = 0x9000, scoped, tag = 'internal scratch']
  %s0 = inlined_call_operand.vmem [shape: f32[42,42], index: 0, kind: input, shape index: {}]
  %s1 = inlined_call_operand.vmem [shape: f32[42,32], index: 1, kind: input, shape index: {}]
  %s2 = inlined_call_operand.vmem [shape: f32[32,66], index: 2, kind: input, shape index: {}]
  %s3 = inlined_call_operand.vmem [shape: f32[1,64], index: 3, kind: input, shape index: {}]
  %s4 = inlined_call_operand.vmem [shape: f32[64,258], index: 4, kind: input, shape index: {}]
  %s5 = inlined_call_operand.vmem [shape: f32[1,256], index: 5, kind: input, shape index: {}]
  %s6 = inlined_call_operand.vmem [shape: f32[256,1026], index: 6, kind: input, shape index: {}]
  %s7 = inlined_call_operand.vmem [shape: f32[1,1024], index: 7, kind: input, shape index: {}]
  %s8 = inlined_call_operand.vmem [shape: f32[1024,258], index: 8, kind: input, shape index: {}]
  %s9 = inlined_call_operand.vmem [shape: f32[1,256], index: 9, kind: input, shape index: {}]
  %s10 = inlined_call_operand.vmem [shape: f32[256,66], index: 10, kind: input, shape index: {}]
  %s11 = inlined_call_operand.vmem [shape: f32[1,64], index: 11, kind: input, shape index: {}]
  %s12 = inlined_call_operand.vmem [shape: f32[64,5], index: 12, kind: input, shape index: {}]
  %s13 = inlined_call_operand.vmem [shape: f32[1,3], index: 13, kind: input, shape index: {}]
  %s14 = inlined_call_operand.vmem [shape: f32[42,3], index: 14, kind: output, shape index: {}]
  %s15 = sld [smem:[#allocation0]]
  $region66: #{gat_model_forward.1} parent=0
    _
  %s17 = ssub.s32 1, %s15
  %s18 = scalar_select 0, %s17, %s15
  // Predicated region
  $region2: #{gat_model_forward.1} parent=0 // pred_check
    _
  $region3: #{gat_model_forward.1} parent=0 // pred_check_branch
    %20 = sbr.rel (0) target = $region5
  $region4: #{gat_model_forward.1} parent=0 // pred_region
    _
  $region5: #{gat_model_forward.1} parent=0 // pred_fallthru
    _
  // Predicated region
  $region6: #{gat_model_forward.1} parent=0 // pred_check
    _
  $region7: #{gat_model_forward.1} parent=0 // pred_check_branch
    %22 = sbr.rel (0) target = $region9
  $region8: #{gat_model_forward.1} parent=0 // pred_region
    _
  $region9: #{gat_model_forward.1} parent=0 // pred_fallthru
    _
  // Predicated region
  $region10: #{gat_model_forward.1} parent=0 // pred_check
    _
  $region11: #{gat_model_forward.1} parent=0 // pred_check_branch
    %24 = sbr.rel (0) target = $region13
  $region12: #{gat_model_forward.1} parent=0 // pred_region
    _
  $region13: #{gat_model_forward.1} parent=0 // pred_fallthru
    _
  // Predicated region
  $region14: #{gat_model_forward.1} parent=0 // pred_check
    _
  $region15: #{gat_model_forward.1} parent=0 // pred_check_branch
    %26 = sbr.rel (0) target = $region17
  $region16: #{gat_model_forward.1} parent=0 // pred_region
    _
  $region17: #{gat_model_forward.1} parent=0 // pred_fallthru
    _
  // Predicated region
  $region18: #{gat_model_forward.1} parent=0 // pred_check
    _
  $region19: #{gat_model_forward.1} parent=0 // pred_check_branch
    %28 = sbr.rel (0) target = $region21
  $region20: #{gat_model_forward.1} parent=0 // pred_region
    _
  $region21: #{gat_model_forward.1} parent=0 // pred_fallthru
    _
  // Predicated region
  $region22: #{gat_model_forward.1} parent=0 // pred_check
    _
  $region23: #{gat_model_forward.1} parent=0 // pred_check_branch
    %30 = sbr.rel (0) target = $region25
  $region24: #{gat_model_forward.1} parent=0 // pred_region
    _
  $region25: #{gat_model_forward.1} parent=0 // pred_fallthru
    _
  // Predicated region
  $region26: #{gat_model_forward.1} parent=0 // pred_check
    _
  $region27: #{gat_model_forward.1} parent=0 // pred_check_branch
    %32 = sbr.rel (0) target = $region29
  $region28: #{gat_model_forward.1} parent=0 // pred_region
    _
  $region29: #{gat_model_forward.1} parent=0 // pred_fallthru
    _
  // Predicated region
  $region30: #{gat_model_forward.1} parent=0 // pred_check
    _
  $region31: #{gat_model_forward.1} parent=0 // pred_check_branch
    %34 = sbr.rel (0) target = $region33
  $region32: #{gat_model_forward.1} parent=0 // pred_region
    _
  $region33: #{gat_model_forward.1} parent=0 // pred_fallthru
    _
  // Predicated region
  $region34: #{gat_model_forward.1} parent=0 // pred_check
    _
  $region35: #{gat_model_forward.1} parent=0 // pred_check_branch
    %36 = sbr.rel (0) target = $region37
  $region36: #{gat_model_forward.1} parent=0 // pred_region
    _
  $region37: #{gat_model_forward.1} parent=0 // pred_fallthru
    _
  // Predicated region
  $region38: #{gat_model_forward.1} parent=0 // pred_check
    _
  $region39: #{gat_model_forward.1} parent=0 // pred_check_branch
    %38 = sbr.rel (0) target = $region41
  $region40: #{gat_model_forward.1} parent=0 // pred_region
    _
  $region41: #{gat_model_forward.1} parent=0 // pred_fallthru
    _
  // Predicated region
  $region42: #{gat_model_forward.1} parent=0 // pred_check
    _
  $region43: #{gat_model_forward.1} parent=0 // pred_check_branch
    %40 = sbr.rel (0) target = $region45
  $region44: #{gat_model_forward.1} parent=0 // pred_region
    _
  $region45: #{gat_model_forward.1} parent=0 // pred_fallthru
    _
  // Predicated region
  $region46: #{gat_model_forward.1} parent=0 // pred_check
    _
  $region47: #{gat_model_forward.1} parent=0 // pred_check_branch
    %42 = sbr.rel (0) target = $region49
  $region48: #{gat_model_forward.1} parent=0 // pred_region
    _
  $region49: #{gat_model_forward.1} parent=0 // pred_fallthru
    _
  // Predicated region
  $region50: #{gat_model_forward.1} parent=0 // pred_check
    _
  $region51: #{gat_model_forward.1} parent=0 // pred_check_branch
    %44 = sbr.rel (0) target = $region53
  $region52: #{gat_model_forward.1} parent=0 // pred_region
    _
  $region53: #{gat_model_forward.1} parent=0 // pred_fallthru
    _
  // Predicated region
  $region54: #{gat_model_forward.1} parent=0 // pred_check
    _
  $region55: #{gat_model_forward.1} parent=0 // pred_check_branch
    %46 = sbr.rel (0) target = $region57
  $region56: #{gat_model_forward.1} parent=0 // pred_region
    _
  $region57: #{gat_model_forward.1} parent=0 // pred_fallthru
    _
  %v47 = vld [vmem:[%s0] sm:$0xff]
  %v48 = vld [vmem:[%s0 + $0x8] sm:$0xff]
  %v49 = vld [vmem:[%s0 + $0x10] sm:$0xff]
  %v50 = vld [vmem:[%s0 + $0x18] sm:$0xff]
  %v51 = vld [vmem:[%s0 + $0x20] sm:$0xff]
  %v52 = vld [vmem:[%s0 + $0x28] sm:$0x3]
  %v53 = vld [vmem:[%s1] sm:$0xff]
  %v54 = vld [vmem:[%s1 + $0x8] sm:$0xff]
  %v55 = vld [vmem:[%s1 + $0x10] sm:$0xff]
  %v56 = vld [vmem:[%s1 + $0x18] sm:$0xff]
  %v57 = vld [vmem:[%s1 + $0x20] sm:$0xff]
  %v58 = vld [vmem:[%s1 + $0x28] sm:$0x3]
  %v59 = vld [vmem:[%s2] sm:$0xff]
  %v60 = vld [vmem:[%s2 + $0x8] sm:$0xff]
  %v61 = vld [vmem:[%s2 + $0x10] sm:$0xff]
  %v62 = vld [vmem:[%s2 + $0x18] sm:$0xff]
  %v63 = vld [vmem:[%s3] sm:$0x1]
  %vm64 = vcmask 261120
  %v66 = vsel %vm64, %v53, 0
  %v69 = vsel %vm64, %v54, 0
  %v72 = vsel %vm64, %v55, 0
  %v75 = vsel %vm64, %v56, 0
  %v78 = vsel %vm64, %v57, 0
  %v81 = vsel %vm64, %v58, 0
  %83 = vmatpush.msra.mxu0 0.0
  %84 = vmatpush.msra.mxu0 0.0
  %85 = vmatpush.msra.mxu0 0.0
  %86 = vmatpush.msra.mxu0 0.0
  %87 = vmatpush.msra.mxu0 0.0
  %88 = vmatpush.msra.mxu0 0.0
  %89 = vmatpush.msra.mxu0 0.0
  %90 = vmatpush.msra.mxu0 0.0
  %91 = vmatpush.msra.mxu0 0.0
  %92 = vmatpush.msra.mxu0 0.0
  %93 = vmatpush.msra.mxu0 0.0
  %94 = vmatpush.msra.mxu0 0.0
  %95 = vmatpush.msra.mxu0 %v62
  %96 = vmatpush.msra.mxu0 %v61
  %97 = vmatpush.msra.mxu0 %v60
  %98 = vmatpush.msra.mxu0 %v59
  %99 = vmatmul.f32.gmra.mxu0 %v66
  %v100 = vpop.f32.mrf.mxu0
  %v101 = vadd.f32 0.0, %v100
  %102 = vmatmul.f32.gmra.mxu0 %v69
  %v103 = vpop.f32.mrf.mxu0
  %v104 = vadd.f32 0.0, %v103
  %105 = vmatmul.f32.gmra.mxu0 %v72
  %v106 = vpop.f32.mrf.mxu0
  %v107 = vadd.f32 0.0, %v106
  %108 = vmatmul.f32.gmra.mxu0 %v75
  %v109 = vpop.f32.mrf.mxu0
  %v110 = vadd.f32 0.0, %v109
  %111 = vmatmul.f32.gmra.mxu0 %v78
  %v112 = vpop.f32.mrf.mxu0
  %v113 = vadd.f32 0.0, %v112
  %114 = vmatmul.f32.gmra.mxu0 %v81
  %v115 = vpop.f32.mrf.mxu0
  %v116 = vadd.f32 0.0, %v115
  %117 = vdwg.mxu0
  %124 = vrot.lane.b32.xlu0 %v101, 64
  %v125 = vpop.permute.xlu0 %124
  %126 = vrot.lane.b32.xlu0 %v104, 64
  %v127 = vpop.permute.xlu0 %126
  %128 = vrot.lane.b32.xlu0 %v107, 64
  %v129 = vpop.permute.xlu0 %128
  %130 = vrot.lane.b32.xlu0 %v110, 64
  %v131 = vpop.permute.xlu0 %130
  %132 = vrot.lane.b32.xlu0 %v113, 64
  %v133 = vpop.permute.xlu0 %132
  %134 = vrot.lane.b32.xlu0 %v116, 64
  %v135 = vpop.permute.xlu0 %134
  %142 = vxpose.xlu0.b32.start [1/16] %v125, 128
  %143 = vxpose.xlu0.b32.cont [2/16] %v127, 128
  %144 = vxpose.xlu0.b32.cont [3/16] %v129, 128
  %145 = vxpose.xlu0.b32.cont [4/16] %v131, 128
  %146 = vxpose.xlu0.b32.cont [5/16] %v133, 128
  %147 = vxpose.xlu0.b32.cont [6/16] %v135, 128
  %148 = vxpose.xlu0.b32.cont [7/16] 0.0, 128
  %149 = vxpose.xlu0.b32.cont [8/16] 0.0, 128
  %150 = vxpose.xlu0.b32.cont [9/16] 0.0, 128
  %151 = vxpose.xlu0.b32.cont [10/16] 0.0, 128
  %152 = vxpose.xlu0.b32.cont [11/16] 0.0, 128
  %153 = vxpose.xlu0.b32.cont [12/16] 0.0, 128
  %154 = vxpose.xlu0.b32.cont [13/16] 0.0, 128
  %155 = vxpose.xlu0.b32.cont [14/16] 0.0, 128
  %156 = vxpose.xlu0.b32.cont [15/16] 0.0, 128
  %157 = vxpose.xlu0.b32.end [16/16] 0.0, 128
  %v158 = vpop.trf.xlu0
  %v159 = vpop.trf.xlu0
  %v160 = vpop.trf.xlu0
  %v161 = vpop.trf.xlu0
  %v162 = vpop.trf.xlu0
  %v163 = vpop.trf.xlu0
  %v164 = vpop.trf.xlu0
  %v165 = vpop.trf.xlu0
  %v166 = vpop.trf.xlu0
  %v167 = vpop.trf.xlu0
  %v168 = vpop.trf.xlu0
  %v169 = vpop.trf.xlu0
  %v170 = vpop.trf.xlu0
  %v171 = vpop.trf.xlu0
  %v172 = vpop.trf.xlu0
  %v173 = vpop.trf.xlu0
  %174 = vset.pattern.permute.xlu0 65
  %175 = vperm.xlu0 %174, %v101
  %v176 = vpop.permute.xlu0 %175
  %178 = vset.pattern.permute.xlu0 65
  %179 = vperm.xlu0 %178, %v104
  %v180 = vpop.permute.xlu0 %179
  %182 = vset.pattern.permute.xlu0 65
  %183 = vperm.xlu0 %182, %v107
  %v184 = vpop.permute.xlu0 %183
  %186 = vset.pattern.permute.xlu0 65
  %187 = vperm.xlu0 %186, %v110
  %v188 = vpop.permute.xlu0 %187
  %190 = vset.pattern.permute.xlu0 65
  %191 = vperm.xlu0 %190, %v113
  %v192 = vpop.permute.xlu0 %191
  %194 = vset.pattern.permute.xlu0 65
  %195 = vperm.xlu0 %194, %v116
  %v196 = vpop.permute.xlu0 %195
  %v198 = vperm.slane %v158, 0
  %v199 = vadd.f32 %v176, %v198
  %v200 = vadd.f32 %v180, %v198
  %v201 = vadd.f32 %v184, %v198
  %v202 = vadd.f32 %v188, %v198
  %v203 = vadd.f32 %v192, %v198
  %v204 = vadd.f32 %v196, %v198
  %vm205 = vcmp.gt.f32.partialorder %v199, 0.0
  %vm206 = vcmp.gt.f32.partialorder %v200, 0.0
  %vm207 = vcmp.gt.f32.partialorder %v201, 0.0
  %vm208 = vcmp.gt.f32.partialorder %v202, 0.0
  %vm209 = vcmp.gt.f32.partialorder %v203, 0.0
  %vm210 = vcmp.gt.f32.partialorder %v204, 0.0
  %v211 = vmul.f32 %v199, 0.2
  %v212 = vmul.f32 %v200, 0.2
  %v213 = vmul.f32 %v201, 0.2
  %v214 = vmul.f32 %v202, 0.2
  %v215 = vmul.f32 %v203, 0.2
  %v216 = vmul.f32 %v204, 0.2
  %v217 = vsel %vm205, %v199, %v211
  %v218 = vsel %vm206, %v200, %v212
  %v219 = vsel %vm207, %v201, %v213
  %v220 = vsel %vm208, %v202, %v214
  %v221 = vsel %vm209, %v203, %v215
  %v222 = vsel %vm210, %v204, %v216
  %v223 = vadd.f32 %v217, %v47
  %v224 = vadd.f32 %v218, %v48
  %v225 = vadd.f32 %v219, %v49
  %v226 = vadd.f32 %v220, %v50
  %v227 = vadd.f32 %v221, %v51
  %v228 = vadd.f32 %v222, %v52
  %vm229 = vcmask 343040
  %v230 = vsel %vm229, %v223, -inf
  %231 = vmax.xlane.f32.xlu0 %v230
  %v232 = vpop.xlane.xlu0 %231
  %v233 = vsel %vm229, %v224, -inf
  %234 = vmax.xlane.f32.xlu0 %v233
  %v235 = vpop.xlane.xlu0 %234
  %v236 = vsel %vm229, %v225, -inf
  %237 = vmax.xlane.f32.xlu0 %v236
  %v238 = vpop.xlane.xlu0 %237
  %v239 = vsel %vm229, %v226, -inf
  %240 = vmax.xlane.f32.xlu0 %v239
  %v241 = vpop.xlane.xlu0 %240
  %v242 = vsel %vm229, %v227, -inf
  %243 = vmax.xlane.f32.xlu0 %v242
  %v244 = vpop.xlane.xlu0 %243
  %vm245 = vcmask 336896
  %v246 = vsel %vm245, %v228, -inf
  %247 = vmax.xlane.f32.xlu0 %v246
  %v248 = vpop.xlane.xlu0 %247
  %v249 = vsub.f32 %v223, %v232
  %v250 = vsub.f32 %v224, %v235
  %v251 = vsub.f32 %v225, %v238
  %v252 = vsub.f32 %v226, %v241
  %v253 = vsub.f32 %v227, %v244
  %v254 = vsub.f32 %v228, %v248
  %v255 = vmul.f32 %v249, 1.442695
  %v256 = vpow.pop %v255
  %v257 = vmul.f32 %v250, 1.442695
  %v258 = vpow.pop %v257
  %v259 = vmul.f32 %v251, 1.442695
  %v260 = vpow.pop %v259
  %v261 = vmul.f32 %v252, 1.442695
  %v262 = vpow.pop %v261
  %v263 = vmul.f32 %v253, 1.442695
  %v264 = vpow.pop %v263
  %v265 = vmul.f32 %v254, 1.442695
  %v266 = vpow.pop %v265
  %v267 = vsel %vm229, %v256, 0.0
  %268 = vadd.xlane.f32.xlu0 %v267
  %v269 = vpop.xlane.xlu0 %268
  %v270 = vsel %vm229, %v258, 0.0
  %271 = vadd.xlane.f32.xlu0 %v270
  %v272 = vpop.xlane.xlu0 %271
  %v273 = vsel %vm229, %v260, 0.0
  %274 = vadd.xlane.f32.xlu0 %v273
  %v275 = vpop.xlane.xlu0 %274
  %v276 = vsel %vm229, %v262, 0.0
  %277 = vadd.xlane.f32.xlu0 %v276
  %v278 = vpop.xlane.xlu0 %277
  %v279 = vsel %vm229, %v264, 0.0
  %280 = vadd.xlane.f32.xlu0 %v279
  %v281 = vpop.xlane.xlu0 %280
  %v282 = vsel %vm245, %v266, 0.0
  %283 = vadd.xlane.f32.xlu0 %v282
  %v284 = vpop.xlane.xlu0 %283
  %v285 = vrcp.pop %v269
  %v286 = vrcp.pop %v272
  %v287 = vrcp.pop %v275
  %v288 = vrcp.pop %v278
  %v289 = vrcp.pop %v281
  %v290 = vrcp.pop %v284
  %v291 = vmul.f32 %v256, %v285
  %v292 = vmul.f32 %v258, %v286
  %v293 = vmul.f32 %v260, %v287
  %v294 = vmul.f32 %v262, %v288
  %v295 = vmul.f32 %v264, %v289
  %v296 = vmul.f32 %v266, %v290
  %v298 = vperm.slane %v63, 0
  %v301 = vsel %vm229, %v291, 0
  %v304 = vsel %vm229, %v292, 0
  %v307 = vsel %vm229, %v293, 0
  %v310 = vsel %vm229, %v294, 0
  %v313 = vsel %vm229, %v295, 0
  %v316 = vsel %vm229, %v296, 0
  %vm318 = vcmask 1041408
  %v319 = vsel %vm318, %v116, 0
  %321 = vmatpush.msra.mxu0 0.0
  %322 = vmatpush.msra.mxu0 0.0
  %323 = vmatpush.msra.mxu0 0.0
  %324 = vmatpush.msra.mxu0 0.0
  %325 = vmatpush.msra.mxu0 0.0
  %326 = vmatpush.msra.mxu0 0.0
  %327 = vmatpush.msra.mxu0 0.0
  %328 = vmatpush.msra.mxu0 0.0
  %329 = vmatpush.msra.mxu0 0.0
  %330 = vmatpush.msra.mxu0 0.0
  %331 = vmatpush.msra.mxu0 %v319
  %332 = vmatpush.msra.mxu0 %v113
  %333 = vmatpush.msra.mxu0 %v110
  %334 = vmatpush.msra.mxu0 %v107
  %335 = vmatpush.msra.mxu0 %v104
  %336 = vmatpush.msra.mxu0 %v101
  %337 = vmatmul.f32.gmra.mxu0 %v301
  %v338 = vpop.f32.mrf.mxu0
  %v339 = vadd.f32 %v298, %v338
  %340 = vmatmul.f32.gmra.mxu0 %v304
  %v341 = vpop.f32.mrf.mxu0
  %v342 = vadd.f32 %v298, %v341
  %343 = vmatmul.f32.gmra.mxu0 %v307
  %v344 = vpop.f32.mrf.mxu0
  %v345 = vadd.f32 %v298, %v344
  %346 = vmatmul.f32.gmra.mxu0 %v310
  %v347 = vpop.f32.mrf.mxu0
  %v348 = vadd.f32 %v298, %v347
  %349 = vmatmul.f32.gmra.mxu0 %v313
  %v350 = vpop.f32.mrf.mxu0
  %v351 = vadd.f32 %v298, %v350
  %352 = vmatmul.f32.gmra.mxu0 %v316
  %v353 = vpop.f32.mrf.mxu0
  %v354 = vadd.f32 %v298, %v353
  %355 = vdwg.mxu0
  %v356 = vmax.f32 %v339, 0.0
  %v357 = vmax.f32 %v342, 0.0
  %v358 = vmax.f32 %v345, 0.0
  %v359 = vmax.f32 %v348, 0.0
  %v360 = vmax.f32 %v351, 0.0
  %v361 = vmax.f32 %v354, 0.0
  %v362 = vld [vmem:[%s4] sm:$0xff]
  %v363 = vld [vmem:[%s4 + $0x8] sm:$0xff]
  %v364 = vld [vmem:[%s4 + $0x10] sm:$0xff]
  %v365 = vld [vmem:[%s4 + $0x18] sm:$0xff]
  %v366 = vld [vmem:[%s4 + $0x20] sm:$0xff]
  %v367 = vld [vmem:[%s4 + $0x28] sm:$0xff]
  %v368 = vld [vmem:[%s4 + $0x30] sm:$0xff]
  %v369 = vld [vmem:[%s4 + $0x38] sm:$0xff]
  %v370 = vld [vmem:[%s4 + $0x40] sm:$0xff]
  %v371 = vld [vmem:[%s4 + $0x48] sm:$0xff]
  %v372 = vld [vmem:[%s4 + $0x50] sm:$0xff]
  %v373 = vld [vmem:[%s4 + $0x58] sm:$0xff]
  %v374 = vld [vmem:[%s4 + $0x60] sm:$0xff]
  %v375 = vld [vmem:[%s4 + $0x68] sm:$0xff]
  %v376 = vld [vmem:[%s4 + $0x70] sm:$0xff]
  %v377 = vld [vmem:[%s4 + $0x78] sm:$0xff]
  %v378 = vld [vmem:[%s4 + $0x80] sm:$0xff]
  %v379 = vld [vmem:[%s4 + $0x88] sm:$0xff]
  %v380 = vld [vmem:[%s4 + $0x90] sm:$0xff]
  %v381 = vld [vmem:[%s4 + $0x98] sm:$0xff]
  %v382 = vld [vmem:[%s4 + $0xa0] sm:$0xff]
  %v383 = vld [vmem:[%s4 + $0xa8] sm:$0xff]
  %v384 = vld [vmem:[%s4 + $0xb0] sm:$0xff]
  %v385 = vld [vmem:[%s4 + $0xb8] sm:$0xff]
  %v386 = vld [vmem:[%s5] sm:$0x3]
  %vm387 = vcmask 523264
  %v389 = vsel %vm387, %v356, 0
  %v392 = vsel %vm387, %v357, 0
  %v395 = vsel %vm387, %v358, 0
  %v398 = vsel %vm387, %v359, 0
  %v401 = vsel %vm387, %v360, 0
  %v404 = vsel %vm387, %v361, 0
  %406 = vmatpush.msra.mxu0 0.0
  %407 = vmatpush.msra.mxu0 0.0
  %408 = vmatpush.msra.mxu0 0.0
  %409 = vmatpush.msra.mxu0 0.0
  %410 = vmatpush.msra.mxu0 0.0
  %411 = vmatpush.msra.mxu0 0.0
  %412 = vmatpush.msra.mxu0 0.0
  %413 = vmatpush.msra.mxu0 0.0
  %414 = vmatpush.msra.mxu0 %v383
  %415 = vmatpush.msra.mxu0 %v380
  %416 = vmatpush.msra.mxu0 %v377
  %417 = vmatpush.msra.mxu0 %v374
  %418 = vmatpush.msra.mxu0 %v371
  %419 = vmatpush.msra.mxu0 %v368
  %420 = vmatpush.msra.mxu0 %v365
  %421 = vmatpush.msra.mxu0 %v362
  %422 = vmatmul.f32.gmra.mxu0 %v389
  %v423 = vpop.f32.mrf.mxu0
  %v424 = vadd.f32 0.0, %v423
  %425 = vmatmul.f32.gmra.mxu0 %v392
  %v426 = vpop.f32.mrf.mxu0
  %v427 = vadd.f32 0.0, %v426
  %428 = vmatmul.f32.gmra.mxu0 %v395
  %v429 = vpop.f32.mrf.mxu0
  %v430 = vadd.f32 0.0, %v429
  %431 = vmatmul.f32.gmra.mxu0 %v398
  %v432 = vpop.f32.mrf.mxu0
  %v433 = vadd.f32 0.0, %v432
  %434 = vmatmul.f32.gmra.mxu0 %v401
  %v435 = vpop.f32.mrf.mxu0
  %v436 = vadd.f32 0.0, %v435
  %437 = vmatmul.f32.gmra.mxu0 %v404
  %v438 = vpop.f32.mrf.mxu0
  %v439 = vadd.f32 0.0, %v438
  %440 = vdwg.mxu0
  %441 = vmatpush.msra.mxu0 0.0
  %442 = vmatpush.msra.mxu0 0.0
  %443 = vmatpush.msra.mxu0 0.0
  %444 = vmatpush.msra.mxu0 0.0
  %445 = vmatpush.msra.mxu0 0.0
  %446 = vmatpush.msra.mxu0 0.0
  %447 = vmatpush.msra.mxu0 0.0
  %448 = vmatpush.msra.mxu0 0.0
  %449 = vmatpush.msra.mxu0 %v384
  %450 = vmatpush.msra.mxu0 %v381
  %451 = vmatpush.msra.mxu0 %v378
  %452 = vmatpush.msra.mxu0 %v375
  %453 = vmatpush.msra.mxu0 %v372
  %454 = vmatpush.msra.mxu0 %v369
  %455 = vmatpush.msra.mxu0 %v366
  %456 = vmatpush.msra.mxu0 %v363
  %457 = vmatmul.f32.gmra.mxu0 %v389
  %v458 = vpop.f32.mrf.mxu0
  %v459 = vadd.f32 0.0, %v458
  %460 = vmatmul.f32.gmra.mxu0 %v392
  %v461 = vpop.f32.mrf.mxu0
  %v462 = vadd.f32 0.0, %v461
  %463 = vmatmul.f32.gmra.mxu0 %v395
  %v464 = vpop.f32.mrf.mxu0
  %v465 = vadd.f32 0.0, %v464
  %466 = vmatmul.f32.gmra.mxu0 %v398
  %v467 = vpop.f32.mrf.mxu0
  %v468 = vadd.f32 0.0, %v467
  %469 = vmatmul.f32.gmra.mxu0 %v401
  %v470 = vpop.f32.mrf.mxu0
  %v471 = vadd.f32 0.0, %v470
  %472 = vmatmul.f32.gmra.mxu0 %v404
  %v473 = vpop.f32.mrf.mxu0
  %v474 = vadd.f32 0.0, %v473
  %475 = vdwg.mxu0
  %476 = vmatpush.msra.mxu0 0.0
  %477 = vmatpush.msra.mxu0 0.0
  %478 = vmatpush.msra.mxu0 0.0
  %479 = vmatpush.msra.mxu0 0.0
  %480 = vmatpush.msra.mxu0 0.0
  %481 = vmatpush.msra.mxu0 0.0
  %482 = vmatpush.msra.mxu0 0.0
  %483 = vmatpush.msra.mxu0 0.0
  %484 = vmatpush.msra.mxu0 %v385
  %485 = vmatpush.msra.mxu0 %v382
  %486 = vmatpush.msra.mxu0 %v379
  %487 = vmatpush.msra.mxu0 %v376
  %488 = vmatpush.msra.mxu0 %v373
  %489 = vmatpush.msra.mxu0 %v370
  %490 = vmatpush.msra.mxu0 %v367
  %491 = vmatpush.msra.mxu0 %v364
  %492 = vmatmul.f32.gmra.mxu0 %v389
  %v493 = vpop.f32.mrf.mxu0
  %v494 = vadd.f32 0.0, %v493
  %495 = vmatmul.f32.gmra.mxu0 %v392
  %v496 = vpop.f32.mrf.mxu0
  %v497 = vadd.f32 0.0, %v496
  %498 = vmatmul.f32.gmra.mxu0 %v395
  %v499 = vpop.f32.mrf.mxu0
  %v500 = vadd.f32 0.0, %v499
  %501 = vmatmul.f32.gmra.mxu0 %v398
  %v502 = vpop.f32.mrf.mxu0
  %v503 = vadd.f32 0.0, %v502
  %504 = vmatmul.f32.gmra.mxu0 %v401
  %v505 = vpop.f32.mrf.mxu0
  %v506 = vadd.f32 0.0, %v505
  %507 = vmatmul.f32.gmra.mxu0 %v404
  %v508 = vpop.f32.mrf.mxu0
  %v509 = vadd.f32 0.0, %v508
  %510 = vdwg.mxu0
  %511 = vxpose.xlu0.b32.start [1/16] %v494, 128
  %512 = vxpose.xlu0.b32.cont [2/16] %v497, 128
  %513 = vxpose.xlu0.b32.cont [3/16] %v500, 128
  %514 = vxpose.xlu0.b32.cont [4/16] %v503, 128
  %515 = vxpose.xlu0.b32.cont [5/16] %v506, 128
  %516 = vxpose.xlu0.b32.cont [6/16] %v509, 128
  %517 = vxpose.xlu0.b32.cont [7/16] 0.0, 128
  %518 = vxpose.xlu0.b32.cont [8/16] 0.0, 128
  %519 = vxpose.xlu0.b32.cont [9/16] 0.0, 128
  %520 = vxpose.xlu0.b32.cont [10/16] 0.0, 128
  %521 = vxpose.xlu0.b32.cont [11/16] 0.0, 128
  %522 = vxpose.xlu0.b32.cont [12/16] 0.0, 128
  %523 = vxpose.xlu0.b32.cont [13/16] 0.0, 128
  %524 = vxpose.xlu0.b32.cont [14/16] 0.0, 128
  %525 = vxpose.xlu0.b32.cont [15/16] 0.0, 128
  %526 = vxpose.xlu0.b32.end [16/16] 0.0, 128
  %v527 = vpop.trf.xlu0
  %v528 = vpop.trf.xlu0
  %v529 = vpop.trf.xlu0
  %v530 = vpop.trf.xlu0
  %v531 = vpop.trf.xlu0
  %v532 = vpop.trf.xlu0
  %v533 = vpop.trf.xlu0
  %v534 = vpop.trf.xlu0
  %v535 = vpop.trf.xlu0
  %v536 = vpop.trf.xlu0
  %v537 = vpop.trf.xlu0
  %v538 = vpop.trf.xlu0
  %v539 = vpop.trf.xlu0
  %v540 = vpop.trf.xlu0
  %v541 = vpop.trf.xlu0
  %v542 = vpop.trf.xlu0
  %544 = vset.pattern.permute.xlu0 1
  %545 = vperm.xlu0 %544, %v494
  %v546 = vpop.permute.xlu0 %545
  %549 = vset.pattern.permute.xlu0 1
  %550 = vperm.xlu0 %549, %v497
  %v551 = vpop.permute.xlu0 %550
  %554 = vset.pattern.permute.xlu0 1
  %555 = vperm.xlu0 %554, %v500
  %v556 = vpop.permute.xlu0 %555
  %559 = vset.pattern.permute.xlu0 1
  %560 = vperm.xlu0 %559, %v503
  %v561 = vpop.permute.xlu0 %560
  %564 = vset.pattern.permute.xlu0 1
  %565 = vperm.xlu0 %564, %v506
  %v566 = vpop.permute.xlu0 %565
  %569 = vset.pattern.permute.xlu0 1
  %570 = vperm.xlu0 %569, %v509
  %v571 = vpop.permute.xlu0 %570
  %v573 = vperm.slane %v527, 0
  %v574 = vadd.f32 %v546, %v573
  %v575 = vadd.f32 %v551, %v573
  %v576 = vadd.f32 %v556, %v573
  %v577 = vadd.f32 %v561, %v573
  %v578 = vadd.f32 %v566, %v573
  %v579 = vadd.f32 %v571, %v573
  %vm580 = vcmp.gt.f32.partialorder %v574, 0.0
  %vm581 = vcmp.gt.f32.partialorder %v575, 0.0
  %vm582 = vcmp.gt.f32.partialorder %v576, 0.0
  %vm583 = vcmp.gt.f32.partialorder %v577, 0.0
  %vm584 = vcmp.gt.f32.partialorder %v578, 0.0
  %vm585 = vcmp.gt.f32.partialorder %v579, 0.0
  %v586 = vmul.f32 %v574, 0.2
  %v587 = vmul.f32 %v575, 0.2
  %v588 = vmul.f32 %v576, 0.2
  %v589 = vmul.f32 %v577, 0.2
  %v590 = vmul.f32 %v578, 0.2
  %v591 = vmul.f32 %v579, 0.2
  %v592 = vsel %vm580, %v574, %v586
  %v593 = vsel %vm581, %v575, %v587
  %v594 = vsel %vm582, %v576, %v588
  %v595 = vsel %vm583, %v577, %v589
  %v596 = vsel %vm584, %v578, %v590
  %v597 = vsel %vm585, %v579, %v591
  %v598 = vadd.f32 %v592, %v47
  %v599 = vadd.f32 %v593, %v48
  %v600 = vadd.f32 %v594, %v49
  %v601 = vadd.f32 %v595, %v50
  %v602 = vadd.f32 %v596, %v51
  %v603 = vadd.f32 %v597, %v52
  %v604 = vsel %vm229, %v598, -inf
  %605 = vmax.xlane.f32.xlu0 %v604
  %v606 = vpop.xlane.xlu0 %605
  %v607 = vsel %vm229, %v599, -inf
  %608 = vmax.xlane.f32.xlu0 %v607
  %v609 = vpop.xlane.xlu0 %608
  %v610 = vsel %vm229, %v600, -inf
  %611 = vmax.xlane.f32.xlu0 %v610
  %v612 = vpop.xlane.xlu0 %611
  %v613 = vsel %vm229, %v601, -inf
  %614 = vmax.xlane.f32.xlu0 %v613
  %v615 = vpop.xlane.xlu0 %614
  %v616 = vsel %vm229, %v602, -inf
  %617 = vmax.xlane.f32.xlu0 %v616
  %v618 = vpop.xlane.xlu0 %617
  %v619 = vsel %vm245, %v603, -inf
  %620 = vmax.xlane.f32.xlu0 %v619
  %v621 = vpop.xlane.xlu0 %620
  %v622 = vsub.f32 %v598, %v606
  %v623 = vsub.f32 %v599, %v609
  %v624 = vsub.f32 %v600, %v612
  %v625 = vsub.f32 %v601, %v615
  %v626 = vsub.f32 %v602, %v618
  %v627 = vsub.f32 %v603, %v621
  %v628 = vmul.f32 %v622, 1.442695
  %v629 = vpow.pop %v628
  %v630 = vmul.f32 %v623, 1.442695
  %v631 = vpow.pop %v630
  %v632 = vmul.f32 %v624, 1.442695
  %v633 = vpow.pop %v632
  %v634 = vmul.f32 %v625, 1.442695
  %v635 = vpow.pop %v634
  %v636 = vmul.f32 %v626, 1.442695
  %v637 = vpow.pop %v636
  %v638 = vmul.f32 %v627, 1.442695
  %v639 = vpow.pop %v638
  %v640 = vsel %vm229, %v629, 0.0
  %641 = vadd.xlane.f32.xlu0 %v640
  %v642 = vpop.xlane.xlu0 %641
  %v643 = vsel %vm229, %v631, 0.0
  %644 = vadd.xlane.f32.xlu0 %v643
  %v645 = vpop.xlane.xlu0 %644
  %v646 = vsel %vm229, %v633, 0.0
  %647 = vadd.xlane.f32.xlu0 %v646
  %v648 = vpop.xlane.xlu0 %647
  %v649 = vsel %vm229, %v635, 0.0
  %650 = vadd.xlane.f32.xlu0 %v649
  %v651 = vpop.xlane.xlu0 %650
  %v652 = vsel %vm229, %v637, 0.0
  %653 = vadd.xlane.f32.xlu0 %v652
  %v654 = vpop.xlane.xlu0 %653
  %v655 = vsel %vm245, %v639, 0.0
  %656 = vadd.xlane.f32.xlu0 %v655
  %v657 = vpop.xlane.xlu0 %656
  %v658 = vrcp.pop %v642
  %v659 = vrcp.pop %v645
  %v660 = vrcp.pop %v648
  %v661 = vrcp.pop %v651
  %v662 = vrcp.pop %v654
  %v663 = vrcp.pop %v657
  %v664 = vmul.f32 %v629, %v658
  %v665 = vmul.f32 %v631, %v659
  %v666 = vmul.f32 %v633, %v660
  %v667 = vmul.f32 %v635, %v661
  %v668 = vmul.f32 %v637, %v662
  %v669 = vmul.f32 %v639, %v663
  %v671 = vperm.slane %v386, 0
  %v672 = vperm.slane %v386, 1
  %v676 = vsel %vm229, %v664, 0
  %v679 = vsel %vm229, %v665, 0
  %v682 = vsel %vm229, %v666, 0
  %v685 = vsel %vm229, %v667, 0
  %v688 = vsel %vm229, %v668, 0
  %v691 = vsel %vm229, %v669, 0
  %v694 = vsel %vm318, %v439, 0
  %v697 = vsel %vm318, %v474, 0
  %699 = vmatpush.msra.mxu0 0.0
  %700 = vmatpush.msra.mxu0 0.0
  %701 = vmatpush.msra.mxu0 0.0
  %702 = vmatpush.msra.mxu0 0.0
  %703 = vmatpush.msra.mxu0 0.0
  %704 = vmatpush.msra.mxu0 0.0
  %705 = vmatpush.msra.mxu0 0.0
  %706 = vmatpush.msra.mxu0 0.0
  %707 = vmatpush.msra.mxu0 0.0
  %708 = vmatpush.msra.mxu0 0.0
  %709 = vmatpush.msra.mxu0 %v694
  %710 = vmatpush.msra.mxu0 %v436
  %711 = vmatpush.msra.mxu0 %v433
  %712 = vmatpush.msra.mxu0 %v430
  %713 = vmatpush.msra.mxu0 %v427
  %714 = vmatpush.msra.mxu0 %v424
  %715 = vmatmul.f32.gmra.mxu0 %v676
  %v716 = vpop.f32.mrf.mxu0
  %v717 = vadd.f32 %v671, %v716
  %718 = vmatmul.f32.gmra.mxu0 %v679
  %v719 = vpop.f32.mrf.mxu0
  %v720 = vadd.f32 %v671, %v719
  %721 = vmatmul.f32.gmra.mxu0 %v682
  %v722 = vpop.f32.mrf.mxu0
  %v723 = vadd.f32 %v671, %v722
  %724 = vmatmul.f32.gmra.mxu0 %v685
  %v725 = vpop.f32.mrf.mxu0
  %v726 = vadd.f32 %v671, %v725
  %727 = vmatmul.f32.gmra.mxu0 %v688
  %v728 = vpop.f32.mrf.mxu0
  %v729 = vadd.f32 %v671, %v728
  %730 = vmatmul.f32.gmra.mxu0 %v691
  %v731 = vpop.f32.mrf.mxu0
  %v732 = vadd.f32 %v671, %v731
  %733 = vdwg.mxu0
  %734 = vmatpush.msra.mxu0 0.0
  %735 = vmatpush.msra.mxu0 0.0
  %736 = vmatpush.msra.mxu0 0.0
  %737 = vmatpush.msra.mxu0 0.0
  %738 = vmatpush.msra.mxu0 0.0
  %739 = vmatpush.msra.mxu0 0.0
  %740 = vmatpush.msra.mxu0 0.0
  %741 = vmatpush.msra.mxu0 0.0
  %742 = vmatpush.msra.mxu0 0.0
  %743 = vmatpush.msra.mxu0 0.0
  %744 = vmatpush.msra.mxu0 %v697
  %745 = vmatpush.msra.mxu0 %v471
  %746 = vmatpush.msra.mxu0 %v468
  %747 = vmatpush.msra.mxu0 %v465
  %748 = vmatpush.msra.mxu0 %v462
  %749 = vmatpush.msra.mxu0 %v459
  %750 = vmatmul.f32.gmra.mxu0 %v676
  %v751 = vpop.f32.mrf.mxu0
  %v752 = vadd.f32 %v672, %v751
  %753 = vmatmul.f32.gmra.mxu0 %v679
  %v754 = vpop.f32.mrf.mxu0
  %v755 = vadd.f32 %v672, %v754
  %756 = vmatmul.f32.gmra.mxu0 %v682
  %v757 = vpop.f32.mrf.mxu0
  %v758 = vadd.f32 %v672, %v757
  %759 = vmatmul.f32.gmra.mxu0 %v685
  %v760 = vpop.f32.mrf.mxu0
  %v761 = vadd.f32 %v672, %v760
  %762 = vmatmul.f32.gmra.mxu0 %v688
  %v763 = vpop.f32.mrf.mxu0
  %v764 = vadd.f32 %v672, %v763
  %765 = vmatmul.f32.gmra.mxu0 %v691
  %v766 = vpop.f32.mrf.mxu0
  %v767 = vadd.f32 %v672, %v766
  %768 = vdwg.mxu0
  %v769 = vmax.f32 %v717, 0.0
  %v770 = vmax.f32 %v752, 0.0
  %v771 = vmax.f32 %v720, 0.0
  %v772 = vmax.f32 %v755, 0.0
  %v773 = vmax.f32 %v723, 0.0
  %v774 = vmax.f32 %v758, 0.0
  %v775 = vmax.f32 %v726, 0.0
  %v776 = vmax.f32 %v761, 0.0
  %v777 = vmax.f32 %v729, 0.0
  %v778 = vmax.f32 %v764, 0.0
  %v779 = vmax.f32 %v732, 0.0
  %v780 = vmax.f32 %v767, 0.0
  %v781 = vld [vmem:[%s6] sm:$0xff]
  %v782 = vld [vmem:[%s6 + $0x8] sm:$0xff]
  %v783 = vld [vmem:[%s6 + $0x10] sm:$0xff]
  %v784 = vld [vmem:[%s6 + $0x18] sm:$0xff]
  %v785 = vld [vmem:[%s6 + $0x20] sm:$0xff]
  %v786 = vld [vmem:[%s6 + $0x28] sm:$0xff]
  %v787 = vld [vmem:[%s6 + $0x30] sm:$0xff]
  %v788 = vld [vmem:[%s6 + $0x38] sm:$0xff]
  %v789 = vld [vmem:[%s6 + $0x40] sm:$0xff]
  %v790 = vld [vmem:[%s6 + $0x48] sm:$0xff]
  %v791 = vld [vmem:[%s6 + $0x50] sm:$0xff]
  %v792 = vld [vmem:[%s6 + $0x58] sm:$0xff]
  %v793 = vld [vmem:[%s6 + $0x60] sm:$0xff]
  %v794 = vld [vmem:[%s6 + $0x68] sm:$0xff]
  %v795 = vld [vmem:[%s6 + $0x70] sm:$0xff]
  %v796 = vld [vmem:[%s6 + $0x78] sm:$0xff]
  %v797 = vld [vmem:[%s6 + $0x80] sm:$0xff]
  %v798 = vld [vmem:[%s6 + $0x88] sm:$0xff]
  %v799 = vld [vmem:[%s6 + $0x90] sm:$0xff]
  %v800 = vld [vmem:[%s6 + $0x98] sm:$0xff]
  %v801 = vld [vmem:[%s6 + $0xa0] sm:$0xff]
  %v802 = vld [vmem:[%s6 + $0xa8] sm:$0xff]
  %v803 = vld [vmem:[%s6 + $0xb0] sm:$0xff]
  %v804 = vld [vmem:[%s6 + $0xb8] sm:$0xff]
  %v805 = vld [vmem:[%s6 + $0xc0] sm:$0xff]
  %v806 = vld [vmem:[%s6 + $0xc8] sm:$0xff]
  %v807 = vld [vmem:[%s6 + $0xd0] sm:$0xff]
  %v808 = vld [vmem:[%s6 + $0xd8] sm:$0xff]
  %v809 = vld [vmem:[%s6 + $0xe0] sm:$0xff]
  %v810 = vld [vmem:[%s6 + $0xe8] sm:$0xff]
  %v811 = vld [vmem:[%s6 + $0xf0] sm:$0xff]
  %v812 = vld [vmem:[%s6 + $0xf8] sm:$0xff]
  %v813 = vld [vmem:[%s6 + $0x100] sm:$0xff]
  %v814 = vld [vmem:[%s6 + $0x108] sm:$0xff]
  %v815 = vld [vmem:[%s6 + $0x110] sm:$0xff]
  %v816 = vld [vmem:[%s6 + $0x118] sm:$0xff]
  %v817 = vld [vmem:[%s6 + $0x120] sm:$0xff]
  %v818 = vld [vmem:[%s6 + $0x128] sm:$0xff]
  %v819 = vld [vmem:[%s6 + $0x130] sm:$0xff]
  %v820 = vld [vmem:[%s6 + $0x138] sm:$0xff]
  %v821 = vld [vmem:[%s6 + $0x140] sm:$0xff]
  %v822 = vld [vmem:[%s6 + $0x148] sm:$0xff]
  %v823 = vld [vmem:[%s6 + $0x150] sm:$0xff]
  %v824 = vld [vmem:[%s6 + $0x158] sm:$0xff]
  %v825 = vld [vmem:[%s6 + $0x160] sm:$0xff]
  %v826 = vld [vmem:[%s6 + $0x168] sm:$0xff]
  %v827 = vld [vmem:[%s6 + $0x170] sm:$0xff]
  %v828 = vld [vmem:[%s6 + $0x178] sm:$0xff]
  %v829 = vld [vmem:[%s6 + $0x180] sm:$0xff]
  %v830 = vld [vmem:[%s6 + $0x188] sm:$0xff]
  %v831 = vld [vmem:[%s6 + $0x190] sm:$0xff]
  %v832 = vld [vmem:[%s6 + $0x198] sm:$0xff]
  %v833 = vld [vmem:[%s6 + $0x1a0] sm:$0xff]
  %v834 = vld [vmem:[%s6 + $0x1a8] sm:$0xff]
  %v835 = vld [vmem:[%s6 + $0x1b0] sm:$0xff]
  %v836 = vld [vmem:[%s6 + $0x1b8] sm:$0xff]
  %v837 = vld [vmem:[%s6 + $0x1c0] sm:$0xff]
  %v838 = vld [vmem:[%s6 + $0x1c8] sm:$0xff]
  %v839 = vld [vmem:[%s6 + $0x1d0] sm:$0xff]
  %v840 = vld [vmem:[%s6 + $0x1d8] sm:$0xff]
  %v841 = vld [vmem:[%s6 + $0x1e0] sm:$0xff]
  %v842 = vld [vmem:[%s6 + $0x1e8] sm:$0xff]
  %v843 = vld [vmem:[%s6 + $0x1f0] sm:$0xff]
  %v844 = vld [vmem:[%s6 + $0x1f8] sm:$0xff]
  %v845 = vld [vmem:[%s6 + $0x200] sm:$0xff]
  %v846 = vld [vmem:[%s6 + $0x208] sm:$0xff]
  %v847 = vld [vmem:[%s6 + $0x210] sm:$0xff]
  %v848 = vld [vmem:[%s6 + $0x218] sm:$0xff]
  %v849 = vld [vmem:[%s6 + $0x220] sm:$0xff]
  %v850 = vld [vmem:[%s6 + $0x228] sm:$0xff]
  %v851 = vld [vmem:[%s6 + $0x230] sm:$0xff]
  %v852 = vld [vmem:[%s6 + $0x238] sm:$0xff]
  %v853 = vld [vmem:[%s6 + $0x240] sm:$0xff]
  %v854 = vld [vmem:[%s6 + $0x248] sm:$0xff]
  %v855 = vld [vmem:[%s6 + $0x250] sm:$0xff]
  %v856 = vld [vmem:[%s6 + $0x258] sm:$0xff]
  %v857 = vld [vmem:[%s6 + $0x260] sm:$0xff]
  %v858 = vld [vmem:[%s6 + $0x268] sm:$0xff]
  %v859 = vld [vmem:[%s6 + $0x270] sm:$0xff]
  %v860 = vld [vmem:[%s6 + $0x278] sm:$0xff]
  %v861 = vld [vmem:[%s6 + $0x280] sm:$0xff]
  %v862 = vld [vmem:[%s6 + $0x288] sm:$0xff]
  %v863 = vld [vmem:[%s6 + $0x290] sm:$0xff]
  %v864 = vld [vmem:[%s6 + $0x298] sm:$0xff]
  %v865 = vld [vmem:[%s6 + $0x2a0] sm:$0xff]
  %v866 = vld [vmem:[%s6 + $0x2a8] sm:$0xff]
  %v867 = vld [vmem:[%s6 + $0x2b0] sm:$0xff]
  %v868 = vld [vmem:[%s6 + $0x2b8] sm:$0xff]
  %v869 = vld [vmem:[%s6 + $0x2c0] sm:$0xff]
  %v870 = vld [vmem:[%s6 + $0x2c8] sm:$0xff]
  %v871 = vld [vmem:[%s6 + $0x2d0] sm:$0xff]
  %v872 = vld [vmem:[%s6 + $0x2d8] sm:$0xff]
  %v873 = vld [vmem:[%s6 + $0x2e0] sm:$0xff]
  %v874 = vld [vmem:[%s6 + $0x2e8] sm:$0xff]
  %v875 = vld [vmem:[%s6 + $0x2f0] sm:$0xff]
  %v876 = vld [vmem:[%s6 + $0x2f8] sm:$0xff]
  %v877 = vld [vmem:[%s6 + $0x300] sm:$0xff]
  %v878 = vld [vmem:[%s6 + $0x308] sm:$0xff]
  %v879 = vld [vmem:[%s6 + $0x310] sm:$0xff]
  %v880 = vld [vmem:[%s6 + $0x318] sm:$0xff]
  %v881 = vld [vmem:[%s6 + $0x320] sm:$0xff]
  %v882 = vld [vmem:[%s6 + $0x328] sm:$0xff]
  %v883 = vld [vmem:[%s6 + $0x330] sm:$0xff]
  %v884 = vld [vmem:[%s6 + $0x338] sm:$0xff]
  %v885 = vld [vmem:[%s6 + $0x340] sm:$0xff]
  %v886 = vld [vmem:[%s6 + $0x348] sm:$0xff]
  %v887 = vld [vmem:[%s6 + $0x350] sm:$0xff]
  %v888 = vld [vmem:[%s6 + $0x358] sm:$0xff]
  %v889 = vld [vmem:[%s6 + $0x360] sm:$0xff]
  %v890 = vld [vmem:[%s6 + $0x368] sm:$0xff]
  %v891 = vld [vmem:[%s6 + $0x370] sm:$0xff]
  %v892 = vld [vmem:[%s6 + $0x378] sm:$0xff]
  %v893 = vld [vmem:[%s6 + $0x380] sm:$0xff]
  %v894 = vld [vmem:[%s6 + $0x388] sm:$0xff]
  %v895 = vld [vmem:[%s6 + $0x390] sm:$0xff]
  %v896 = vld [vmem:[%s6 + $0x398] sm:$0xff]
  %v897 = vld [vmem:[%s6 + $0x3a0] sm:$0xff]
  %v898 = vld [vmem:[%s6 + $0x3a8] sm:$0xff]
  %v899 = vld [vmem:[%s6 + $0x3b0] sm:$0xff]
  %v900 = vld [vmem:[%s6 + $0x3b8] sm:$0xff]
  %v901 = vld [vmem:[%s6 + $0x3c0] sm:$0xff]
  %v902 = vld [vmem:[%s6 + $0x3c8] sm:$0xff]
  %v903 = vld [vmem:[%s6 + $0x3d0] sm:$0xff]
  %v904 = vld [vmem:[%s6 + $0x3d8] sm:$0xff]
  %v905 = vld [vmem:[%s6 + $0x3e0] sm:$0xff]
  %v906 = vld [vmem:[%s6 + $0x3e8] sm:$0xff]
  %v907 = vld [vmem:[%s6 + $0x3f0] sm:$0xff]
  %v908 = vld [vmem:[%s6 + $0x3f8] sm:$0xff]
  %v909 = vld [vmem:[%s6 + $0x400] sm:$0xff]
  %v910 = vld [vmem:[%s6 + $0x408] sm:$0xff]
  %v911 = vld [vmem:[%s6 + $0x410] sm:$0xff]
  %v912 = vld [vmem:[%s6 + $0x418] sm:$0xff]
  %v913 = vld [vmem:[%s6 + $0x420] sm:$0xff]
  %v914 = vld [vmem:[%s6 + $0x428] sm:$0xff]
  %v915 = vld [vmem:[%s6 + $0x430] sm:$0xff]
  %v916 = vld [vmem:[%s6 + $0x438] sm:$0xff]
  %v917 = vld [vmem:[%s6 + $0x440] sm:$0xff]
  %v918 = vld [vmem:[%s6 + $0x448] sm:$0xff]
  %v919 = vld [vmem:[%s6 + $0x450] sm:$0xff]
  %v920 = vld [vmem:[%s6 + $0x458] sm:$0xff]
  %v921 = vld [vmem:[%s6 + $0x460] sm:$0xff]
  %v922 = vld [vmem:[%s6 + $0x468] sm:$0xff]
  %v923 = vld [vmem:[%s6 + $0x470] sm:$0xff]
  %v924 = vld [vmem:[%s6 + $0x478] sm:$0xff]
  %v925 = vld [vmem:[%s6 + $0x480] sm:$0xff]
  %v926 = vld [vmem:[%s6 + $0x488] sm:$0xff]
  %v927 = vld [vmem:[%s6 + $0x490] sm:$0xff]
  %v928 = vld [vmem:[%s6 + $0x498] sm:$0xff]
  %v929 = vld [vmem:[%s6 + $0x4a0] sm:$0xff]
  %v930 = vld [vmem:[%s6 + $0x4a8] sm:$0xff]
  %v931 = vld [vmem:[%s6 + $0x4b0] sm:$0xff]
  %v932 = vld [vmem:[%s6 + $0x4b8] sm:$0xff]
  %v933 = vld [vmem:[%s6 + $0x4c0] sm:$0xff]
  %v934 = vld [vmem:[%s6 + $0x4c8] sm:$0xff]
  %v935 = vld [vmem:[%s6 + $0x4d0] sm:$0xff]
  %v936 = vld [vmem:[%s6 + $0x4d8] sm:$0xff]
  %v937 = vld [vmem:[%s6 + $0x4e0] sm:$0xff]
  %v938 = vld [vmem:[%s6 + $0x4e8] sm:$0xff]
  %v939 = vld [vmem:[%s6 + $0x4f0] sm:$0xff]
  %v940 = vld [vmem:[%s6 + $0x4f8] sm:$0xff]
  %v941 = vld [vmem:[%s6 + $0x500] sm:$0xff]
  %v942 = vld [vmem:[%s6 + $0x508] sm:$0xff]
  %v943 = vld [vmem:[%s6 + $0x510] sm:$0xff]
  %v944 = vld [vmem:[%s6 + $0x518] sm:$0xff]
  %v945 = vld [vmem:[%s6 + $0x520] sm:$0xff]
  %v946 = vld [vmem:[%s6 + $0x528] sm:$0xff]
  %v947 = vld [vmem:[%s6 + $0x530] sm:$0xff]
  %v948 = vld [vmem:[%s6 + $0x538] sm:$0xff]
  %v949 = vld [vmem:[%s6 + $0x540] sm:$0xff]
  %v950 = vld [vmem:[%s6 + $0x548] sm:$0xff]
  %v951 = vld [vmem:[%s6 + $0x550] sm:$0xff]
  %v952 = vld [vmem:[%s6 + $0x558] sm:$0xff]
  %v953 = vld [vmem:[%s6 + $0x560] sm:$0xff]
  %v954 = vld [vmem:[%s6 + $0x568] sm:$0xff]
  %v955 = vld [vmem:[%s6 + $0x570] sm:$0xff]
  %v956 = vld [vmem:[%s6 + $0x578] sm:$0xff]
  %v957 = vld [vmem:[%s6 + $0x580] sm:$0xff]
  %v958 = vld [vmem:[%s6 + $0x588] sm:$0xff]
  %v959 = vld [vmem:[%s6 + $0x590] sm:$0xff]
  %v960 = vld [vmem:[%s6 + $0x598] sm:$0xff]
  %v961 = vld [vmem:[%s6 + $0x5a0] sm:$0xff]
  %v962 = vld [vmem:[%s6 + $0x5a8] sm:$0xff]
  %v963 = vld [vmem:[%s6 + $0x5b0] sm:$0xff]
  %v964 = vld [vmem:[%s6 + $0x5b8] sm:$0xff]
  %v965 = vld [vmem:[%s6 + $0x5c0] sm:$0xff]
  %v966 = vld [vmem:[%s6 + $0x5c8] sm:$0xff]
  %v967 = vld [vmem:[%s6 + $0x5d0] sm:$0xff]
  %v968 = vld [vmem:[%s6 + $0x5d8] sm:$0xff]
  %v969 = vld [vmem:[%s6 + $0x5e0] sm:$0xff]
  %v970 = vld [vmem:[%s6 + $0x5e8] sm:$0xff]
  %v971 = vld [vmem:[%s6 + $0x5f0] sm:$0xff]
  %v972 = vld [vmem:[%s6 + $0x5f8] sm:$0xff]
  %v973 = vld [vmem:[%s6 + $0x600] sm:$0xff]
  %v974 = vld [vmem:[%s6 + $0x608] sm:$0xff]
  %v975 = vld [vmem:[%s6 + $0x610] sm:$0xff]
  %v976 = vld [vmem:[%s6 + $0x618] sm:$0xff]
  %v977 = vld [vmem:[%s6 + $0x620] sm:$0xff]
  %v978 = vld [vmem:[%s6 + $0x628] sm:$0xff]
  %v979 = vld [vmem:[%s6 + $0x630] sm:$0xff]
  %v980 = vld [vmem:[%s6 + $0x638] sm:$0xff]
  %v981 = vld [vmem:[%s6 + $0x640] sm:$0xff]
  %v982 = vld [vmem:[%s6 + $0x648] sm:$0xff]
  %v983 = vld [vmem:[%s6 + $0x650] sm:$0xff]
  %v984 = vld [vmem:[%s6 + $0x658] sm:$0xff]
  %v985 = vld [vmem:[%s6 + $0x660] sm:$0xff]
  %v986 = vld [vmem:[%s6 + $0x668] sm:$0xff]
  %v987 = vld [vmem:[%s6 + $0x670] sm:$0xff]
  %v988 = vld [vmem:[%s6 + $0x678] sm:$0xff]
  %v989 = vld [vmem:[%s6 + $0x680] sm:$0xff]
  %v990 = vld [vmem:[%s6 + $0x688] sm:$0xff]
  %v991 = vld [vmem:[%s6 + $0x690] sm:$0xff]
  %v992 = vld [vmem:[%s6 + $0x698] sm:$0xff]
  %v993 = vld [vmem:[%s6 + $0x6a0] sm:$0xff]
  %v994 = vld [vmem:[%s6 + $0x6a8] sm:$0xff]
  %v995 = vld [vmem:[%s6 + $0x6b0] sm:$0xff]
  %v996 = vld [vmem:[%s6 + $0x6b8] sm:$0xff]
  %v997 = vld [vmem:[%s6 + $0x6c0] sm:$0xff]
  %v998 = vld [vmem:[%s6 + $0x6c8] sm:$0xff]
  %v999 = vld [vmem:[%s6 + $0x6d0] sm:$0xff]
  %v1000 = vld [vmem:[%s6 + $0x6d8] sm:$0xff]
  %v1001 = vld [vmem:[%s6 + $0x6e0] sm:$0xff]
  %v1002 = vld [vmem:[%s6 + $0x6e8] sm:$0xff]
  %v1003 = vld [vmem:[%s6 + $0x6f0] sm:$0xff]
  %v1004 = vld [vmem:[%s6 + $0x6f8] sm:$0xff]
  %v1005 = vld [vmem:[%s6 + $0x700] sm:$0xff]
  %v1006 = vld [vmem:[%s6 + $0x708] sm:$0xff]
  %v1007 = vld [vmem:[%s6 + $0x710] sm:$0xff]
  %v1008 = vld [vmem:[%s6 + $0x718] sm:$0xff]
  %v1009 = vld [vmem:[%s6 + $0x720] sm:$0xff]
  %v1010 = vld [vmem:[%s6 + $0x728] sm:$0xff]
  %v1011 = vld [vmem:[%s6 + $0x730] sm:$0xff]
  %v1012 = vld [vmem:[%s6 + $0x738] sm:$0xff]
  %v1013 = vld [vmem:[%s6 + $0x740] sm:$0xff]
  %v1014 = vld [vmem:[%s6 + $0x748] sm:$0xff]
  %v1015 = vld [vmem:[%s6 + $0x750] sm:$0xff]
  %v1016 = vld [vmem:[%s6 + $0x758] sm:$0xff]
  %v1017 = vld [vmem:[%s6 + $0x760] sm:$0xff]
  %v1018 = vld [vmem:[%s6 + $0x768] sm:$0xff]
  %v1019 = vld [vmem:[%s6 + $0x770] sm:$0xff]
  %v1020 = vld [vmem:[%s6 + $0x778] sm:$0xff]
  %v1021 = vld [vmem:[%s6 + $0x780] sm:$0xff]
  %v1022 = vld [vmem:[%s6 + $0x788] sm:$0xff]
  %v1023 = vld [vmem:[%s6 + $0x790] sm:$0xff]
  %v1024 = vld [vmem:[%s6 + $0x798] sm:$0xff]
  %v1025 = vld [vmem:[%s6 + $0x7a0] sm:$0xff]
  %v1026 = vld [vmem:[%s6 + $0x7a8] sm:$0xff]
  %v1027 = vld [vmem:[%s6 + $0x7b0] sm:$0xff]
  %v1028 = vld [vmem:[%s6 + $0x7b8] sm:$0xff]
  %v1029 = vld [vmem:[%s6 + $0x7c0] sm:$0xff]
  %v1030 = vld [vmem:[%s6 + $0x7c8] sm:$0xff]
  %v1031 = vld [vmem:[%s6 + $0x7d0] sm:$0xff]
  %v1032 = vld [vmem:[%s6 + $0x7d8] sm:$0xff]
  %v1033 = vld [vmem:[%s6 + $0x7e0] sm:$0xff]
  %v1034 = vld [vmem:[%s6 + $0x7e8] sm:$0xff]
  %v1035 = vld [vmem:[%s6 + $0x7f0] sm:$0xff]
  %v1036 = vld [vmem:[%s6 + $0x7f8] sm:$0xff]
  %v1037 = vld [vmem:[%s6 + $0x800] sm:$0xff]
  %v1038 = vld [vmem:[%s6 + $0x808] sm:$0xff]
  %v1039 = vld [vmem:[%s6 + $0x810] sm:$0xff]
  %v1040 = vld [vmem:[%s6 + $0x818] sm:$0xff]
  %v1041 = vld [vmem:[%s6 + $0x820] sm:$0xff]
  %v1042 = vld [vmem:[%s6 + $0x828] sm:$0xff]
  %v1043 = vld [vmem:[%s6 + $0x830] sm:$0xff]
  %v1044 = vld [vmem:[%s6 + $0x838] sm:$0xff]
  %v1045 = vld [vmem:[%s6 + $0x840] sm:$0xff]
  %v1046 = vld [vmem:[%s6 + $0x848] sm:$0xff]
  %v1047 = vld [vmem:[%s6 + $0x850] sm:$0xff]
  %v1048 = vld [vmem:[%s6 + $0x858] sm:$0xff]
  %v1049 = vld [vmem:[%s6 + $0x860] sm:$0xff]
  %v1050 = vld [vmem:[%s6 + $0x868] sm:$0xff]
  %v1051 = vld [vmem:[%s6 + $0x870] sm:$0xff]
  %v1052 = vld [vmem:[%s6 + $0x878] sm:$0xff]
  %v1053 = vld [vmem:[%s6 + $0x880] sm:$0xff]
  %v1054 = vld [vmem:[%s6 + $0x888] sm:$0xff]
  %v1055 = vld [vmem:[%s6 + $0x890] sm:$0xff]
  %v1056 = vld [vmem:[%s6 + $0x898] sm:$0xff]
  %v1057 = vld [vmem:[%s6 + $0x8a0] sm:$0xff]
  %v1058 = vld [vmem:[%s6 + $0x8a8] sm:$0xff]
  %v1059 = vld [vmem:[%s6 + $0x8b0] sm:$0xff]
  %v1060 = vld [vmem:[%s6 + $0x8b8] sm:$0xff]
  %v1061 = vld [vmem:[%s6 + $0x8c0] sm:$0xff]
  %v1062 = vld [vmem:[%s6 + $0x8c8] sm:$0xff]
  %v1063 = vld [vmem:[%s6 + $0x8d0] sm:$0xff]
  %v1064 = vld [vmem:[%s6 + $0x8d8] sm:$0xff]
  %v1065 = vld [vmem:[%s6 + $0x8e0] sm:$0xff]
  %v1066 = vld [vmem:[%s6 + $0x8e8] sm:$0xff]
  %v1067 = vld [vmem:[%s6 + $0x8f0] sm:$0xff]
  %v1068 = vld [vmem:[%s6 + $0x8f8] sm:$0xff]
  %v1069 = vld [vmem:[%s7] sm:$0xff]
  %1070 = vmatpush.msra.mxu0 %v916
  %1071 = vmatpush.msra.mxu0 %v907
  %1072 = vmatpush.msra.mxu0 %v898
  %1073 = vmatpush.msra.mxu0 %v889
  %1074 = vmatpush.msra.mxu0 %v880
  %1075 = vmatpush.msra.mxu0 %v871
  %1076 = vmatpush.msra.mxu0 %v862
  %1077 = vmatpush.msra.mxu0 %v853
  %1078 = vmatpush.msra.mxu0 %v844
  %1079 = vmatpush.msra.mxu0 %v835
  %1080 = vmatpush.msra.mxu0 %v826
  %1081 = vmatpush.msra.mxu0 %v817
  %1082 = vmatpush.msra.mxu0 %v808
  %1083 = vmatpush.msra.mxu0 %v799
  %1084 = vmatpush.msra.mxu0 %v790
  %1085 = vmatpush.msra.mxu0 %v781
  %1086 = vmatmul.f32.gmra.mxu0 %v769
  %v1087 = vpop.f32.mrf.mxu0
  %v1088 = vadd.f32 0.0, %v1087
  %1089 = vmatmul.f32.gmra.mxu0 %v771
  %v1090 = vpop.f32.mrf.mxu0
  %v1091 = vadd.f32 0.0, %v1090
  %1092 = vmatmul.f32.gmra.mxu0 %v773
  %v1093 = vpop.f32.mrf.mxu0
  %v1094 = vadd.f32 0.0, %v1093
  %1095 = vmatmul.f32.gmra.mxu0 %v775
  %v1096 = vpop.f32.mrf.mxu0
  %v1097 = vadd.f32 0.0, %v1096
  %1098 = vmatmul.f32.gmra.mxu0 %v777
  %v1099 = vpop.f32.mrf.mxu0
  %v1100 = vadd.f32 0.0, %v1099
  %1101 = vmatmul.f32.gmra.mxu0 %v779
  %v1102 = vpop.f32.mrf.mxu0
  %v1103 = vadd.f32 0.0, %v1102
  %1104 = vdwg.mxu0
  %1105 = vmatpush.msra.mxu0 %v1060
  %1106 = vmatpush.msra.mxu0 %v1051
  %1107 = vmatpush.msra.mxu0 %v1042
  %1108 = vmatpush.msra.mxu0 %v1033
  %1109 = vmatpush.msra.mxu0 %v1024
  %1110 = vmatpush.msra.mxu0 %v1015
  %1111 = vmatpush.msra.mxu0 %v1006
  %1112 = vmatpush.msra.mxu0 %v997
  %1113 = vmatpush.msra.mxu0 %v988
  %1114 = vmatpush.msra.mxu0 %v979
  %1115 = vmatpush.msra.mxu0 %v970
  %1116 = vmatpush.msra.mxu0 %v961
  %1117 = vmatpush.msra.mxu0 %v952
  %1118 = vmatpush.msra.mxu0 %v943
  %1119 = vmatpush.msra.mxu0 %v934
  %1120 = vmatpush.msra.mxu0 %v925
  %1121 = vmatmul.f32.gmra.mxu0 %v770
  %v1122 = vpop.f32.mrf.mxu0
  %v1123 = vadd.f32 %v1088, %v1122
  %1124 = vmatmul.f32.gmra.mxu0 %v772
  %v1125 = vpop.f32.mrf.mxu0
  %v1126 = vadd.f32 %v1091, %v1125
  %1127 = vmatmul.f32.gmra.mxu0 %v774
  %v1128 = vpop.f32.mrf.mxu0
  %v1129 = vadd.f32 %v1094, %v1128
  %1130 = vmatmul.f32.gmra.mxu0 %v776
  %v1131 = vpop.f32.mrf.mxu0
  %v1132 = vadd.f32 %v1097, %v1131
  %1133 = vmatmul.f32.gmra.mxu0 %v778
  %v1134 = vpop.f32.mrf.mxu0
  %v1135 = vadd.f32 %v1100, %v1134
  %1136 = vmatmul.f32.gmra.mxu0 %v780
  %v1137 = vpop.f32.mrf.mxu0
  %v1138 = vadd.f32 %v1103, %v1137
  %1139 = vdwg.mxu0
  %1140 = vmatpush.msra.mxu0 %v917
  %1141 = vmatpush.msra.mxu0 %v908
  %1142 = vmatpush.msra.mxu0 %v899
  %1143 = vmatpush.msra.mxu0 %v890
  %1144 = vmatpush.msra.mxu0 %v881
  %1145 = vmatpush.msra.mxu0 %v872
  %1146 = vmatpush.msra.mxu0 %v863
  %1147 = vmatpush.msra.mxu0 %v854
  %1148 = vmatpush.msra.mxu0 %v845
  %1149 = vmatpush.msra.mxu0 %v836
  %1150 = vmatpush.msra.mxu0 %v827
  %1151 = vmatpush.msra.mxu0 %v818
  %1152 = vmatpush.msra.mxu0 %v809
  %1153 = vmatpush.msra.mxu0 %v800
  %1154 = vmatpush.msra.mxu0 %v791
  %1155 = vmatpush.msra.mxu0 %v782
  %1156 = vmatmul.f32.gmra.mxu0 %v769
  %v1157 = vpop.f32.mrf.mxu0
  %v1158 = vadd.f32 0.0, %v1157
  %1159 = vmatmul.f32.gmra.mxu0 %v771
  %v1160 = vpop.f32.mrf.mxu0
  %v1161 = vadd.f32 0.0, %v1160
  %1162 = vmatmul.f32.gmra.mxu0 %v773
  %v1163 = vpop.f32.mrf.mxu0
  %v1164 = vadd.f32 0.0, %v1163
  %1165 = vmatmul.f32.gmra.mxu0 %v775
  %v1166 = vpop.f32.mrf.mxu0
  %v1167 = vadd.f32 0.0, %v1166
  %1168 = vmatmul.f32.gmra.mxu0 %v777
  %v1169 = vpop.f32.mrf.mxu0
  %v1170 = vadd.f32 0.0, %v1169
  %1171 = vmatmul.f32.gmra.mxu0 %v779
  %v1172 = vpop.f32.mrf.mxu0
  %v1173 = vadd.f32 0.0, %v1172
  %1174 = vdwg.mxu0
  %1175 = vmatpush.msra.mxu0 %v1061
  %1176 = vmatpush.msra.mxu0 %v1052
  %1177 = vmatpush.msra.mxu0 %v1043
  %1178 = vmatpush.msra.mxu0 %v1034
  %1179 = vmatpush.msra.mxu0 %v1025
  %1180 = vmatpush.msra.mxu0 %v1016
  %1181 = vmatpush.msra.mxu0 %v1007
  %1182 = vmatpush.msra.mxu0 %v998
  %1183 = vmatpush.msra.mxu0 %v989
  %1184 = vmatpush.msra.mxu0 %v980
  %1185 = vmatpush.msra.mxu0 %v971
  %1186 = vmatpush.msra.mxu0 %v962
  %1187 = vmatpush.msra.mxu0 %v953
  %1188 = vmatpush.msra.mxu0 %v944
  %1189 = vmatpush.msra.mxu0 %v935
  %1190 = vmatpush.msra.mxu0 %v926
  %1191 = vmatmul.f32.gmra.mxu0 %v770
  %v1192 = vpop.f32.mrf.mxu0
  %v1193 = vadd.f32 %v1158, %v1192
  %1194 = vmatmul.f32.gmra.mxu0 %v772
  %v1195 = vpop.f32.mrf.mxu0
  %v1196 = vadd.f32 %v1161, %v1195
  %1197 = vmatmul.f32.gmra.mxu0 %v774
  %v1198 = vpop.f32.mrf.mxu0
  %v1199 = vadd.f32 %v1164, %v1198
  %1200 = vmatmul.f32.gmra.mxu0 %v776
  %v1201 = vpop.f32.mrf.mxu0
  %v1202 = vadd.f32 %v1167, %v1201
  %1203 = vmatmul.f32.gmra.mxu0 %v778
  %v1204 = vpop.f32.mrf.mxu0
  %v1205 = vadd.f32 %v1170, %v1204
  %1206 = vmatmul.f32.gmra.mxu0 %v780
  %v1207 = vpop.f32.mrf.mxu0
  %v1208 = vadd.f32 %v1173, %v1207
  %1209 = vdwg.mxu0
  %1210 = vmatpush.msra.mxu0 %v918
  %1211 = vmatpush.msra.mxu0 %v909
  %1212 = vmatpush.msra.mxu0 %v900
  %1213 = vmatpush.msra.mxu0 %v891
  %1214 = vmatpush.msra.mxu0 %v882
  %1215 = vmatpush.msra.mxu0 %v873
  %1216 = vmatpush.msra.mxu0 %v864
  %1217 = vmatpush.msra.mxu0 %v855
  %1218 = vmatpush.msra.mxu0 %v846
  %1219 = vmatpush.msra.mxu0 %v837
  %1220 = vmatpush.msra.mxu0 %v828
  %1221 = vmatpush.msra.mxu0 %v819
  %1222 = vmatpush.msra.mxu0 %v810
  %1223 = vmatpush.msra.mxu0 %v801
  %1224 = vmatpush.msra.mxu0 %v792
  %1225 = vmatpush.msra.mxu0 %v783
  %1226 = vmatmul.f32.gmra.mxu0 %v769
  %v1227 = vpop.f32.mrf.mxu0
  %v1228 = vadd.f32 0.0, %v1227
  %1229 = vmatmul.f32.gmra.mxu0 %v771
  %v1230 = vpop.f32.mrf.mxu0
  %v1231 = vadd.f32 0.0, %v1230
  %1232 = vmatmul.f32.gmra.mxu0 %v773
  %v1233 = vpop.f32.mrf.mxu0
  %v1234 = vadd.f32 0.0, %v1233
  %1235 = vmatmul.f32.gmra.mxu0 %v775
  %v1236 = vpop.f32.mrf.mxu0
  %v1237 = vadd.f32 0.0, %v1236
  %1238 = vmatmul.f32.gmra.mxu0 %v777
  %v1239 = vpop.f32.mrf.mxu0
  %v1240 = vadd.f32 0.0, %v1239
  %1241 = vmatmul.f32.gmra.mxu0 %v779
  %v1242 = vpop.f32.mrf.mxu0
  %v1243 = vadd.f32 0.0, %v1242
  %1244 = vdwg.mxu0
  %1245 = vmatpush.msra.mxu0 %v1062
  %1246 = vmatpush.msra.mxu0 %v1053
  %1247 = vmatpush.msra.mxu0 %v1044
  %1248 = vmatpush.msra.mxu0 %v1035
  %1249 = vmatpush.msra.mxu0 %v1026
  %1250 = vmatpush.msra.mxu0 %v1017
  %1251 = vmatpush.msra.mxu0 %v1008
  %1252 = vmatpush.msra.mxu0 %v999
  %1253 = vmatpush.msra.mxu0 %v990
  %1254 = vmatpush.msra.mxu0 %v981
  %1255 = vmatpush.msra.mxu0 %v972
  %1256 = vmatpush.msra.mxu0 %v963
  %1257 = vmatpush.msra.mxu0 %v954
  %1258 = vmatpush.msra.mxu0 %v945
  %1259 = vmatpush.msra.mxu0 %v936
  %1260 = vmatpush.msra.mxu0 %v927
  %1261 = vmatmul.f32.gmra.mxu0 %v770
  %v1262 = vpop.f32.mrf.mxu0
  %v1263 = vadd.f32 %v1228, %v1262
  %1264 = vmatmul.f32.gmra.mxu0 %v772
  %v1265 = vpop.f32.mrf.mxu0
  %v1266 = vadd.f32 %v1231, %v1265
  %1267 = vmatmul.f32.gmra.mxu0 %v774
  %v1268 = vpop.f32.mrf.mxu0
  %v1269 = vadd.f32 %v1234, %v1268
  %1270 = vmatmul.f32.gmra.mxu0 %v776
  %v1271 = vpop.f32.mrf.mxu0
  %v1272 = vadd.f32 %v1237, %v1271
  %1273 = vmatmul.f32.gmra.mxu0 %v778
  %v1274 = vpop.f32.mrf.mxu0
  %v1275 = vadd.f32 %v1240, %v1274
  %1276 = vmatmul.f32.gmra.mxu0 %v780
  %v1277 = vpop.f32.mrf.mxu0
  %v1278 = vadd.f32 %v1243, %v1277
  %1279 = vdwg.mxu0
  %1280 = vmatpush.msra.mxu0 %v919
  %1281 = vmatpush.msra.mxu0 %v910
  %1282 = vmatpush.msra.mxu0 %v901
  %1283 = vmatpush.msra.mxu0 %v892
  %1284 = vmatpush.msra.mxu0 %v883
  %1285 = vmatpush.msra.mxu0 %v874
  %1286 = vmatpush.msra.mxu0 %v865
  %1287 = vmatpush.msra.mxu0 %v856
  %1288 = vmatpush.msra.mxu0 %v847
  %1289 = vmatpush.msra.mxu0 %v838
  %1290 = vmatpush.msra.mxu0 %v829
  %1291 = vmatpush.msra.mxu0 %v820
  %1292 = vmatpush.msra.mxu0 %v811
  %1293 = vmatpush.msra.mxu0 %v802
  %1294 = vmatpush.msra.mxu0 %v793
  %1295 = vmatpush.msra.mxu0 %v784
  %1296 = vmatmul.f32.gmra.mxu0 %v769
  %v1297 = vpop.f32.mrf.mxu0
  %v1298 = vadd.f32 0.0, %v1297
  %1299 = vmatmul.f32.gmra.mxu0 %v771
  %v1300 = vpop.f32.mrf.mxu0
  %v1301 = vadd.f32 0.0, %v1300
  %1302 = vmatmul.f32.gmra.mxu0 %v773
  %v1303 = vpop.f32.mrf.mxu0
  %v1304 = vadd.f32 0.0, %v1303
  %1305 = vmatmul.f32.gmra.mxu0 %v775
  %v1306 = vpop.f32.mrf.mxu0
  %v1307 = vadd.f32 0.0, %v1306
  %1308 = vmatmul.f32.gmra.mxu0 %v777
  %v1309 = vpop.f32.mrf.mxu0
  %v1310 = vadd.f32 0.0, %v1309
  %1311 = vmatmul.f32.gmra.mxu0 %v779
  %v1312 = vpop.f32.mrf.mxu0
  %v1313 = vadd.f32 0.0, %v1312
  %1314 = vdwg.mxu0
  %1315 = vmatpush.msra.mxu0 %v1063
  %1316 = vmatpush.msra.mxu0 %v1054
  %1317 = vmatpush.msra.mxu0 %v1045
  %1318 = vmatpush.msra.mxu0 %v1036
  %1319 = vmatpush.msra.mxu0 %v1027
  %1320 = vmatpush.msra.mxu0 %v1018
  %1321 = vmatpush.msra.mxu0 %v1009
  %1322 = vmatpush.msra.mxu0 %v1000
  %1323 = vmatpush.msra.mxu0 %v991
  %1324 = vmatpush.msra.mxu0 %v982
  %1325 = vmatpush.msra.mxu0 %v973
  %1326 = vmatpush.msra.mxu0 %v964
  %1327 = vmatpush.msra.mxu0 %v955
  %1328 = vmatpush.msra.mxu0 %v946
  %1329 = vmatpush.msra.mxu0 %v937
  %1330 = vmatpush.msra.mxu0 %v928
  %1331 = vmatmul.f32.gmra.mxu0 %v770
  %v1332 = vpop.f32.mrf.mxu0
  %v1333 = vadd.f32 %v1298, %v1332
  %1334 = vmatmul.f32.gmra.mxu0 %v772
  %v1335 = vpop.f32.mrf.mxu0
  %v1336 = vadd.f32 %v1301, %v1335
  %1337 = vmatmul.f32.gmra.mxu0 %v774
  %v1338 = vpop.f32.mrf.mxu0
  %v1339 = vadd.f32 %v1304, %v1338
  %1340 = vmatmul.f32.gmra.mxu0 %v776
  %v1341 = vpop.f32.mrf.mxu0
  %v1342 = vadd.f32 %v1307, %v1341
  %1343 = vmatmul.f32.gmra.mxu0 %v778
  %v1344 = vpop.f32.mrf.mxu0
  %v1345 = vadd.f32 %v1310, %v1344
  %1346 = vmatmul.f32.gmra.mxu0 %v780
  %v1347 = vpop.f32.mrf.mxu0
  %v1348 = vadd.f32 %v1313, %v1347
  %1349 = vdwg.mxu0
  %1350 = vmatpush.msra.mxu0 %v920
  %1351 = vmatpush.msra.mxu0 %v911
  %1352 = vmatpush.msra.mxu0 %v902
  %1353 = vmatpush.msra.mxu0 %v893
  %1354 = vmatpush.msra.mxu0 %v884
  %1355 = vmatpush.msra.mxu0 %v875
  %1356 = vmatpush.msra.mxu0 %v866
  %1357 = vmatpush.msra.mxu0 %v857
  %1358 = vmatpush.msra.mxu0 %v848
  %1359 = vmatpush.msra.mxu0 %v839
  %1360 = vmatpush.msra.mxu0 %v830
  %1361 = vmatpush.msra.mxu0 %v821
  %1362 = vmatpush.msra.mxu0 %v812
  %1363 = vmatpush.msra.mxu0 %v803
  %1364 = vmatpush.msra.mxu0 %v794
  %1365 = vmatpush.msra.mxu0 %v785
  %1366 = vmatmul.f32.gmra.mxu0 %v769
  %v1367 = vpop.f32.mrf.mxu0
  %v1368 = vadd.f32 0.0, %v1367
  %1369 = vmatmul.f32.gmra.mxu0 %v771
  %v1370 = vpop.f32.mrf.mxu0
  %v1371 = vadd.f32 0.0, %v1370
  %1372 = vmatmul.f32.gmra.mxu0 %v773
  %v1373 = vpop.f32.mrf.mxu0
  %v1374 = vadd.f32 0.0, %v1373
  %1375 = vmatmul.f32.gmra.mxu0 %v775
  %v1376 = vpop.f32.mrf.mxu0
  %v1377 = vadd.f32 0.0, %v1376
  %1378 = vmatmul.f32.gmra.mxu0 %v777
  %v1379 = vpop.f32.mrf.mxu0
  %v1380 = vadd.f32 0.0, %v1379
  %1381 = vmatmul.f32.gmra.mxu0 %v779
  %v1382 = vpop.f32.mrf.mxu0
  %v1383 = vadd.f32 0.0, %v1382
  %1384 = vdwg.mxu0
  %1385 = vmatpush.msra.mxu0 %v1064
  %1386 = vmatpush.msra.mxu0 %v1055
  %1387 = vmatpush.msra.mxu0 %v1046
  %1388 = vmatpush.msra.mxu0 %v1037
  %1389 = vmatpush.msra.mxu0 %v1028
  %1390 = vmatpush.msra.mxu0 %v1019
  %1391 = vmatpush.msra.mxu0 %v1010
  %1392 = vmatpush.msra.mxu0 %v1001
  %1393 = vmatpush.msra.mxu0 %v992
  %1394 = vmatpush.msra.mxu0 %v983
  %1395 = vmatpush.msra.mxu0 %v974
  %1396 = vmatpush.msra.mxu0 %v965
  %1397 = vmatpush.msra.mxu0 %v956
  %1398 = vmatpush.msra.mxu0 %v947
  %1399 = vmatpush.msra.mxu0 %v938
  %1400 = vmatpush.msra.mxu0 %v929
  %1401 = vmatmul.f32.gmra.mxu0 %v770
  %v1402 = vpop.f32.mrf.mxu0
  %v1403 = vadd.f32 %v1368, %v1402
  %1404 = vmatmul.f32.gmra.mxu0 %v772
  %v1405 = vpop.f32.mrf.mxu0
  %v1406 = vadd.f32 %v1371, %v1405
  %1407 = vmatmul.f32.gmra.mxu0 %v774
  %v1408 = vpop.f32.mrf.mxu0
  %v1409 = vadd.f32 %v1374, %v1408
  %1410 = vmatmul.f32.gmra.mxu0 %v776
  %v1411 = vpop.f32.mrf.mxu0
  %v1412 = vadd.f32 %v1377, %v1411
  %1413 = vmatmul.f32.gmra.mxu0 %v778
  %v1414 = vpop.f32.mrf.mxu0
  %v1415 = vadd.f32 %v1380, %v1414
  %1416 = vmatmul.f32.gmra.mxu0 %v780
  %v1417 = vpop.f32.mrf.mxu0
  %v1418 = vadd.f32 %v1383, %v1417
  %1419 = vdwg.mxu0
  %1420 = vmatpush.msra.mxu0 %v921
  %1421 = vmatpush.msra.mxu0 %v912
  %1422 = vmatpush.msra.mxu0 %v903
  %1423 = vmatpush.msra.mxu0 %v894
  %1424 = vmatpush.msra.mxu0 %v885
  %1425 = vmatpush.msra.mxu0 %v876
  %1426 = vmatpush.msra.mxu0 %v867
  %1427 = vmatpush.msra.mxu0 %v858
  %1428 = vmatpush.msra.mxu0 %v849
  %1429 = vmatpush.msra.mxu0 %v840
  %1430 = vmatpush.msra.mxu0 %v831
  %1431 = vmatpush.msra.mxu0 %v822
  %1432 = vmatpush.msra.mxu0 %v813
  %1433 = vmatpush.msra.mxu0 %v804
  %1434 = vmatpush.msra.mxu0 %v795
  %1435 = vmatpush.msra.mxu0 %v786
  %1436 = vmatmul.f32.gmra.mxu0 %v769
  %v1437 = vpop.f32.mrf.mxu0
  %v1438 = vadd.f32 0.0, %v1437
  %1439 = vmatmul.f32.gmra.mxu0 %v771
  %v1440 = vpop.f32.mrf.mxu0
  %v1441 = vadd.f32 0.0, %v1440
  %1442 = vmatmul.f32.gmra.mxu0 %v773
  %v1443 = vpop.f32.mrf.mxu0
  %v1444 = vadd.f32 0.0, %v1443
  %1445 = vmatmul.f32.gmra.mxu0 %v775
  %v1446 = vpop.f32.mrf.mxu0
  %v1447 = vadd.f32 0.0, %v1446
  %1448 = vmatmul.f32.gmra.mxu0 %v777
  %v1449 = vpop.f32.mrf.mxu0
  %v1450 = vadd.f32 0.0, %v1449
  %1451 = vmatmul.f32.gmra.mxu0 %v779
  %v1452 = vpop.f32.mrf.mxu0
  %v1453 = vadd.f32 0.0, %v1452
  %1454 = vdwg.mxu0
  %1455 = vmatpush.msra.mxu0 %v1065
  %1456 = vmatpush.msra.mxu0 %v1056
  %1457 = vmatpush.msra.mxu0 %v1047
  %1458 = vmatpush.msra.mxu0 %v1038
  %1459 = vmatpush.msra.mxu0 %v1029
  %1460 = vmatpush.msra.mxu0 %v1020
  %1461 = vmatpush.msra.mxu0 %v1011
  %1462 = vmatpush.msra.mxu0 %v1002
  %1463 = vmatpush.msra.mxu0 %v993
  %1464 = vmatpush.msra.mxu0 %v984
  %1465 = vmatpush.msra.mxu0 %v975
  %1466 = vmatpush.msra.mxu0 %v966
  %1467 = vmatpush.msra.mxu0 %v957
  %1468 = vmatpush.msra.mxu0 %v948
  %1469 = vmatpush.msra.mxu0 %v939
  %1470 = vmatpush.msra.mxu0 %v930
  %1471 = vmatmul.f32.gmra.mxu0 %v770
  %v1472 = vpop.f32.mrf.mxu0
  %v1473 = vadd.f32 %v1438, %v1472
  %1474 = vmatmul.f32.gmra.mxu0 %v772
  %v1475 = vpop.f32.mrf.mxu0
  %v1476 = vadd.f32 %v1441, %v1475
  %1477 = vmatmul.f32.gmra.mxu0 %v774
  %v1478 = vpop.f32.mrf.mxu0
  %v1479 = vadd.f32 %v1444, %v1478
  %1480 = vmatmul.f32.gmra.mxu0 %v776
  %v1481 = vpop.f32.mrf.mxu0
  %v1482 = vadd.f32 %v1447, %v1481
  %1483 = vmatmul.f32.gmra.mxu0 %v778
  %v1484 = vpop.f32.mrf.mxu0
  %v1485 = vadd.f32 %v1450, %v1484
  %1486 = vmatmul.f32.gmra.mxu0 %v780
  %v1487 = vpop.f32.mrf.mxu0
  %v1488 = vadd.f32 %v1453, %v1487
  %1489 = vdwg.mxu0
  %1490 = vmatpush.msra.mxu0 %v922
  %1491 = vmatpush.msra.mxu0 %v913
  %1492 = vmatpush.msra.mxu0 %v904
  %1493 = vmatpush.msra.mxu0 %v895
  %1494 = vmatpush.msra.mxu0 %v886
  %1495 = vmatpush.msra.mxu0 %v877
  %1496 = vmatpush.msra.mxu0 %v868
  %1497 = vmatpush.msra.mxu0 %v859
  %1498 = vmatpush.msra.mxu0 %v850
  %1499 = vmatpush.msra.mxu0 %v841
  %1500 = vmatpush.msra.mxu0 %v832
  %1501 = vmatpush.msra.mxu0 %v823
  %1502 = vmatpush.msra.mxu0 %v814
  %1503 = vmatpush.msra.mxu0 %v805
  %1504 = vmatpush.msra.mxu0 %v796
  %1505 = vmatpush.msra.mxu0 %v787
  %1506 = vmatmul.f32.gmra.mxu0 %v769
  %v1507 = vpop.f32.mrf.mxu0
  %v1508 = vadd.f32 0.0, %v1507
  %1509 = vmatmul.f32.gmra.mxu0 %v771
  %v1510 = vpop.f32.mrf.mxu0
  %v1511 = vadd.f32 0.0, %v1510
  %1512 = vmatmul.f32.gmra.mxu0 %v773
  %v1513 = vpop.f32.mrf.mxu0
  %v1514 = vadd.f32 0.0, %v1513
  %1515 = vmatmul.f32.gmra.mxu0 %v775
  %v1516 = vpop.f32.mrf.mxu0
  %v1517 = vadd.f32 0.0, %v1516
  %1518 = vmatmul.f32.gmra.mxu0 %v777
  %v1519 = vpop.f32.mrf.mxu0
  %v1520 = vadd.f32 0.0, %v1519
  %1521 = vmatmul.f32.gmra.mxu0 %v779
  %v1522 = vpop.f32.mrf.mxu0
  %v1523 = vadd.f32 0.0, %v1522
  %1524 = vdwg.mxu0
  %1525 = vmatpush.msra.mxu0 %v1066
  %1526 = vmatpush.msra.mxu0 %v1057
  %1527 = vmatpush.msra.mxu0 %v1048
  %1528 = vmatpush.msra.mxu0 %v1039
  %1529 = vmatpush.msra.mxu0 %v1030
  %1530 = vmatpush.msra.mxu0 %v1021
  %1531 = vmatpush.msra.mxu0 %v1012
  %1532 = vmatpush.msra.mxu0 %v1003
  %1533 = vmatpush.msra.mxu0 %v994
  %1534 = vmatpush.msra.mxu0 %v985
  %1535 = vmatpush.msra.mxu0 %v976
  %1536 = vmatpush.msra.mxu0 %v967
  %1537 = vmatpush.msra.mxu0 %v958
  %1538 = vmatpush.msra.mxu0 %v949
  %1539 = vmatpush.msra.mxu0 %v940
  %1540 = vmatpush.msra.mxu0 %v931
  %1541 = vmatmul.f32.gmra.mxu0 %v770
  %v1542 = vpop.f32.mrf.mxu0
  %v1543 = vadd.f32 %v1508, %v1542
  %1544 = vmatmul.f32.gmra.mxu0 %v772
  %v1545 = vpop.f32.mrf.mxu0
  %v1546 = vadd.f32 %v1511, %v1545
  %1547 = vmatmul.f32.gmra.mxu0 %v774
  %v1548 = vpop.f32.mrf.mxu0
  %v1549 = vadd.f32 %v1514, %v1548
  %1550 = vmatmul.f32.gmra.mxu0 %v776
  %v1551 = vpop.f32.mrf.mxu0
  %v1552 = vadd.f32 %v1517, %v1551
  %1553 = vmatmul.f32.gmra.mxu0 %v778
  %v1554 = vpop.f32.mrf.mxu0
  %v1555 = vadd.f32 %v1520, %v1554
  %1556 = vmatmul.f32.gmra.mxu0 %v780
  %v1557 = vpop.f32.mrf.mxu0
  %v1558 = vadd.f32 %v1523, %v1557
  %1559 = vdwg.mxu0
  %1560 = vmatpush.msra.mxu0 %v923
  %1561 = vmatpush.msra.mxu0 %v914
  %1562 = vmatpush.msra.mxu0 %v905
  %1563 = vmatpush.msra.mxu0 %v896
  %1564 = vmatpush.msra.mxu0 %v887
  %1565 = vmatpush.msra.mxu0 %v878
  %1566 = vmatpush.msra.mxu0 %v869
  %1567 = vmatpush.msra.mxu0 %v860
  %1568 = vmatpush.msra.mxu0 %v851
  %1569 = vmatpush.msra.mxu0 %v842
  %1570 = vmatpush.msra.mxu0 %v833
  %1571 = vmatpush.msra.mxu0 %v824
  %1572 = vmatpush.msra.mxu0 %v815
  %1573 = vmatpush.msra.mxu0 %v806
  %1574 = vmatpush.msra.mxu0 %v797
  %1575 = vmatpush.msra.mxu0 %v788
  %1576 = vmatmul.f32.gmra.mxu0 %v769
  %v1577 = vpop.f32.mrf.mxu0
  %v1578 = vadd.f32 0.0, %v1577
  %1579 = vmatmul.f32.gmra.mxu0 %v771
  %v1580 = vpop.f32.mrf.mxu0
  %v1581 = vadd.f32 0.0, %v1580
  %1582 = vmatmul.f32.gmra.mxu0 %v773
  %v1583 = vpop.f32.mrf.mxu0
  %v1584 = vadd.f32 0.0, %v1583
  %1585 = vmatmul.f32.gmra.mxu0 %v775
  %v1586 = vpop.f32.mrf.mxu0
  %v1587 = vadd.f32 0.0, %v1586
  %1588 = vmatmul.f32.gmra.mxu0 %v777
  %v1589 = vpop.f32.mrf.mxu0
  %v1590 = vadd.f32 0.0, %v1589
  %1591 = vmatmul.f32.gmra.mxu0 %v779
  %v1592 = vpop.f32.mrf.mxu0
  %v1593 = vadd.f32 0.0, %v1592
  %1594 = vdwg.mxu0
  %1595 = vmatpush.msra.mxu0 %v1067
  %1596 = vmatpush.msra.mxu0 %v1058
  %1597 = vmatpush.msra.mxu0 %v1049
  %1598 = vmatpush.msra.mxu0 %v1040
  %1599 = vmatpush.msra.mxu0 %v1031
  %1600 = vmatpush.msra.mxu0 %v1022
  %1601 = vmatpush.msra.mxu0 %v1013
  %1602 = vmatpush.msra.mxu0 %v1004
  %1603 = vmatpush.msra.mxu0 %v995
  %1604 = vmatpush.msra.mxu0 %v986
  %1605 = vmatpush.msra.mxu0 %v977
  %1606 = vmatpush.msra.mxu0 %v968
  %1607 = vmatpush.msra.mxu0 %v959
  %1608 = vmatpush.msra.mxu0 %v950
  %1609 = vmatpush.msra.mxu0 %v941
  %1610 = vmatpush.msra.mxu0 %v932
  %1611 = vmatmul.f32.gmra.mxu0 %v770
  %v1612 = vpop.f32.mrf.mxu0
  %v1613 = vadd.f32 %v1578, %v1612
  %1614 = vmatmul.f32.gmra.mxu0 %v772
  %v1615 = vpop.f32.mrf.mxu0
  %v1616 = vadd.f32 %v1581, %v1615
  %1617 = vmatmul.f32.gmra.mxu0 %v774
  %v1618 = vpop.f32.mrf.mxu0
  %v1619 = vadd.f32 %v1584, %v1618
  %1620 = vmatmul.f32.gmra.mxu0 %v776
  %v1621 = vpop.f32.mrf.mxu0
  %v1622 = vadd.f32 %v1587, %v1621
  %1623 = vmatmul.f32.gmra.mxu0 %v778
  %v1624 = vpop.f32.mrf.mxu0
  %v1625 = vadd.f32 %v1590, %v1624
  %1626 = vmatmul.f32.gmra.mxu0 %v780
  %v1627 = vpop.f32.mrf.mxu0
  %v1628 = vadd.f32 %v1593, %v1627
  %1629 = vdwg.mxu0
  %1630 = vmatpush.msra.mxu0 %v924
  %1631 = vmatpush.msra.mxu0 %v915
  %1632 = vmatpush.msra.mxu0 %v906
  %1633 = vmatpush.msra.mxu0 %v897
  %1634 = vmatpush.msra.mxu0 %v888
  %1635 = vmatpush.msra.mxu0 %v879
  %1636 = vmatpush.msra.mxu0 %v870
  %1637 = vmatpush.msra.mxu0 %v861
  %1638 = vmatpush.msra.mxu0 %v852
  %1639 = vmatpush.msra.mxu0 %v843
  %1640 = vmatpush.msra.mxu0 %v834
  %1641 = vmatpush.msra.mxu0 %v825
  %1642 = vmatpush.msra.mxu0 %v816
  %1643 = vmatpush.msra.mxu0 %v807
  %1644 = vmatpush.msra.mxu0 %v798
  %1645 = vmatpush.msra.mxu0 %v789
  %1646 = vmatmul.f32.gmra.mxu0 %v769
  %v1647 = vpop.f32.mrf.mxu0
  %v1648 = vadd.f32 0.0, %v1647
  %1649 = vmatmul.f32.gmra.mxu0 %v771
  %v1650 = vpop.f32.mrf.mxu0
  %v1651 = vadd.f32 0.0, %v1650
  %1652 = vmatmul.f32.gmra.mxu0 %v773
  %v1653 = vpop.f32.mrf.mxu0
  %v1654 = vadd.f32 0.0, %v1653
  %1655 = vmatmul.f32.gmra.mxu0 %v775
  %v1656 = vpop.f32.mrf.mxu0
  %v1657 = vadd.f32 0.0, %v1656
  %1658 = vmatmul.f32.gmra.mxu0 %v777
  %v1659 = vpop.f32.mrf.mxu0
  %v1660 = vadd.f32 0.0, %v1659
  %1661 = vmatmul.f32.gmra.mxu0 %v779
  %v1662 = vpop.f32.mrf.mxu0
  %v1663 = vadd.f32 0.0, %v1662
  %1664 = vdwg.mxu0
  %1665 = vmatpush.msra.mxu0 %v1068
  %1666 = vmatpush.msra.mxu0 %v1059
  %1667 = vmatpush.msra.mxu0 %v1050
  %1668 = vmatpush.msra.mxu0 %v1041
  %1669 = vmatpush.msra.mxu0 %v1032
  %1670 = vmatpush.msra.mxu0 %v1023
  %1671 = vmatpush.msra.mxu0 %v1014
  %1672 = vmatpush.msra.mxu0 %v1005
  %1673 = vmatpush.msra.mxu0 %v996
  %1674 = vmatpush.msra.mxu0 %v987
  %1675 = vmatpush.msra.mxu0 %v978
  %1676 = vmatpush.msra.mxu0 %v969
  %1677 = vmatpush.msra.mxu0 %v960
  %1678 = vmatpush.msra.mxu0 %v951
  %1679 = vmatpush.msra.mxu0 %v942
  %1680 = vmatpush.msra.mxu0 %v933
  %1681 = vmatmul.f32.gmra.mxu0 %v770
  %v1682 = vpop.f32.mrf.mxu0
  %v1683 = vadd.f32 %v1648, %v1682
  %1684 = vmatmul.f32.gmra.mxu0 %v772
  %v1685 = vpop.f32.mrf.mxu0
  %v1686 = vadd.f32 %v1651, %v1685
  %1687 = vmatmul.f32.gmra.mxu0 %v774
  %v1688 = vpop.f32.mrf.mxu0
  %v1689 = vadd.f32 %v1654, %v1688
  %1690 = vmatmul.f32.gmra.mxu0 %v776
  %v1691 = vpop.f32.mrf.mxu0
  %v1692 = vadd.f32 %v1657, %v1691
  %1693 = vmatmul.f32.gmra.mxu0 %v778
  %v1694 = vpop.f32.mrf.mxu0
  %v1695 = vadd.f32 %v1660, %v1694
  %1696 = vmatmul.f32.gmra.mxu0 %v780
  %v1697 = vpop.f32.mrf.mxu0
  %v1698 = vadd.f32 %v1663, %v1697
  %1699 = vdwg.mxu0
  %1700 = vxpose.xlu0.b32.start [1/16] %v1683, 128
  %1701 = vxpose.xlu0.b32.cont [2/16] %v1686, 128
  %1702 = vxpose.xlu0.b32.cont [3/16] %v1689, 128
  %1703 = vxpose.xlu0.b32.cont [4/16] %v1692, 128
  %1704 = vxpose.xlu0.b32.cont [5/16] %v1695, 128
  %1705 = vxpose.xlu0.b32.cont [6/16] %v1698, 128
  %1706 = vxpose.xlu0.b32.cont [7/16] 0.0, 128
  %1707 = vxpose.xlu0.b32.cont [8/16] 0.0, 128
  %1708 = vxpose.xlu0.b32.cont [9/16] 0.0, 128
  %1709 = vxpose.xlu0.b32.cont [10/16] 0.0, 128
  %1710 = vxpose.xlu0.b32.cont [11/16] 0.0, 128
  %1711 = vxpose.xlu0.b32.cont [12/16] 0.0, 128
  %1712 = vxpose.xlu0.b32.cont [13/16] 0.0, 128
  %1713 = vxpose.xlu0.b32.cont [14/16] 0.0, 128
  %1714 = vxpose.xlu0.b32.cont [15/16] 0.0, 128
  %1715 = vxpose.xlu0.b32.end [16/16] 0.0, 128
  %v1716 = vpop.trf.xlu0
  %v1717 = vpop.trf.xlu0
  %v1718 = vpop.trf.xlu0
  %v1719 = vpop.trf.xlu0
  %v1720 = vpop.trf.xlu0
  %v1721 = vpop.trf.xlu0
  %v1722 = vpop.trf.xlu0
  %v1723 = vpop.trf.xlu0
  %v1724 = vpop.trf.xlu0
  %v1725 = vpop.trf.xlu0
  %v1726 = vpop.trf.xlu0
  %v1727 = vpop.trf.xlu0
  %v1728 = vpop.trf.xlu0
  %v1729 = vpop.trf.xlu0
  %v1730 = vpop.trf.xlu0
  %v1731 = vpop.trf.xlu0
  %1733 = vset.pattern.permute.xlu0 1
  %1734 = vperm.xlu0 %1733, %v1683
  %v1735 = vpop.permute.xlu0 %1734
  %1738 = vset.pattern.permute.xlu0 1
  %1739 = vperm.xlu0 %1738, %v1686
  %v1740 = vpop.permute.xlu0 %1739
  %1743 = vset.pattern.permute.xlu0 1
  %1744 = vperm.xlu0 %1743, %v1689
  %v1745 = vpop.permute.xlu0 %1744
  %1748 = vset.pattern.permute.xlu0 1
  %1749 = vperm.xlu0 %1748, %v1692
  %v1750 = vpop.permute.xlu0 %1749
  %1753 = vset.pattern.permute.xlu0 1
  %1754 = vperm.xlu0 %1753, %v1695
  %v1755 = vpop.permute.xlu0 %1754
  %1758 = vset.pattern.permute.xlu0 1
  %1759 = vperm.xlu0 %1758, %v1698
  %v1760 = vpop.permute.xlu0 %1759
  %v1762 = vperm.slane %v1716, 0
  %v1763 = vadd.f32 %v1735, %v1762
  %v1764 = vadd.f32 %v1740, %v1762
  %v1765 = vadd.f32 %v1745, %v1762
  %v1766 = vadd.f32 %v1750, %v1762
  %v1767 = vadd.f32 %v1755, %v1762
  %v1768 = vadd.f32 %v1760, %v1762
  %vm1769 = vcmp.gt.f32.partialorder %v1763, 0.0
  %vm1770 = vcmp.gt.f32.partialorder %v1764, 0.0
  %vm1771 = vcmp.gt.f32.partialorder %v1765, 0.0
  %vm1772 = vcmp.gt.f32.partialorder %v1766, 0.0
  %vm1773 = vcmp.gt.f32.partialorder %v1767, 0.0
  %vm1774 = vcmp.gt.f32.partialorder %v1768, 0.0
  %v1775 = vmul.f32 %v1763, 0.2
  %v1776 = vmul.f32 %v1764, 0.2
  %v1777 = vmul.f32 %v1765, 0.2
  %v1778 = vmul.f32 %v1766, 0.2
  %v1779 = vmul.f32 %v1767, 0.2
  %v1780 = vmul.f32 %v1768, 0.2
  %v1781 = vsel %vm1769, %v1763, %v1775
  %v1782 = vsel %vm1770, %v1764, %v1776
  %v1783 = vsel %vm1771, %v1765, %v1777
  %v1784 = vsel %vm1772, %v1766, %v1778
  %v1785 = vsel %vm1773, %v1767, %v1779
  %v1786 = vsel %vm1774, %v1768, %v1780
  %v1787 = vadd.f32 %v1781, %v47
  %v1788 = vadd.f32 %v1782, %v48
  %v1789 = vadd.f32 %v1783, %v49
  %v1790 = vadd.f32 %v1784, %v50
  %v1791 = vadd.f32 %v1785, %v51
  %v1792 = vadd.f32 %v1786, %v52
  %v1793 = vsel %vm229, %v1787, -inf
  %1794 = vmax.xlane.f32.xlu0 %v1793
  %v1795 = vpop.xlane.xlu0 %1794
  %v1796 = vsel %vm229, %v1788, -inf
  %1797 = vmax.xlane.f32.xlu0 %v1796
  %v1798 = vpop.xlane.xlu0 %1797
  %v1799 = vsel %vm229, %v1789, -inf
  %1800 = vmax.xlane.f32.xlu0 %v1799
  %v1801 = vpop.xlane.xlu0 %1800
  %v1802 = vsel %vm229, %v1790, -inf
  %1803 = vmax.xlane.f32.xlu0 %v1802
  %v1804 = vpop.xlane.xlu0 %1803
  %v1805 = vsel %vm229, %v1791, -inf
  %1806 = vmax.xlane.f32.xlu0 %v1805
  %v1807 = vpop.xlane.xlu0 %1806
  %v1808 = vsel %vm245, %v1792, -inf
  %1809 = vmax.xlane.f32.xlu0 %v1808
  %v1810 = vpop.xlane.xlu0 %1809
  %v1811 = vsub.f32 %v1787, %v1795
  %v1812 = vsub.f32 %v1788, %v1798
  %v1813 = vsub.f32 %v1789, %v1801
  %v1814 = vsub.f32 %v1790, %v1804
  %v1815 = vsub.f32 %v1791, %v1807
  %v1816 = vsub.f32 %v1792, %v1810
  %v1817 = vmul.f32 %v1811, 1.442695
  %v1818 = vpow.pop %v1817
  %v1819 = vmul.f32 %v1812, 1.442695
  %v1820 = vpow.pop %v1819
  %v1821 = vmul.f32 %v1813, 1.442695
  %v1822 = vpow.pop %v1821
  %v1823 = vmul.f32 %v1814, 1.442695
  %v1824 = vpow.pop %v1823
  %v1825 = vmul.f32 %v1815, 1.442695
  %v1826 = vpow.pop %v1825
  %v1827 = vmul.f32 %v1816, 1.442695
  %v1828 = vpow.pop %v1827
  %v1829 = vsel %vm229, %v1818, 0.0
  %1830 = vadd.xlane.f32.xlu0 %v1829
  %v1831 = vpop.xlane.xlu0 %1830
  %v1832 = vsel %vm229, %v1820, 0.0
  %1833 = vadd.xlane.f32.xlu0 %v1832
  %v1834 = vpop.xlane.xlu0 %1833
  %v1835 = vsel %vm229, %v1822, 0.0
  %1836 = vadd.xlane.f32.xlu0 %v1835
  %v1837 = vpop.xlane.xlu0 %1836
  %v1838 = vsel %vm229, %v1824, 0.0
  %1839 = vadd.xlane.f32.xlu0 %v1838
  %v1840 = vpop.xlane.xlu0 %1839
  %v1841 = vsel %vm229, %v1826, 0.0
  %1842 = vadd.xlane.f32.xlu0 %v1841
  %v1843 = vpop.xlane.xlu0 %1842
  %v1844 = vsel %vm245, %v1828, 0.0
  %1845 = vadd.xlane.f32.xlu0 %v1844
  %v1846 = vpop.xlane.xlu0 %1845
  %v1847 = vrcp.pop %v1831
  %v1848 = vrcp.pop %v1834
  %v1849 = vrcp.pop %v1837
  %v1850 = vrcp.pop %v1840
  %v1851 = vrcp.pop %v1843
  %v1852 = vrcp.pop %v1846
  %v1853 = vmul.f32 %v1818, %v1847
  %v1854 = vmul.f32 %v1820, %v1848
  %v1855 = vmul.f32 %v1822, %v1849
  %v1856 = vmul.f32 %v1824, %v1850
  %v1857 = vmul.f32 %v1826, %v1851
  %v1858 = vmul.f32 %v1828, %v1852
  %v1860 = vperm.slane %v1069, 0
  %v1861 = vperm.slane %v1069, 1
  %v1862 = vperm.slane %v1069, 2
  %v1863 = vperm.slane %v1069, 3
  %v1864 = vperm.slane %v1069, 4
  %v1865 = vperm.slane %v1069, 5
  %v1866 = vperm.slane %v1069, 6
  %v1867 = vperm.slane %v1069, 7
  %v1877 = vsel %vm229, %v1853, 0
  %v1880 = vsel %vm229, %v1854, 0
  %v1883 = vsel %vm229, %v1855, 0
  %v1886 = vsel %vm229, %v1856, 0
  %v1889 = vsel %vm229, %v1857, 0
  %v1892 = vsel %vm229, %v1858, 0
  %v1895 = vsel %vm318, %v1138, 0
  %v1898 = vsel %vm318, %v1208, 0
  %v1901 = vsel %vm318, %v1278, 0
  %v1904 = vsel %vm318, %v1348, 0
  %v1907 = vsel %vm318, %v1418, 0
  %v1910 = vsel %vm318, %v1488, 0
  %v1913 = vsel %vm318, %v1558, 0
  %v1916 = vsel %vm318, %v1628, 0
  %1918 = vmatpush.msra.mxu0 0.0
  %1919 = vmatpush.msra.mxu0 0.0
  %1920 = vmatpush.msra.mxu0 0.0
  %1921 = vmatpush.msra.mxu0 0.0
  %1922 = vmatpush.msra.mxu0 0.0
  %1923 = vmatpush.msra.mxu0 0.0
  %1924 = vmatpush.msra.mxu0 0.0
  %1925 = vmatpush.msra.mxu0 0.0
  %1926 = vmatpush.msra.mxu0 0.0
  %1927 = vmatpush.msra.mxu0 0.0
  %1928 = vmatpush.msra.mxu0 %v1895
  %1929 = vmatpush.msra.mxu0 %v1135
  %1930 = vmatpush.msra.mxu0 %v1132
  %1931 = vmatpush.msra.mxu0 %v1129
  %1932 = vmatpush.msra.mxu0 %v1126
  %1933 = vmatpush.msra.mxu0 %v1123
  %1934 = vmatmul.f32.gmra.mxu0 %v1877
  %v1935 = vpop.f32.mrf.mxu0
  %v1936 = vadd.f32 %v1860, %v1935
  %1937 = vmatmul.f32.gmra.mxu0 %v1880
  %v1938 = vpop.f32.mrf.mxu0
  %v1939 = vadd.f32 %v1860, %v1938
  %1940 = vmatmul.f32.gmra.mxu0 %v1883
  %v1941 = vpop.f32.mrf.mxu0
  %v1942 = vadd.f32 %v1860, %v1941
  %1943 = vmatmul.f32.gmra.mxu0 %v1886
  %v1944 = vpop.f32.mrf.mxu0
  %v1945 = vadd.f32 %v1860, %v1944
  %1946 = vmatmul.f32.gmra.mxu0 %v1889
  %v1947 = vpop.f32.mrf.mxu0
  %v1948 = vadd.f32 %v1860, %v1947
  %1949 = vmatmul.f32.gmra.mxu0 %v1892
  %v1950 = vpop.f32.mrf.mxu0
  %v1951 = vadd.f32 %v1860, %v1950
  %1952 = vdwg.mxu0
  %1953 = vmatpush.msra.mxu0 0.0
  %1954 = vmatpush.msra.mxu0 0.0
  %1955 = vmatpush.msra.mxu0 0.0
  %1956 = vmatpush.msra.mxu0 0.0
  %1957 = vmatpush.msra.mxu0 0.0
  %1958 = vmatpush.msra.mxu0 0.0
  %1959 = vmatpush.msra.mxu0 0.0
  %1960 = vmatpush.msra.mxu0 0.0
  %1961 = vmatpush.msra.mxu0 0.0
  %1962 = vmatpush.msra.mxu0 0.0
  %1963 = vmatpush.msra.mxu0 %v1898
  %1964 = vmatpush.msra.mxu0 %v1205
  %1965 = vmatpush.msra.mxu0 %v1202
  %1966 = vmatpush.msra.mxu0 %v1199
  %1967 = vmatpush.msra.mxu0 %v1196
  %1968 = vmatpush.msra.mxu0 %v1193
  %1969 = vmatmul.f32.gmra.mxu0 %v1877
  %v1970 = vpop.f32.mrf.mxu0
  %v1971 = vadd.f32 %v1861, %v1970
  %1972 = vmatmul.f32.gmra.mxu0 %v1880
  %v1973 = vpop.f32.mrf.mxu0
  %v1974 = vadd.f32 %v1861, %v1973
  %1975 = vmatmul.f32.gmra.mxu0 %v1883
  %v1976 = vpop.f32.mrf.mxu0
  %v1977 = vadd.f32 %v1861, %v1976
  %1978 = vmatmul.f32.gmra.mxu0 %v1886
  %v1979 = vpop.f32.mrf.mxu0
  %v1980 = vadd.f32 %v1861, %v1979
  %1981 = vmatmul.f32.gmra.mxu0 %v1889
  %v1982 = vpop.f32.mrf.mxu0
  %v1983 = vadd.f32 %v1861, %v1982
  %1984 = vmatmul.f32.gmra.mxu0 %v1892
  %v1985 = vpop.f32.mrf.mxu0
  %v1986 = vadd.f32 %v1861, %v1985
  %1987 = vdwg.mxu0
  %1988 = vmatpush.msra.mxu0 0.0
  %1989 = vmatpush.msra.mxu0 0.0
  %1990 = vmatpush.msra.mxu0 0.0
  %1991 = vmatpush.msra.mxu0 0.0
  %1992 = vmatpush.msra.mxu0 0.0
  %1993 = vmatpush.msra.mxu0 0.0
  %1994 = vmatpush.msra.mxu0 0.0
  %1995 = vmatpush.msra.mxu0 0.0
  %1996 = vmatpush.msra.mxu0 0.0
  %1997 = vmatpush.msra.mxu0 0.0
  %1998 = vmatpush.msra.mxu0 %v1901
  %1999 = vmatpush.msra.mxu0 %v1275
  %2000 = vmatpush.msra.mxu0 %v1272
  %2001 = vmatpush.msra.mxu0 %v1269
  %2002 = vmatpush.msra.mxu0 %v1266
  %2003 = vmatpush.msra.mxu0 %v1263
  %2004 = vmatmul.f32.gmra.mxu0 %v1877
  %v2005 = vpop.f32.mrf.mxu0
  %v2006 = vadd.f32 %v1862, %v2005
  %2007 = vmatmul.f32.gmra.mxu0 %v1880
  %v2008 = vpop.f32.mrf.mxu0
  %v2009 = vadd.f32 %v1862, %v2008
  %2010 = vmatmul.f32.gmra.mxu0 %v1883
  %v2011 = vpop.f32.mrf.mxu0
  %v2012 = vadd.f32 %v1862, %v2011
  %2013 = vmatmul.f32.gmra.mxu0 %v1886
  %v2014 = vpop.f32.mrf.mxu0
  %v2015 = vadd.f32 %v1862, %v2014
  %2016 = vmatmul.f32.gmra.mxu0 %v1889
  %v2017 = vpop.f32.mrf.mxu0
  %v2018 = vadd.f32 %v1862, %v2017
  %2019 = vmatmul.f32.gmra.mxu0 %v1892
  %v2020 = vpop.f32.mrf.mxu0
  %v2021 = vadd.f32 %v1862, %v2020
  %2022 = vdwg.mxu0
  %2023 = vmatpush.msra.mxu0 0.0
  %2024 = vmatpush.msra.mxu0 0.0
  %2025 = vmatpush.msra.mxu0 0.0
  %2026 = vmatpush.msra.mxu0 0.0
  %2027 = vmatpush.msra.mxu0 0.0
  %2028 = vmatpush.msra.mxu0 0.0
  %2029 = vmatpush.msra.mxu0 0.0
  %2030 = vmatpush.msra.mxu0 0.0
  %2031 = vmatpush.msra.mxu0 0.0
  %2032 = vmatpush.msra.mxu0 0.0
  %2033 = vmatpush.msra.mxu0 %v1904
  %2034 = vmatpush.msra.mxu0 %v1345
  %2035 = vmatpush.msra.mxu0 %v1342
  %2036 = vmatpush.msra.mxu0 %v1339
  %2037 = vmatpush.msra.mxu0 %v1336
  %2038 = vmatpush.msra.mxu0 %v1333
  %2039 = vmatmul.f32.gmra.mxu0 %v1877
  %v2040 = vpop.f32.mrf.mxu0
  %v2041 = vadd.f32 %v1863, %v2040
  %2042 = vmatmul.f32.gmra.mxu0 %v1880
  %v2043 = vpop.f32.mrf.mxu0
  %v2044 = vadd.f32 %v1863, %v2043
  %2045 = vmatmul.f32.gmra.mxu0 %v1883
  %v2046 = vpop.f32.mrf.mxu0
  %v2047 = vadd.f32 %v1863, %v2046
  %2048 = vmatmul.f32.gmra.mxu0 %v1886
  %v2049 = vpop.f32.mrf.mxu0
  %v2050 = vadd.f32 %v1863, %v2049
  %2051 = vmatmul.f32.gmra.mxu0 %v1889
  %v2052 = vpop.f32.mrf.mxu0
  %v2053 = vadd.f32 %v1863, %v2052
  %2054 = vmatmul.f32.gmra.mxu0 %v1892
  %v2055 = vpop.f32.mrf.mxu0
  %v2056 = vadd.f32 %v1863, %v2055
  %2057 = vdwg.mxu0
  %2058 = vmatpush.msra.mxu0 0.0
  %2059 = vmatpush.msra.mxu0 0.0
  %2060 = vmatpush.msra.mxu0 0.0
  %2061 = vmatpush.msra.mxu0 0.0
  %2062 = vmatpush.msra.mxu0 0.0
  %2063 = vmatpush.msra.mxu0 0.0
  %2064 = vmatpush.msra.mxu0 0.0
  %2065 = vmatpush.msra.mxu0 0.0
  %2066 = vmatpush.msra.mxu0 0.0
  %2067 = vmatpush.msra.mxu0 0.0
  %2068 = vmatpush.msra.mxu0 %v1907
  %2069 = vmatpush.msra.mxu0 %v1415
  %2070 = vmatpush.msra.mxu0 %v1412
  %2071 = vmatpush.msra.mxu0 %v1409
  %2072 = vmatpush.msra.mxu0 %v1406
  %2073 = vmatpush.msra.mxu0 %v1403
  %2074 = vmatmul.f32.gmra.mxu0 %v1877
  %v2075 = vpop.f32.mrf.mxu0
  %v2076 = vadd.f32 %v1864, %v2075
  %2077 = vmatmul.f32.gmra.mxu0 %v1880
  %v2078 = vpop.f32.mrf.mxu0
  %v2079 = vadd.f32 %v1864, %v2078
  %2080 = vmatmul.f32.gmra.mxu0 %v1883
  %v2081 = vpop.f32.mrf.mxu0
  %v2082 = vadd.f32 %v1864, %v2081
  %2083 = vmatmul.f32.gmra.mxu0 %v1886
  %v2084 = vpop.f32.mrf.mxu0
  %v2085 = vadd.f32 %v1864, %v2084
  %2086 = vmatmul.f32.gmra.mxu0 %v1889
  %v2087 = vpop.f32.mrf.mxu0
  %v2088 = vadd.f32 %v1864, %v2087
  %2089 = vmatmul.f32.gmra.mxu0 %v1892
  %v2090 = vpop.f32.mrf.mxu0
  %v2091 = vadd.f32 %v1864, %v2090
  %2092 = vdwg.mxu0
  %2093 = vmatpush.msra.mxu0 0.0
  %2094 = vmatpush.msra.mxu0 0.0
  %2095 = vmatpush.msra.mxu0 0.0
  %2096 = vmatpush.msra.mxu0 0.0
  %2097 = vmatpush.msra.mxu0 0.0
  %2098 = vmatpush.msra.mxu0 0.0
  %2099 = vmatpush.msra.mxu0 0.0
  %2100 = vmatpush.msra.mxu0 0.0
  %2101 = vmatpush.msra.mxu0 0.0
  %2102 = vmatpush.msra.mxu0 0.0
  %2103 = vmatpush.msra.mxu0 %v1910
  %2104 = vmatpush.msra.mxu0 %v1485
  %2105 = vmatpush.msra.mxu0 %v1482
  %2106 = vmatpush.msra.mxu0 %v1479
  %2107 = vmatpush.msra.mxu0 %v1476
  %2108 = vmatpush.msra.mxu0 %v1473
  %2109 = vmatmul.f32.gmra.mxu0 %v1877
  %v2110 = vpop.f32.mrf.mxu0
  %v2111 = vadd.f32 %v1865, %v2110
  %2112 = vmatmul.f32.gmra.mxu0 %v1880
  %v2113 = vpop.f32.mrf.mxu0
  %v2114 = vadd.f32 %v1865, %v2113
  %2115 = vmatmul.f32.gmra.mxu0 %v1883
  %v2116 = vpop.f32.mrf.mxu0
  %v2117 = vadd.f32 %v1865, %v2116
  %2118 = vmatmul.f32.gmra.mxu0 %v1886
  %v2119 = vpop.f32.mrf.mxu0
  %v2120 = vadd.f32 %v1865, %v2119
  %2121 = vmatmul.f32.gmra.mxu0 %v1889
  %v2122 = vpop.f32.mrf.mxu0
  %v2123 = vadd.f32 %v1865, %v2122
  %2124 = vmatmul.f32.gmra.mxu0 %v1892
  %v2125 = vpop.f32.mrf.mxu0
  %v2126 = vadd.f32 %v1865, %v2125
  %2127 = vdwg.mxu0
  %2128 = vmatpush.msra.mxu0 0.0
  %2129 = vmatpush.msra.mxu0 0.0
  %2130 = vmatpush.msra.mxu0 0.0
  %2131 = vmatpush.msra.mxu0 0.0
  %2132 = vmatpush.msra.mxu0 0.0
  %2133 = vmatpush.msra.mxu0 0.0
  %2134 = vmatpush.msra.mxu0 0.0
  %2135 = vmatpush.msra.mxu0 0.0
  %2136 = vmatpush.msra.mxu0 0.0
  %2137 = vmatpush.msra.mxu0 0.0
  %2138 = vmatpush.msra.mxu0 %v1913
  %2139 = vmatpush.msra.mxu0 %v1555
  %2140 = vmatpush.msra.mxu0 %v1552
  %2141 = vmatpush.msra.mxu0 %v1549
  %2142 = vmatpush.msra.mxu0 %v1546
  %2143 = vmatpush.msra.mxu0 %v1543
  %2144 = vmatmul.f32.gmra.mxu0 %v1877
  %v2145 = vpop.f32.mrf.mxu0
  %v2146 = vadd.f32 %v1866, %v2145
  %2147 = vmatmul.f32.gmra.mxu0 %v1880
  %v2148 = vpop.f32.mrf.mxu0
  %v2149 = vadd.f32 %v1866, %v2148
  %2150 = vmatmul.f32.gmra.mxu0 %v1883
  %v2151 = vpop.f32.mrf.mxu0
  %v2152 = vadd.f32 %v1866, %v2151
  %2153 = vmatmul.f32.gmra.mxu0 %v1886
  %v2154 = vpop.f32.mrf.mxu0
  %v2155 = vadd.f32 %v1866, %v2154
  %2156 = vmatmul.f32.gmra.mxu0 %v1889
  %v2157 = vpop.f32.mrf.mxu0
  %v2158 = vadd.f32 %v1866, %v2157
  %2159 = vmatmul.f32.gmra.mxu0 %v1892
  %v2160 = vpop.f32.mrf.mxu0
  %v2161 = vadd.f32 %v1866, %v2160
  %2162 = vdwg.mxu0
  %2163 = vmatpush.msra.mxu0 0.0
  %2164 = vmatpush.msra.mxu0 0.0
  %2165 = vmatpush.msra.mxu0 0.0
  %2166 = vmatpush.msra.mxu0 0.0
  %2167 = vmatpush.msra.mxu0 0.0
  %2168 = vmatpush.msra.mxu0 0.0
  %2169 = vmatpush.msra.mxu0 0.0
  %2170 = vmatpush.msra.mxu0 0.0
  %2171 = vmatpush.msra.mxu0 0.0
  %2172 = vmatpush.msra.mxu0 0.0
  %2173 = vmatpush.msra.mxu0 %v1916
  %2174 = vmatpush.msra.mxu0 %v1625
  %2175 = vmatpush.msra.mxu0 %v1622
  %2176 = vmatpush.msra.mxu0 %v1619
  %2177 = vmatpush.msra.mxu0 %v1616
  %2178 = vmatpush.msra.mxu0 %v1613
  %2179 = vmatmul.f32.gmra.mxu0 %v1877
  %v2180 = vpop.f32.mrf.mxu0
  %v2181 = vadd.f32 %v1867, %v2180
  %2182 = vmatmul.f32.gmra.mxu0 %v1880
  %v2183 = vpop.f32.mrf.mxu0
  %v2184 = vadd.f32 %v1867, %v2183
  %2185 = vmatmul.f32.gmra.mxu0 %v1883
  %v2186 = vpop.f32.mrf.mxu0
  %v2187 = vadd.f32 %v1867, %v2186
  %2188 = vmatmul.f32.gmra.mxu0 %v1886
  %v2189 = vpop.f32.mrf.mxu0
  %v2190 = vadd.f32 %v1867, %v2189
  %2191 = vmatmul.f32.gmra.mxu0 %v1889
  %v2192 = vpop.f32.mrf.mxu0
  %v2193 = vadd.f32 %v1867, %v2192
  %2194 = vmatmul.f32.gmra.mxu0 %v1892
  %v2195 = vpop.f32.mrf.mxu0
  %v2196 = vadd.f32 %v1867, %v2195
  %2197 = vdwg.mxu0
  %v2198 = vmax.f32 %v1936, 0.0
  %v2199 = vmax.f32 %v1971, 0.0
  %v2200 = vmax.f32 %v2006, 0.0
  %v2201 = vmax.f32 %v2041, 0.0
  %v2202 = vmax.f32 %v2076, 0.0
  %v2203 = vmax.f32 %v2111, 0.0
  %v2204 = vmax.f32 %v2146, 0.0
  %v2205 = vmax.f32 %v2181, 0.0
  %v2206 = vmax.f32 %v1939, 0.0
  %v2207 = vmax.f32 %v1974, 0.0
  %v2208 = vmax.f32 %v2009, 0.0
  %v2209 = vmax.f32 %v2044, 0.0
  %v2210 = vmax.f32 %v2079, 0.0
  %v2211 = vmax.f32 %v2114, 0.0
  %v2212 = vmax.f32 %v2149, 0.0
  %v2213 = vmax.f32 %v2184, 0.0
  %v2214 = vmax.f32 %v1942, 0.0
  %v2215 = vmax.f32 %v1977, 0.0
  %v2216 = vmax.f32 %v2012, 0.0
  %v2217 = vmax.f32 %v2047, 0.0
  %v2218 = vmax.f32 %v2082, 0.0
  %v2219 = vmax.f32 %v2117, 0.0
  %v2220 = vmax.f32 %v2152, 0.0
  %v2221 = vmax.f32 %v2187, 0.0
  %v2222 = vmax.f32 %v1945, 0.0
  %v2223 = vmax.f32 %v1980, 0.0
  %v2224 = vmax.f32 %v2015, 0.0
  %v2225 = vmax.f32 %v2050, 0.0
  %v2226 = vmax.f32 %v2085, 0.0
  %v2227 = vmax.f32 %v2120, 0.0
  %v2228 = vmax.f32 %v2155, 0.0
  %v2229 = vmax.f32 %v2190, 0.0
  %v2230 = vmax.f32 %v1948, 0.0
  %v2231 = vmax.f32 %v1983, 0.0
  %v2232 = vmax.f32 %v2018, 0.0
  %v2233 = vmax.f32 %v2053, 0.0
  %v2234 = vmax.f32 %v2088, 0.0
  %v2235 = vmax.f32 %v2123, 0.0
  %v2236 = vmax.f32 %v2158, 0.0
  %v2237 = vmax.f32 %v2193, 0.0
  %v2238 = vmax.f32 %v1951, 0.0
  %v2239 = vmax.f32 %v1986, 0.0
  %v2240 = vmax.f32 %v2021, 0.0
  %v2241 = vmax.f32 %v2056, 0.0
  %v2242 = vmax.f32 %v2091, 0.0
  %v2243 = vmax.f32 %v2126, 0.0
  %v2244 = vmax.f32 %v2161, 0.0
  %v2245 = vmax.f32 %v2196, 0.0
  %v2246 = vld [vmem:[%s8] sm:$0xff]
  %v2247 = vld [vmem:[%s8 + $0x8] sm:$0xff]
  %v2248 = vld [vmem:[%s8 + $0x10] sm:$0xff]
  %v2249 = vld [vmem:[%s8 + $0x18] sm:$0xff]
  %v2250 = vld [vmem:[%s8 + $0x20] sm:$0xff]
  %v2251 = vld [vmem:[%s8 + $0x28] sm:$0xff]
  %v2252 = vld [vmem:[%s8 + $0x30] sm:$0xff]
  %v2253 = vld [vmem:[%s8 + $0x38] sm:$0xff]
  %v2254 = vld [vmem:[%s8 + $0x40] sm:$0xff]
  %v2255 = vld [vmem:[%s8 + $0x48] sm:$0xff]
  %v2256 = vld [vmem:[%s8 + $0x50] sm:$0xff]
  %v2257 = vld [vmem:[%s8 + $0x58] sm:$0xff]
  %v2258 = vld [vmem:[%s8 + $0x60] sm:$0xff]
  %v2259 = vld [vmem:[%s8 + $0x68] sm:$0xff]
  %v2260 = vld [vmem:[%s8 + $0x70] sm:$0xff]
  %v2261 = vld [vmem:[%s8 + $0x78] sm:$0xff]
  %v2262 = vld [vmem:[%s8 + $0x80] sm:$0xff]
  %v2263 = vld [vmem:[%s8 + $0x88] sm:$0xff]
  %v2264 = vld [vmem:[%s8 + $0x90] sm:$0xff]
  %v2265 = vld [vmem:[%s8 + $0x98] sm:$0xff]
  %v2266 = vld [vmem:[%s8 + $0xa0] sm:$0xff]
  %v2267 = vld [vmem:[%s8 + $0xa8] sm:$0xff]
  %v2268 = vld [vmem:[%s8 + $0xb0] sm:$0xff]
  %v2269 = vld [vmem:[%s8 + $0xb8] sm:$0xff]
  %v2270 = vld [vmem:[%s8 + $0xc0] sm:$0xff]
  %v2271 = vld [vmem:[%s8 + $0xc8] sm:$0xff]
  %v2272 = vld [vmem:[%s8 + $0xd0] sm:$0xff]
  %v2273 = vld [vmem:[%s8 + $0xd8] sm:$0xff]
  %v2274 = vld [vmem:[%s8 + $0xe0] sm:$0xff]
  %v2275 = vld [vmem:[%s8 + $0xe8] sm:$0xff]
  %v2276 = vld [vmem:[%s8 + $0xf0] sm:$0xff]
  %v2277 = vld [vmem:[%s8 + $0xf8] sm:$0xff]
  %v2278 = vld [vmem:[%s8 + $0x100] sm:$0xff]
  %v2279 = vld [vmem:[%s8 + $0x108] sm:$0xff]
  %v2280 = vld [vmem:[%s8 + $0x110] sm:$0xff]
  %v2281 = vld [vmem:[%s8 + $0x118] sm:$0xff]
  %v2282 = vld [vmem:[%s8 + $0x120] sm:$0xff]
  %v2283 = vld [vmem:[%s8 + $0x128] sm:$0xff]
  %v2284 = vld [vmem:[%s8 + $0x130] sm:$0xff]
  %v2285 = vld [vmem:[%s8 + $0x138] sm:$0xff]
  %v2286 = vld [vmem:[%s8 + $0x140] sm:$0xff]
  %v2287 = vld [vmem:[%s8 + $0x148] sm:$0xff]
  %v2288 = vld [vmem:[%s8 + $0x150] sm:$0xff]
  %v2289 = vld [vmem:[%s8 + $0x158] sm:$0xff]
  %v2290 = vld [vmem:[%s8 + $0x160] sm:$0xff]
  %v2291 = vld [vmem:[%s8 + $0x168] sm:$0xff]
  %v2292 = vld [vmem:[%s8 + $0x170] sm:$0xff]
  %v2293 = vld [vmem:[%s8 + $0x178] sm:$0xff]
  %v2294 = vld [vmem:[%s8 + $0x180] sm:$0xff]
  %v2295 = vld [vmem:[%s8 + $0x188] sm:$0xff]
  %v2296 = vld [vmem:[%s8 + $0x190] sm:$0xff]
  %v2297 = vld [vmem:[%s8 + $0x198] sm:$0xff]
  %v2298 = vld [vmem:[%s8 + $0x1a0] sm:$0xff]
  %v2299 = vld [vmem:[%s8 + $0x1a8] sm:$0xff]
  %v2300 = vld [vmem:[%s8 + $0x1b0] sm:$0xff]
  %v2301 = vld [vmem:[%s8 + $0x1b8] sm:$0xff]
  %v2302 = vld [vmem:[%s8 + $0x1c0] sm:$0xff]
  %v2303 = vld [vmem:[%s8 + $0x1c8] sm:$0xff]
  %v2304 = vld [vmem:[%s8 + $0x1d0] sm:$0xff]
  %v2305 = vld [vmem:[%s8 + $0x1d8] sm:$0xff]
  %v2306 = vld [vmem:[%s8 + $0x1e0] sm:$0xff]
  %v2307 = vld [vmem:[%s8 + $0x1e8] sm:$0xff]
  %v2308 = vld [vmem:[%s8 + $0x1f0] sm:$0xff]
  %v2309 = vld [vmem:[%s8 + $0x1f8] sm:$0xff]
  %v2310 = vld [vmem:[%s8 + $0x200] sm:$0xff]
  %v2311 = vld [vmem:[%s8 + $0x208] sm:$0xff]
  %v2312 = vld [vmem:[%s8 + $0x210] sm:$0xff]
  %v2313 = vld [vmem:[%s8 + $0x218] sm:$0xff]
  %v2314 = vld [vmem:[%s8 + $0x220] sm:$0xff]
  %v2315 = vld [vmem:[%s8 + $0x228] sm:$0xff]
  %v2316 = vld [vmem:[%s8 + $0x230] sm:$0xff]
  %v2317 = vld [vmem:[%s8 + $0x238] sm:$0xff]
  %v2318 = vld [vmem:[%s8 + $0x240] sm:$0xff]
  %v2319 = vld [vmem:[%s8 + $0x248] sm:$0xff]
  %v2320 = vld [vmem:[%s8 + $0x250] sm:$0xff]
  %v2321 = vld [vmem:[%s8 + $0x258] sm:$0xff]
  %v2322 = vld [vmem:[%s8 + $0x260] sm:$0xff]
  %v2323 = vld [vmem:[%s8 + $0x268] sm:$0xff]
  %v2324 = vld [vmem:[%s8 + $0x270] sm:$0xff]
  %v2325 = vld [vmem:[%s8 + $0x278] sm:$0xff]
  %v2326 = vld [vmem:[%s8 + $0x280] sm:$0xff]
  %v2327 = vld [vmem:[%s8 + $0x288] sm:$0xff]
  %v2328 = vld [vmem:[%s8 + $0x290] sm:$0xff]
  %v2329 = vld [vmem:[%s8 + $0x298] sm:$0xff]
  %v2330 = vld [vmem:[%s8 + $0x2a0] sm:$0xff]
  %v2331 = vld [vmem:[%s8 + $0x2a8] sm:$0xff]
  %v2332 = vld [vmem:[%s8 + $0x2b0] sm:$0xff]
  %v2333 = vld [vmem:[%s8 + $0x2b8] sm:$0xff]
  %v2334 = vld [vmem:[%s8 + $0x2c0] sm:$0xff]
  %v2335 = vld [vmem:[%s8 + $0x2c8] sm:$0xff]
  %v2336 = vld [vmem:[%s8 + $0x2d0] sm:$0xff]
  %v2337 = vld [vmem:[%s8 + $0x2d8] sm:$0xff]
  %v2338 = vld [vmem:[%s8 + $0x2e0] sm:$0xff]
  %v2339 = vld [vmem:[%s8 + $0x2e8] sm:$0xff]
  %v2340 = vld [vmem:[%s8 + $0x2f0] sm:$0xff]
  %v2341 = vld [vmem:[%s8 + $0x2f8] sm:$0xff]
  %v2342 = vld [vmem:[%s8 + $0x300] sm:$0xff]
  %v2343 = vld [vmem:[%s8 + $0x308] sm:$0xff]
  %v2344 = vld [vmem:[%s8 + $0x310] sm:$0xff]
  %v2345 = vld [vmem:[%s8 + $0x318] sm:$0xff]
  %v2346 = vld [vmem:[%s8 + $0x320] sm:$0xff]
  %v2347 = vld [vmem:[%s8 + $0x328] sm:$0xff]
  %v2348 = vld [vmem:[%s8 + $0x330] sm:$0xff]
  %v2349 = vld [vmem:[%s8 + $0x338] sm:$0xff]
  %v2350 = vld [vmem:[%s8 + $0x340] sm:$0xff]
  %v2351 = vld [vmem:[%s8 + $0x348] sm:$0xff]
  %v2352 = vld [vmem:[%s8 + $0x350] sm:$0xff]
  %v2353 = vld [vmem:[%s8 + $0x358] sm:$0xff]
  %v2354 = vld [vmem:[%s8 + $0x360] sm:$0xff]
  %v2355 = vld [vmem:[%s8 + $0x368] sm:$0xff]
  %v2356 = vld [vmem:[%s8 + $0x370] sm:$0xff]
  %v2357 = vld [vmem:[%s8 + $0x378] sm:$0xff]
  %v2358 = vld [vmem:[%s8 + $0x380] sm:$0xff]
  %v2359 = vld [vmem:[%s8 + $0x388] sm:$0xff]
  %v2360 = vld [vmem:[%s8 + $0x390] sm:$0xff]
  %v2361 = vld [vmem:[%s8 + $0x398] sm:$0xff]
  %v2362 = vld [vmem:[%s8 + $0x3a0] sm:$0xff]
  %v2363 = vld [vmem:[%s8 + $0x3a8] sm:$0xff]
  %v2364 = vld [vmem:[%s8 + $0x3b0] sm:$0xff]
  %v2365 = vld [vmem:[%s8 + $0x3b8] sm:$0xff]
  %v2366 = vld [vmem:[%s8 + $0x3c0] sm:$0xff]
  %v2367 = vld [vmem:[%s8 + $0x3c8] sm:$0xff]
  %v2368 = vld [vmem:[%s8 + $0x3d0] sm:$0xff]
  %v2369 = vld [vmem:[%s8 + $0x3d8] sm:$0xff]
  %v2370 = vld [vmem:[%s8 + $0x3e0] sm:$0xff]
  %v2371 = vld [vmem:[%s8 + $0x3e8] sm:$0xff]
  %v2372 = vld [vmem:[%s8 + $0x3f0] sm:$0xff]
  %v2373 = vld [vmem:[%s8 + $0x3f8] sm:$0xff]
  %v2374 = vld [vmem:[%s8 + $0x400] sm:$0xff]
  %v2375 = vld [vmem:[%s8 + $0x408] sm:$0xff]
  %v2376 = vld [vmem:[%s8 + $0x410] sm:$0xff]
  %v2377 = vld [vmem:[%s8 + $0x418] sm:$0xff]
  %v2378 = vld [vmem:[%s8 + $0x420] sm:$0xff]
  %v2379 = vld [vmem:[%s8 + $0x428] sm:$0xff]
  %v2380 = vld [vmem:[%s8 + $0x430] sm:$0xff]
  %v2381 = vld [vmem:[%s8 + $0x438] sm:$0xff]
  %v2382 = vld [vmem:[%s8 + $0x440] sm:$0xff]
  %v2383 = vld [vmem:[%s8 + $0x448] sm:$0xff]
  %v2384 = vld [vmem:[%s8 + $0x450] sm:$0xff]
  %v2385 = vld [vmem:[%s8 + $0x458] sm:$0xff]
  %v2386 = vld [vmem:[%s8 + $0x460] sm:$0xff]
  %v2387 = vld [vmem:[%s8 + $0x468] sm:$0xff]
  %v2388 = vld [vmem:[%s8 + $0x470] sm:$0xff]
  %v2389 = vld [vmem:[%s8 + $0x478] sm:$0xff]
  %v2390 = vld [vmem:[%s8 + $0x480] sm:$0xff]
  %v2391 = vld [vmem:[%s8 + $0x488] sm:$0xff]
  %v2392 = vld [vmem:[%s8 + $0x490] sm:$0xff]
  %v2393 = vld [vmem:[%s8 + $0x498] sm:$0xff]
  %v2394 = vld [vmem:[%s8 + $0x4a0] sm:$0xff]
  %v2395 = vld [vmem:[%s8 + $0x4a8] sm:$0xff]
  %v2396 = vld [vmem:[%s8 + $0x4b0] sm:$0xff]
  %v2397 = vld [vmem:[%s8 + $0x4b8] sm:$0xff]
  %v2398 = vld [vmem:[%s8 + $0x4c0] sm:$0xff]
  %v2399 = vld [vmem:[%s8 + $0x4c8] sm:$0xff]
  %v2400 = vld [vmem:[%s8 + $0x4d0] sm:$0xff]
  %v2401 = vld [vmem:[%s8 + $0x4d8] sm:$0xff]
  %v2402 = vld [vmem:[%s8 + $0x4e0] sm:$0xff]
  %v2403 = vld [vmem:[%s8 + $0x4e8] sm:$0xff]
  %v2404 = vld [vmem:[%s8 + $0x4f0] sm:$0xff]
  %v2405 = vld [vmem:[%s8 + $0x4f8] sm:$0xff]
  %v2406 = vld [vmem:[%s8 + $0x500] sm:$0xff]
  %v2407 = vld [vmem:[%s8 + $0x508] sm:$0xff]
  %v2408 = vld [vmem:[%s8 + $0x510] sm:$0xff]
  %v2409 = vld [vmem:[%s8 + $0x518] sm:$0xff]
  %v2410 = vld [vmem:[%s8 + $0x520] sm:$0xff]
  %v2411 = vld [vmem:[%s8 + $0x528] sm:$0xff]
  %v2412 = vld [vmem:[%s8 + $0x530] sm:$0xff]
  %v2413 = vld [vmem:[%s8 + $0x538] sm:$0xff]
  %v2414 = vld [vmem:[%s8 + $0x540] sm:$0xff]
  %v2415 = vld [vmem:[%s8 + $0x548] sm:$0xff]
  %v2416 = vld [vmem:[%s8 + $0x550] sm:$0xff]
  %v2417 = vld [vmem:[%s8 + $0x558] sm:$0xff]
  %v2418 = vld [vmem:[%s8 + $0x560] sm:$0xff]
  %v2419 = vld [vmem:[%s8 + $0x568] sm:$0xff]
  %v2420 = vld [vmem:[%s8 + $0x570] sm:$0xff]
  %v2421 = vld [vmem:[%s8 + $0x578] sm:$0xff]
  %v2422 = vld [vmem:[%s8 + $0x580] sm:$0xff]
  %v2423 = vld [vmem:[%s8 + $0x588] sm:$0xff]
  %v2424 = vld [vmem:[%s8 + $0x590] sm:$0xff]
  %v2425 = vld [vmem:[%s8 + $0x598] sm:$0xff]
  %v2426 = vld [vmem:[%s8 + $0x5a0] sm:$0xff]
  %v2427 = vld [vmem:[%s8 + $0x5a8] sm:$0xff]
  %v2428 = vld [vmem:[%s8 + $0x5b0] sm:$0xff]
  %v2429 = vld [vmem:[%s8 + $0x5b8] sm:$0xff]
  %v2430 = vld [vmem:[%s8 + $0x5c0] sm:$0xff]
  %v2431 = vld [vmem:[%s8 + $0x5c8] sm:$0xff]
  %v2432 = vld [vmem:[%s8 + $0x5d0] sm:$0xff]
  %v2433 = vld [vmem:[%s8 + $0x5d8] sm:$0xff]
  %v2434 = vld [vmem:[%s8 + $0x5e0] sm:$0xff]
  %v2435 = vld [vmem:[%s8 + $0x5e8] sm:$0xff]
  %v2436 = vld [vmem:[%s8 + $0x5f0] sm:$0xff]
  %v2437 = vld [vmem:[%s8 + $0x5f8] sm:$0xff]
  %v2438 = vld [vmem:[%s8 + $0x600] sm:$0xff]
  %v2439 = vld [vmem:[%s8 + $0x608] sm:$0xff]
  %v2440 = vld [vmem:[%s8 + $0x610] sm:$0xff]
  %v2441 = vld [vmem:[%s8 + $0x618] sm:$0xff]
  %v2442 = vld [vmem:[%s8 + $0x620] sm:$0xff]
  %v2443 = vld [vmem:[%s8 + $0x628] sm:$0xff]
  %v2444 = vld [vmem:[%s8 + $0x630] sm:$0xff]
  %v2445 = vld [vmem:[%s8 + $0x638] sm:$0xff]
  %v2446 = vld [vmem:[%s8 + $0x640] sm:$0xff]
  %v2447 = vld [vmem:[%s8 + $0x648] sm:$0xff]
  %v2448 = vld [vmem:[%s8 + $0x650] sm:$0xff]
  %v2449 = vld [vmem:[%s8 + $0x658] sm:$0xff]
  %v2450 = vld [vmem:[%s8 + $0x660] sm:$0xff]
  %v2451 = vld [vmem:[%s8 + $0x668] sm:$0xff]
  %v2452 = vld [vmem:[%s8 + $0x670] sm:$0xff]
  %v2453 = vld [vmem:[%s8 + $0x678] sm:$0xff]
  %v2454 = vld [vmem:[%s8 + $0x680] sm:$0xff]
  %v2455 = vld [vmem:[%s8 + $0x688] sm:$0xff]
  %v2456 = vld [vmem:[%s8 + $0x690] sm:$0xff]
  %v2457 = vld [vmem:[%s8 + $0x698] sm:$0xff]
  %v2458 = vld [vmem:[%s8 + $0x6a0] sm:$0xff]
  %v2459 = vld [vmem:[%s8 + $0x6a8] sm:$0xff]
  %v2460 = vld [vmem:[%s8 + $0x6b0] sm:$0xff]
  %v2461 = vld [vmem:[%s8 + $0x6b8] sm:$0xff]
  %v2462 = vld [vmem:[%s8 + $0x6c0] sm:$0xff]
  %v2463 = vld [vmem:[%s8 + $0x6c8] sm:$0xff]
  %v2464 = vld [vmem:[%s8 + $0x6d0] sm:$0xff]
  %v2465 = vld [vmem:[%s8 + $0x6d8] sm:$0xff]
  %v2466 = vld [vmem:[%s8 + $0x6e0] sm:$0xff]
  %v2467 = vld [vmem:[%s8 + $0x6e8] sm:$0xff]
  %v2468 = vld [vmem:[%s8 + $0x6f0] sm:$0xff]
  %v2469 = vld [vmem:[%s8 + $0x6f8] sm:$0xff]
  %v2470 = vld [vmem:[%s8 + $0x700] sm:$0xff]
  %v2471 = vld [vmem:[%s8 + $0x708] sm:$0xff]
  %v2472 = vld [vmem:[%s8 + $0x710] sm:$0xff]
  %v2473 = vld [vmem:[%s8 + $0x718] sm:$0xff]
  %v2474 = vld [vmem:[%s8 + $0x720] sm:$0xff]
  %v2475 = vld [vmem:[%s8 + $0x728] sm:$0xff]
  %v2476 = vld [vmem:[%s8 + $0x730] sm:$0xff]
  %v2477 = vld [vmem:[%s8 + $0x738] sm:$0xff]
  %v2478 = vld [vmem:[%s8 + $0x740] sm:$0xff]
  %v2479 = vld [vmem:[%s8 + $0x748] sm:$0xff]
  %v2480 = vld [vmem:[%s8 + $0x750] sm:$0xff]
  %v2481 = vld [vmem:[%s8 + $0x758] sm:$0xff]
  %v2482 = vld [vmem:[%s8 + $0x760] sm:$0xff]
  %v2483 = vld [vmem:[%s8 + $0x768] sm:$0xff]
  %v2484 = vld [vmem:[%s8 + $0x770] sm:$0xff]
  %v2485 = vld [vmem:[%s8 + $0x778] sm:$0xff]
  %v2486 = vld [vmem:[%s8 + $0x780] sm:$0xff]
  %v2487 = vld [vmem:[%s8 + $0x788] sm:$0xff]
  %v2488 = vld [vmem:[%s8 + $0x790] sm:$0xff]
  %v2489 = vld [vmem:[%s8 + $0x798] sm:$0xff]
  %v2490 = vld [vmem:[%s8 + $0x7a0] sm:$0xff]
  %v2491 = vld [vmem:[%s8 + $0x7a8] sm:$0xff]
  %v2492 = vld [vmem:[%s8 + $0x7b0] sm:$0xff]
  %v2493 = vld [vmem:[%s8 + $0x7b8] sm:$0xff]
  %v2494 = vld [vmem:[%s8 + $0x7c0] sm:$0xff]
  %v2495 = vld [vmem:[%s8 + $0x7c8] sm:$0xff]
  %v2496 = vld [vmem:[%s8 + $0x7d0] sm:$0xff]
  %v2497 = vld [vmem:[%s8 + $0x7d8] sm:$0xff]
  %v2498 = vld [vmem:[%s8 + $0x7e0] sm:$0xff]
  %v2499 = vld [vmem:[%s8 + $0x7e8] sm:$0xff]
  %v2500 = vld [vmem:[%s8 + $0x7f0] sm:$0xff]
  %v2501 = vld [vmem:[%s8 + $0x7f8] sm:$0xff]
  %v2502 = vld [vmem:[%s8 + $0x800] sm:$0xff]
  %v2503 = vld [vmem:[%s8 + $0x808] sm:$0xff]
  %v2504 = vld [vmem:[%s8 + $0x810] sm:$0xff]
  %v2505 = vld [vmem:[%s8 + $0x818] sm:$0xff]
  %v2506 = vld [vmem:[%s8 + $0x820] sm:$0xff]
  %v2507 = vld [vmem:[%s8 + $0x828] sm:$0xff]
  %v2508 = vld [vmem:[%s8 + $0x830] sm:$0xff]
  %v2509 = vld [vmem:[%s8 + $0x838] sm:$0xff]
  %v2510 = vld [vmem:[%s8 + $0x840] sm:$0xff]
  %v2511 = vld [vmem:[%s8 + $0x848] sm:$0xff]
  %v2512 = vld [vmem:[%s8 + $0x850] sm:$0xff]
  %v2513 = vld [vmem:[%s8 + $0x858] sm:$0xff]
  %v2514 = vld [vmem:[%s8 + $0x860] sm:$0xff]
  %v2515 = vld [vmem:[%s8 + $0x868] sm:$0xff]
  %v2516 = vld [vmem:[%s8 + $0x870] sm:$0xff]
  %v2517 = vld [vmem:[%s8 + $0x878] sm:$0xff]
  %v2518 = vld [vmem:[%s8 + $0x880] sm:$0xff]
  %v2519 = vld [vmem:[%s8 + $0x888] sm:$0xff]
  %v2520 = vld [vmem:[%s8 + $0x890] sm:$0xff]
  %v2521 = vld [vmem:[%s8 + $0x898] sm:$0xff]
  %v2522 = vld [vmem:[%s8 + $0x8a0] sm:$0xff]
  %v2523 = vld [vmem:[%s8 + $0x8a8] sm:$0xff]
  %v2524 = vld [vmem:[%s8 + $0x8b0] sm:$0xff]
  %v2525 = vld [vmem:[%s8 + $0x8b8] sm:$0xff]
  %v2526 = vld [vmem:[%s8 + $0x8c0] sm:$0xff]
  %v2527 = vld [vmem:[%s8 + $0x8c8] sm:$0xff]
  %v2528 = vld [vmem:[%s8 + $0x8d0] sm:$0xff]
  %v2529 = vld [vmem:[%s8 + $0x8d8] sm:$0xff]
  %v2530 = vld [vmem:[%s8 + $0x8e0] sm:$0xff]
  %v2531 = vld [vmem:[%s8 + $0x8e8] sm:$0xff]
  %v2532 = vld [vmem:[%s8 + $0x8f0] sm:$0xff]
  %v2533 = vld [vmem:[%s8 + $0x8f8] sm:$0xff]
  %v2534 = vld [vmem:[%s8 + $0x900] sm:$0xff]
  %v2535 = vld [vmem:[%s8 + $0x908] sm:$0xff]
  %v2536 = vld [vmem:[%s8 + $0x910] sm:$0xff]
  %v2537 = vld [vmem:[%s8 + $0x918] sm:$0xff]
  %v2538 = vld [vmem:[%s8 + $0x920] sm:$0xff]
  %v2539 = vld [vmem:[%s8 + $0x928] sm:$0xff]
  %v2540 = vld [vmem:[%s8 + $0x930] sm:$0xff]
  %v2541 = vld [vmem:[%s8 + $0x938] sm:$0xff]
  %v2542 = vld [vmem:[%s8 + $0x940] sm:$0xff]
  %v2543 = vld [vmem:[%s8 + $0x948] sm:$0xff]
  %v2544 = vld [vmem:[%s8 + $0x950] sm:$0xff]
  %v2545 = vld [vmem:[%s8 + $0x958] sm:$0xff]
  %v2546 = vld [vmem:[%s8 + $0x960] sm:$0xff]
  %v2547 = vld [vmem:[%s8 + $0x968] sm:$0xff]
  %v2548 = vld [vmem:[%s8 + $0x970] sm:$0xff]
  %v2549 = vld [vmem:[%s8 + $0x978] sm:$0xff]
  %v2550 = vld [vmem:[%s8 + $0x980] sm:$0xff]
  %v2551 = vld [vmem:[%s8 + $0x988] sm:$0xff]
  %v2552 = vld [vmem:[%s8 + $0x990] sm:$0xff]
  %v2553 = vld [vmem:[%s8 + $0x998] sm:$0xff]
  %v2554 = vld [vmem:[%s8 + $0x9a0] sm:$0xff]
  %v2555 = vld [vmem:[%s8 + $0x9a8] sm:$0xff]
  %v2556 = vld [vmem:[%s8 + $0x9b0] sm:$0xff]
  %v2557 = vld [vmem:[%s8 + $0x9b8] sm:$0xff]
  %v2558 = vld [vmem:[%s8 + $0x9c0] sm:$0xff]
  %v2559 = vld [vmem:[%s8 + $0x9c8] sm:$0xff]
  %v2560 = vld [vmem:[%s8 + $0x9d0] sm:$0xff]
  %v2561 = vld [vmem:[%s8 + $0x9d8] sm:$0xff]
  %v2562 = vld [vmem:[%s8 + $0x9e0] sm:$0xff]
  %v2563 = vld [vmem:[%s8 + $0x9e8] sm:$0xff]
  %v2564 = vld [vmem:[%s8 + $0x9f0] sm:$0xff]
  %v2565 = vld [vmem:[%s8 + $0x9f8] sm:$0xff]
  %v2566 = vld [vmem:[%s8 + $0xa00] sm:$0xff]
  %v2567 = vld [vmem:[%s8 + $0xa08] sm:$0xff]
  %v2568 = vld [vmem:[%s8 + $0xa10] sm:$0xff]
  %v2569 = vld [vmem:[%s8 + $0xa18] sm:$0xff]
  %v2570 = vld [vmem:[%s8 + $0xa20] sm:$0xff]
  %v2571 = vld [vmem:[%s8 + $0xa28] sm:$0xff]
  %v2572 = vld [vmem:[%s8 + $0xa30] sm:$0xff]
  %v2573 = vld [vmem:[%s8 + $0xa38] sm:$0xff]
  %v2574 = vld [vmem:[%s8 + $0xa40] sm:$0xff]
  %v2575 = vld [vmem:[%s8 + $0xa48] sm:$0xff]
  %v2576 = vld [vmem:[%s8 + $0xa50] sm:$0xff]
  %v2577 = vld [vmem:[%s8 + $0xa58] sm:$0xff]
  %v2578 = vld [vmem:[%s8 + $0xa60] sm:$0xff]
  %v2579 = vld [vmem:[%s8 + $0xa68] sm:$0xff]
  %v2580 = vld [vmem:[%s8 + $0xa70] sm:$0xff]
  %v2581 = vld [vmem:[%s8 + $0xa78] sm:$0xff]
  %v2582 = vld [vmem:[%s8 + $0xa80] sm:$0xff]
  %v2583 = vld [vmem:[%s8 + $0xa88] sm:$0xff]
  %v2584 = vld [vmem:[%s8 + $0xa90] sm:$0xff]
  %v2585 = vld [vmem:[%s8 + $0xa98] sm:$0xff]
  %v2586 = vld [vmem:[%s8 + $0xaa0] sm:$0xff]
  %v2587 = vld [vmem:[%s8 + $0xaa8] sm:$0xff]
  %v2588 = vld [vmem:[%s8 + $0xab0] sm:$0xff]
  %v2589 = vld [vmem:[%s8 + $0xab8] sm:$0xff]
  %v2590 = vld [vmem:[%s8 + $0xac0] sm:$0xff]
  %v2591 = vld [vmem:[%s8 + $0xac8] sm:$0xff]
  %v2592 = vld [vmem:[%s8 + $0xad0] sm:$0xff]
  %v2593 = vld [vmem:[%s8 + $0xad8] sm:$0xff]
  %v2594 = vld [vmem:[%s8 + $0xae0] sm:$0xff]
  %v2595 = vld [vmem:[%s8 + $0xae8] sm:$0xff]
  %v2596 = vld [vmem:[%s8 + $0xaf0] sm:$0xff]
  %v2597 = vld [vmem:[%s8 + $0xaf8] sm:$0xff]
  %v2598 = vld [vmem:[%s8 + $0xb00] sm:$0xff]
  %v2599 = vld [vmem:[%s8 + $0xb08] sm:$0xff]
  %v2600 = vld [vmem:[%s8 + $0xb10] sm:$0xff]
  %v2601 = vld [vmem:[%s8 + $0xb18] sm:$0xff]
  %v2602 = vld [vmem:[%s8 + $0xb20] sm:$0xff]
  %v2603 = vld [vmem:[%s8 + $0xb28] sm:$0xff]
  %v2604 = vld [vmem:[%s8 + $0xb30] sm:$0xff]
  %v2605 = vld [vmem:[%s8 + $0xb38] sm:$0xff]
  %v2606 = vld [vmem:[%s8 + $0xb40] sm:$0xff]
  %v2607 = vld [vmem:[%s8 + $0xb48] sm:$0xff]
  %v2608 = vld [vmem:[%s8 + $0xb50] sm:$0xff]
  %v2609 = vld [vmem:[%s8 + $0xb58] sm:$0xff]
  %v2610 = vld [vmem:[%s8 + $0xb60] sm:$0xff]
  %v2611 = vld [vmem:[%s8 + $0xb68] sm:$0xff]
  %v2612 = vld [vmem:[%s8 + $0xb70] sm:$0xff]
  %v2613 = vld [vmem:[%s8 + $0xb78] sm:$0xff]
  %v2614 = vld [vmem:[%s8 + $0xb80] sm:$0xff]
  %v2615 = vld [vmem:[%s8 + $0xb88] sm:$0xff]
  %v2616 = vld [vmem:[%s8 + $0xb90] sm:$0xff]
  %v2617 = vld [vmem:[%s8 + $0xb98] sm:$0xff]
  %v2618 = vld [vmem:[%s8 + $0xba0] sm:$0xff]
  %v2619 = vld [vmem:[%s8 + $0xba8] sm:$0xff]
  %v2620 = vld [vmem:[%s8 + $0xbb0] sm:$0xff]
  %v2621 = vld [vmem:[%s8 + $0xbb8] sm:$0xff]
  %v2622 = vld [vmem:[%s8 + $0xbc0] sm:$0xff]
  %v2623 = vld [vmem:[%s8 + $0xbc8] sm:$0xff]
  %v2624 = vld [vmem:[%s8 + $0xbd0] sm:$0xff]
  %v2625 = vld [vmem:[%s8 + $0xbd8] sm:$0xff]
  %v2626 = vld [vmem:[%s8 + $0xbe0] sm:$0xff]
  %v2627 = vld [vmem:[%s8 + $0xbe8] sm:$0xff]
  %v2628 = vld [vmem:[%s8 + $0xbf0] sm:$0xff]
  %v2629 = vld [vmem:[%s8 + $0xbf8] sm:$0xff]
  %v2630 = vld [vmem:[%s9] sm:$0x3]
  %2631 = vmatpush.msra.mxu0 %v2291
  %2632 = vmatpush.msra.mxu0 %v2288
  %2633 = vmatpush.msra.mxu0 %v2285
  %2634 = vmatpush.msra.mxu0 %v2282
  %2635 = vmatpush.msra.mxu0 %v2279
  %2636 = vmatpush.msra.mxu0 %v2276
  %2637 = vmatpush.msra.mxu0 %v2273
  %2638 = vmatpush.msra.mxu0 %v2270
  %2639 = vmatpush.msra.mxu0 %v2267
  %2640 = vmatpush.msra.mxu0 %v2264
  %2641 = vmatpush.msra.mxu0 %v2261
  %2642 = vmatpush.msra.mxu0 %v2258
  %2643 = vmatpush.msra.mxu0 %v2255
  %2644 = vmatpush.msra.mxu0 %v2252
  %2645 = vmatpush.msra.mxu0 %v2249
  %2646 = vmatpush.msra.mxu0 %v2246
  %2647 = vmatmul.f32.gmra.mxu0 %v2198
  %v2648 = vpop.f32.mrf.mxu0
  %v2649 = vadd.f32 0.0, %v2648
  %2650 = vmatmul.f32.gmra.mxu0 %v2206
  %v2651 = vpop.f32.mrf.mxu0
  %v2652 = vadd.f32 0.0, %v2651
  %2653 = vmatmul.f32.gmra.mxu0 %v2214
  %v2654 = vpop.f32.mrf.mxu0
  %v2655 = vadd.f32 0.0, %v2654
  %2656 = vmatmul.f32.gmra.mxu0 %v2222
  %v2657 = vpop.f32.mrf.mxu0
  %v2658 = vadd.f32 0.0, %v2657
  %2659 = vmatmul.f32.gmra.mxu0 %v2230
  %v2660 = vpop.f32.mrf.mxu0
  %v2661 = vadd.f32 0.0, %v2660
  %2662 = vmatmul.f32.gmra.mxu0 %v2238
  %v2663 = vpop.f32.mrf.mxu0
  %v2664 = vadd.f32 0.0, %v2663
  %2665 = vdwg.mxu0
  %2666 = vmatpush.msra.mxu0 %v2339
  %2667 = vmatpush.msra.mxu0 %v2336
  %2668 = vmatpush.msra.mxu0 %v2333
  %2669 = vmatpush.msra.mxu0 %v2330
  %2670 = vmatpush.msra.mxu0 %v2327
  %2671 = vmatpush.msra.mxu0 %v2324
  %2672 = vmatpush.msra.mxu0 %v2321
  %2673 = vmatpush.msra.mxu0 %v2318
  %2674 = vmatpush.msra.mxu0 %v2315
  %2675 = vmatpush.msra.mxu0 %v2312
  %2676 = vmatpush.msra.mxu0 %v2309
  %2677 = vmatpush.msra.mxu0 %v2306
  %2678 = vmatpush.msra.mxu0 %v2303
  %2679 = vmatpush.msra.mxu0 %v2300
  %2680 = vmatpush.msra.mxu0 %v2297
  %2681 = vmatpush.msra.mxu0 %v2294
  %2682 = vmatmul.f32.gmra.mxu0 %v2199
  %v2683 = vpop.f32.mrf.mxu0
  %v2684 = vadd.f32 %v2649, %v2683
  %2685 = vmatmul.f32.gmra.mxu0 %v2207
  %v2686 = vpop.f32.mrf.mxu0
  %v2687 = vadd.f32 %v2652, %v2686
  %2688 = vmatmul.f32.gmra.mxu0 %v2215
  %v2689 = vpop.f32.mrf.mxu0
  %v2690 = vadd.f32 %v2655, %v2689
  %2691 = vmatmul.f32.gmra.mxu0 %v2223
  %v2692 = vpop.f32.mrf.mxu0
  %v2693 = vadd.f32 %v2658, %v2692
  %2694 = vmatmul.f32.gmra.mxu0 %v2231
  %v2695 = vpop.f32.mrf.mxu0
  %v2696 = vadd.f32 %v2661, %v2695
  %2697 = vmatmul.f32.gmra.mxu0 %v2239
  %v2698 = vpop.f32.mrf.mxu0
  %v2699 = vadd.f32 %v2664, %v2698
  %2700 = vdwg.mxu0
  %2701 = vmatpush.msra.mxu0 %v2387
  %2702 = vmatpush.msra.mxu0 %v2384
  %2703 = vmatpush.msra.mxu0 %v2381
  %2704 = vmatpush.msra.mxu0 %v2378
  %2705 = vmatpush.msra.mxu0 %v2375
  %2706 = vmatpush.msra.mxu0 %v2372
  %2707 = vmatpush.msra.mxu0 %v2369
  %2708 = vmatpush.msra.mxu0 %v2366
  %2709 = vmatpush.msra.mxu0 %v2363
  %2710 = vmatpush.msra.mxu0 %v2360
  %2711 = vmatpush.msra.mxu0 %v2357
  %2712 = vmatpush.msra.mxu0 %v2354
  %2713 = vmatpush.msra.mxu0 %v2351
  %2714 = vmatpush.msra.mxu0 %v2348
  %2715 = vmatpush.msra.mxu0 %v2345
  %2716 = vmatpush.msra.mxu0 %v2342
  %2717 = vmatmul.f32.gmra.mxu0 %v2200
  %v2718 = vpop.f32.mrf.mxu0
  %v2719 = vadd.f32 %v2684, %v2718
  %2720 = vmatmul.f32.gmra.mxu0 %v2208
  %v2721 = vpop.f32.mrf.mxu0
  %v2722 = vadd.f32 %v2687, %v2721
  %2723 = vmatmul.f32.gmra.mxu0 %v2216
  %v2724 = vpop.f32.mrf.mxu0
  %v2725 = vadd.f32 %v2690, %v2724
  %2726 = vmatmul.f32.gmra.mxu0 %v2224
  %v2727 = vpop.f32.mrf.mxu0
  %v2728 = vadd.f32 %v2693, %v2727
  %2729 = vmatmul.f32.gmra.mxu0 %v2232
  %v2730 = vpop.f32.mrf.mxu0
  %v2731 = vadd.f32 %v2696, %v2730
  %2732 = vmatmul.f32.gmra.mxu0 %v2240
  %v2733 = vpop.f32.mrf.mxu0
  %v2734 = vadd.f32 %v2699, %v2733
  %2735 = vdwg.mxu0
  %2736 = vmatpush.msra.mxu0 %v2435
  %2737 = vmatpush.msra.mxu0 %v2432
  %2738 = vmatpush.msra.mxu0 %v2429
  %2739 = vmatpush.msra.mxu0 %v2426
  %2740 = vmatpush.msra.mxu0 %v2423
  %2741 = vmatpush.msra.mxu0 %v2420
  %2742 = vmatpush.msra.mxu0 %v2417
  %2743 = vmatpush.msra.mxu0 %v2414
  %2744 = vmatpush.msra.mxu0 %v2411
  %2745 = vmatpush.msra.mxu0 %v2408
  %2746 = vmatpush.msra.mxu0 %v2405
  %2747 = vmatpush.msra.mxu0 %v2402
  %2748 = vmatpush.msra.mxu0 %v2399
  %2749 = vmatpush.msra.mxu0 %v2396
  %2750 = vmatpush.msra.mxu0 %v2393
  %2751 = vmatpush.msra.mxu0 %v2390
  %2752 = vmatmul.f32.gmra.mxu0 %v2201
  %v2753 = vpop.f32.mrf.mxu0
  %v2754 = vadd.f32 %v2719, %v2753
  %2755 = vmatmul.f32.gmra.mxu0 %v2209
  %v2756 = vpop.f32.mrf.mxu0
  %v2757 = vadd.f32 %v2722, %v2756
  %2758 = vmatmul.f32.gmra.mxu0 %v2217
  %v2759 = vpop.f32.mrf.mxu0
  %v2760 = vadd.f32 %v2725, %v2759
  %2761 = vmatmul.f32.gmra.mxu0 %v2225
  %v2762 = vpop.f32.mrf.mxu0
  %v2763 = vadd.f32 %v2728, %v2762
  %2764 = vmatmul.f32.gmra.mxu0 %v2233
  %v2765 = vpop.f32.mrf.mxu0
  %v2766 = vadd.f32 %v2731, %v2765
  %2767 = vmatmul.f32.gmra.mxu0 %v2241
  %v2768 = vpop.f32.mrf.mxu0
  %v2769 = vadd.f32 %v2734, %v2768
  %2770 = vdwg.mxu0
  %2771 = vmatpush.msra.mxu0 %v2483
  %2772 = vmatpush.msra.mxu0 %v2480
  %2773 = vmatpush.msra.mxu0 %v2477
  %2774 = vmatpush.msra.mxu0 %v2474
  %2775 = vmatpush.msra.mxu0 %v2471
  %2776 = vmatpush.msra.mxu0 %v2468
  %2777 = vmatpush.msra.mxu0 %v2465
  %2778 = vmatpush.msra.mxu0 %v2462
  %2779 = vmatpush.msra.mxu0 %v2459
  %2780 = vmatpush.msra.mxu0 %v2456
  %2781 = vmatpush.msra.mxu0 %v2453
  %2782 = vmatpush.msra.mxu0 %v2450
  %2783 = vmatpush.msra.mxu0 %v2447
  %2784 = vmatpush.msra.mxu0 %v2444
  %2785 = vmatpush.msra.mxu0 %v2441
  %2786 = vmatpush.msra.mxu0 %v2438
  %2787 = vmatmul.f32.gmra.mxu0 %v2202
  %v2788 = vpop.f32.mrf.mxu0
  %v2789 = vadd.f32 %v2754, %v2788
  %2790 = vmatmul.f32.gmra.mxu0 %v2210
  %v2791 = vpop.f32.mrf.mxu0
  %v2792 = vadd.f32 %v2757, %v2791
  %2793 = vmatmul.f32.gmra.mxu0 %v2218
  %v2794 = vpop.f32.mrf.mxu0
  %v2795 = vadd.f32 %v2760, %v2794
  %2796 = vmatmul.f32.gmra.mxu0 %v2226
  %v2797 = vpop.f32.mrf.mxu0
  %v2798 = vadd.f32 %v2763, %v2797
  %2799 = vmatmul.f32.gmra.mxu0 %v2234
  %v2800 = vpop.f32.mrf.mxu0
  %v2801 = vadd.f32 %v2766, %v2800
  %2802 = vmatmul.f32.gmra.mxu0 %v2242
  %v2803 = vpop.f32.mrf.mxu0
  %v2804 = vadd.f32 %v2769, %v2803
  %2805 = vdwg.mxu0
  %2806 = vmatpush.msra.mxu0 %v2531
  %2807 = vmatpush.msra.mxu0 %v2528
  %2808 = vmatpush.msra.mxu0 %v2525
  %2809 = vmatpush.msra.mxu0 %v2522
  %2810 = vmatpush.msra.mxu0 %v2519
  %2811 = vmatpush.msra.mxu0 %v2516
  %2812 = vmatpush.msra.mxu0 %v2513
  %2813 = vmatpush.msra.mxu0 %v2510
  %2814 = vmatpush.msra.mxu0 %v2507
  %2815 = vmatpush.msra.mxu0 %v2504
  %2816 = vmatpush.msra.mxu0 %v2501
  %2817 = vmatpush.msra.mxu0 %v2498
  %2818 = vmatpush.msra.mxu0 %v2495
  %2819 = vmatpush.msra.mxu0 %v2492
  %2820 = vmatpush.msra.mxu0 %v2489
  %2821 = vmatpush.msra.mxu0 %v2486
  %2822 = vmatmul.f32.gmra.mxu0 %v2203
  %v2823 = vpop.f32.mrf.mxu0
  %v2824 = vadd.f32 %v2789, %v2823
  %2825 = vmatmul.f32.gmra.mxu0 %v2211
  %v2826 = vpop.f32.mrf.mxu0
  %v2827 = vadd.f32 %v2792, %v2826
  %2828 = vmatmul.f32.gmra.mxu0 %v2219
  %v2829 = vpop.f32.mrf.mxu0
  %v2830 = vadd.f32 %v2795, %v2829
  %2831 = vmatmul.f32.gmra.mxu0 %v2227
  %v2832 = vpop.f32.mrf.mxu0
  %v2833 = vadd.f32 %v2798, %v2832
  %2834 = vmatmul.f32.gmra.mxu0 %v2235
  %v2835 = vpop.f32.mrf.mxu0
  %v2836 = vadd.f32 %v2801, %v2835
  %2837 = vmatmul.f32.gmra.mxu0 %v2243
  %v2838 = vpop.f32.mrf.mxu0
  %v2839 = vadd.f32 %v2804, %v2838
  %2840 = vdwg.mxu0
  %2841 = vmatpush.msra.mxu0 %v2579
  %2842 = vmatpush.msra.mxu0 %v2576
  %2843 = vmatpush.msra.mxu0 %v2573
  %2844 = vmatpush.msra.mxu0 %v2570
  %2845 = vmatpush.msra.mxu0 %v2567
  %2846 = vmatpush.msra.mxu0 %v2564
  %2847 = vmatpush.msra.mxu0 %v2561
  %2848 = vmatpush.msra.mxu0 %v2558
  %2849 = vmatpush.msra.mxu0 %v2555
  %2850 = vmatpush.msra.mxu0 %v2552
  %2851 = vmatpush.msra.mxu0 %v2549
  %2852 = vmatpush.msra.mxu0 %v2546
  %2853 = vmatpush.msra.mxu0 %v2543
  %2854 = vmatpush.msra.mxu0 %v2540
  %2855 = vmatpush.msra.mxu0 %v2537
  %2856 = vmatpush.msra.mxu0 %v2534
  %2857 = vmatmul.f32.gmra.mxu0 %v2204
  %v2858 = vpop.f32.mrf.mxu0
  %v2859 = vadd.f32 %v2824, %v2858
  %2860 = vmatmul.f32.gmra.mxu0 %v2212
  %v2861 = vpop.f32.mrf.mxu0
  %v2862 = vadd.f32 %v2827, %v2861
  %2863 = vmatmul.f32.gmra.mxu0 %v2220
  %v2864 = vpop.f32.mrf.mxu0
  %v2865 = vadd.f32 %v2830, %v2864
  %2866 = vmatmul.f32.gmra.mxu0 %v2228
  %v2867 = vpop.f32.mrf.mxu0
  %v2868 = vadd.f32 %v2833, %v2867
  %2869 = vmatmul.f32.gmra.mxu0 %v2236
  %v2870 = vpop.f32.mrf.mxu0
  %v2871 = vadd.f32 %v2836, %v2870
  %2872 = vmatmul.f32.gmra.mxu0 %v2244
  %v2873 = vpop.f32.mrf.mxu0
  %v2874 = vadd.f32 %v2839, %v2873
  %2875 = vdwg.mxu0
  %2876 = vmatpush.msra.mxu0 %v2627
  %2877 = vmatpush.msra.mxu0 %v2624
  %2878 = vmatpush.msra.mxu0 %v2621
  %2879 = vmatpush.msra.mxu0 %v2618
  %2880 = vmatpush.msra.mxu0 %v2615
  %2881 = vmatpush.msra.mxu0 %v2612
  %2882 = vmatpush.msra.mxu0 %v2609
  %2883 = vmatpush.msra.mxu0 %v2606
  %2884 = vmatpush.msra.mxu0 %v2603
  %2885 = vmatpush.msra.mxu0 %v2600
  %2886 = vmatpush.msra.mxu0 %v2597
  %2887 = vmatpush.msra.mxu0 %v2594
  %2888 = vmatpush.msra.mxu0 %v2591
  %2889 = vmatpush.msra.mxu0 %v2588
  %2890 = vmatpush.msra.mxu0 %v2585
  %2891 = vmatpush.msra.mxu0 %v2582
  %2892 = vmatmul.f32.gmra.mxu0 %v2205
  %v2893 = vpop.f32.mrf.mxu0
  %v2894 = vadd.f32 %v2859, %v2893
  %2895 = vmatmul.f32.gmra.mxu0 %v2213
  %v2896 = vpop.f32.mrf.mxu0
  %v2897 = vadd.f32 %v2862, %v2896
  %2898 = vmatmul.f32.gmra.mxu0 %v2221
  %v2899 = vpop.f32.mrf.mxu0
  %v2900 = vadd.f32 %v2865, %v2899
  %2901 = vmatmul.f32.gmra.mxu0 %v2229
  %v2902 = vpop.f32.mrf.mxu0
  %v2903 = vadd.f32 %v2868, %v2902
  %2904 = vmatmul.f32.gmra.mxu0 %v2237
  %v2905 = vpop.f32.mrf.mxu0
  %v2906 = vadd.f32 %v2871, %v2905
  %2907 = vmatmul.f32.gmra.mxu0 %v2245
  %v2908 = vpop.f32.mrf.mxu0
  %v2909 = vadd.f32 %v2874, %v2908
  %2910 = vdwg.mxu0
  %2911 = vmatpush.msra.mxu0 %v2292
  %2912 = vmatpush.msra.mxu0 %v2289
  %2913 = vmatpush.msra.mxu0 %v2286
  %2914 = vmatpush.msra.mxu0 %v2283
  %2915 = vmatpush.msra.mxu0 %v2280
  %2916 = vmatpush.msra.mxu0 %v2277
  %2917 = vmatpush.msra.mxu0 %v2274
  %2918 = vmatpush.msra.mxu0 %v2271
  %2919 = vmatpush.msra.mxu0 %v2268
  %2920 = vmatpush.msra.mxu0 %v2265
  %2921 = vmatpush.msra.mxu0 %v2262
  %2922 = vmatpush.msra.mxu0 %v2259
  %2923 = vmatpush.msra.mxu0 %v2256
  %2924 = vmatpush.msra.mxu0 %v2253
  %2925 = vmatpush.msra.mxu0 %v2250
  %2926 = vmatpush.msra.mxu0 %v2247
  %2927 = vmatmul.f32.gmra.mxu0 %v2198
  %v2928 = vpop.f32.mrf.mxu0
  %v2929 = vadd.f32 0.0, %v2928
  %2930 = vmatmul.f32.gmra.mxu0 %v2206
  %v2931 = vpop.f32.mrf.mxu0
  %v2932 = vadd.f32 0.0, %v2931
  %2933 = vmatmul.f32.gmra.mxu0 %v2214
  %v2934 = vpop.f32.mrf.mxu0
  %v2935 = vadd.f32 0.0, %v2934
  %2936 = vmatmul.f32.gmra.mxu0 %v2222
  %v2937 = vpop.f32.mrf.mxu0
  %v2938 = vadd.f32 0.0, %v2937
  %2939 = vmatmul.f32.gmra.mxu0 %v2230
  %v2940 = vpop.f32.mrf.mxu0
  %v2941 = vadd.f32 0.0, %v2940
  %2942 = vmatmul.f32.gmra.mxu0 %v2238
  %v2943 = vpop.f32.mrf.mxu0
  %v2944 = vadd.f32 0.0, %v2943
  %2945 = vdwg.mxu0
  %2946 = vmatpush.msra.mxu0 %v2340
  %2947 = vmatpush.msra.mxu0 %v2337
  %2948 = vmatpush.msra.mxu0 %v2334
  %2949 = vmatpush.msra.mxu0 %v2331
  %2950 = vmatpush.msra.mxu0 %v2328
  %2951 = vmatpush.msra.mxu0 %v2325
  %2952 = vmatpush.msra.mxu0 %v2322
  %2953 = vmatpush.msra.mxu0 %v2319
  %2954 = vmatpush.msra.mxu0 %v2316
  %2955 = vmatpush.msra.mxu0 %v2313
  %2956 = vmatpush.msra.mxu0 %v2310
  %2957 = vmatpush.msra.mxu0 %v2307
  %2958 = vmatpush.msra.mxu0 %v2304
  %2959 = vmatpush.msra.mxu0 %v2301
  %2960 = vmatpush.msra.mxu0 %v2298
  %2961 = vmatpush.msra.mxu0 %v2295
  %2962 = vmatmul.f32.gmra.mxu0 %v2199
  %v2963 = vpop.f32.mrf.mxu0
  %v2964 = vadd.f32 %v2929, %v2963
  %2965 = vmatmul.f32.gmra.mxu0 %v2207
  %v2966 = vpop.f32.mrf.mxu0
  %v2967 = vadd.f32 %v2932, %v2966
  %2968 = vmatmul.f32.gmra.mxu0 %v2215
  %v2969 = vpop.f32.mrf.mxu0
  %v2970 = vadd.f32 %v2935, %v2969
  %2971 = vmatmul.f32.gmra.mxu0 %v2223
  %v2972 = vpop.f32.mrf.mxu0
  %v2973 = vadd.f32 %v2938, %v2972
  %2974 = vmatmul.f32.gmra.mxu0 %v2231
  %v2975 = vpop.f32.mrf.mxu0
  %v2976 = vadd.f32 %v2941, %v2975
  %2977 = vmatmul.f32.gmra.mxu0 %v2239
  %v2978 = vpop.f32.mrf.mxu0
  %v2979 = vadd.f32 %v2944, %v2978
  %2980 = vdwg.mxu0
  %2981 = vmatpush.msra.mxu0 %v2388
  %2982 = vmatpush.msra.mxu0 %v2385
  %2983 = vmatpush.msra.mxu0 %v2382
  %2984 = vmatpush.msra.mxu0 %v2379
  %2985 = vmatpush.msra.mxu0 %v2376
  %2986 = vmatpush.msra.mxu0 %v2373
  %2987 = vmatpush.msra.mxu0 %v2370
  %2988 = vmatpush.msra.mxu0 %v2367
  %2989 = vmatpush.msra.mxu0 %v2364
  %2990 = vmatpush.msra.mxu0 %v2361
  %2991 = vmatpush.msra.mxu0 %v2358
  %2992 = vmatpush.msra.mxu0 %v2355
  %2993 = vmatpush.msra.mxu0 %v2352
  %2994 = vmatpush.msra.mxu0 %v2349
  %2995 = vmatpush.msra.mxu0 %v2346
  %2996 = vmatpush.msra.mxu0 %v2343
  %2997 = vmatmul.f32.gmra.mxu0 %v2200
  %v2998 = vpop.f32.mrf.mxu0
  %v2999 = vadd.f32 %v2964, %v2998
  %3000 = vmatmul.f32.gmra.mxu0 %v2208
  %v3001 = vpop.f32.mrf.mxu0
  %v3002 = vadd.f32 %v2967, %v3001
  %3003 = vmatmul.f32.gmra.mxu0 %v2216
  %v3004 = vpop.f32.mrf.mxu0
  %v3005 = vadd.f32 %v2970, %v3004
  %3006 = vmatmul.f32.gmra.mxu0 %v2224
  %v3007 = vpop.f32.mrf.mxu0
  %v3008 = vadd.f32 %v2973, %v3007
  %3009 = vmatmul.f32.gmra.mxu0 %v2232
  %v3010 = vpop.f32.mrf.mxu0
  %v3011 = vadd.f32 %v2976, %v3010
  %3012 = vmatmul.f32.gmra.mxu0 %v2240
  %v3013 = vpop.f32.mrf.mxu0
  %v3014 = vadd.f32 %v2979, %v3013
  %3015 = vdwg.mxu0
  %3016 = vmatpush.msra.mxu0 %v2436
  %3017 = vmatpush.msra.mxu0 %v2433
  %3018 = vmatpush.msra.mxu0 %v2430
  %3019 = vmatpush.msra.mxu0 %v2427
  %3020 = vmatpush.msra.mxu0 %v2424
  %3021 = vmatpush.msra.mxu0 %v2421
  %3022 = vmatpush.msra.mxu0 %v2418
  %3023 = vmatpush.msra.mxu0 %v2415
  %3024 = vmatpush.msra.mxu0 %v2412
  %3025 = vmatpush.msra.mxu0 %v2409
  %3026 = vmatpush.msra.mxu0 %v2406
  %3027 = vmatpush.msra.mxu0 %v2403
  %3028 = vmatpush.msra.mxu0 %v2400
  %3029 = vmatpush.msra.mxu0 %v2397
  %3030 = vmatpush.msra.mxu0 %v2394
  %3031 = vmatpush.msra.mxu0 %v2391
  %3032 = vmatmul.f32.gmra.mxu0 %v2201
  %v3033 = vpop.f32.mrf.mxu0
  %v3034 = vadd.f32 %v2999, %v3033
  %3035 = vmatmul.f32.gmra.mxu0 %v2209
  %v3036 = vpop.f32.mrf.mxu0
  %v3037 = vadd.f32 %v3002, %v3036
  %3038 = vmatmul.f32.gmra.mxu0 %v2217
  %v3039 = vpop.f32.mrf.mxu0
  %v3040 = vadd.f32 %v3005, %v3039
  %3041 = vmatmul.f32.gmra.mxu0 %v2225
  %v3042 = vpop.f32.mrf.mxu0
  %v3043 = vadd.f32 %v3008, %v3042
  %3044 = vmatmul.f32.gmra.mxu0 %v2233
  %v3045 = vpop.f32.mrf.mxu0
  %v3046 = vadd.f32 %v3011, %v3045
  %3047 = vmatmul.f32.gmra.mxu0 %v2241
  %v3048 = vpop.f32.mrf.mxu0
  %v3049 = vadd.f32 %v3014, %v3048
  %3050 = vdwg.mxu0
  %3051 = vmatpush.msra.mxu0 %v2484
  %3052 = vmatpush.msra.mxu0 %v2481
  %3053 = vmatpush.msra.mxu0 %v2478
  %3054 = vmatpush.msra.mxu0 %v2475
  %3055 = vmatpush.msra.mxu0 %v2472
  %3056 = vmatpush.msra.mxu0 %v2469
  %3057 = vmatpush.msra.mxu0 %v2466
  %3058 = vmatpush.msra.mxu0 %v2463
  %3059 = vmatpush.msra.mxu0 %v2460
  %3060 = vmatpush.msra.mxu0 %v2457
  %3061 = vmatpush.msra.mxu0 %v2454
  %3062 = vmatpush.msra.mxu0 %v2451
  %3063 = vmatpush.msra.mxu0 %v2448
  %3064 = vmatpush.msra.mxu0 %v2445
  %3065 = vmatpush.msra.mxu0 %v2442
  %3066 = vmatpush.msra.mxu0 %v2439
  %3067 = vmatmul.f32.gmra.mxu0 %v2202
  %v3068 = vpop.f32.mrf.mxu0
  %v3069 = vadd.f32 %v3034, %v3068
  %3070 = vmatmul.f32.gmra.mxu0 %v2210
  %v3071 = vpop.f32.mrf.mxu0
  %v3072 = vadd.f32 %v3037, %v3071
  %3073 = vmatmul.f32.gmra.mxu0 %v2218
  %v3074 = vpop.f32.mrf.mxu0
  %v3075 = vadd.f32 %v3040, %v3074
  %3076 = vmatmul.f32.gmra.mxu0 %v2226
  %v3077 = vpop.f32.mrf.mxu0
  %v3078 = vadd.f32 %v3043, %v3077
  %3079 = vmatmul.f32.gmra.mxu0 %v2234
  %v3080 = vpop.f32.mrf.mxu0
  %v3081 = vadd.f32 %v3046, %v3080
  %3082 = vmatmul.f32.gmra.mxu0 %v2242
  %v3083 = vpop.f32.mrf.mxu0
  %v3084 = vadd.f32 %v3049, %v3083
  %3085 = vdwg.mxu0
  %3086 = vmatpush.msra.mxu0 %v2532
  %3087 = vmatpush.msra.mxu0 %v2529
  %3088 = vmatpush.msra.mxu0 %v2526
  %3089 = vmatpush.msra.mxu0 %v2523
  %3090 = vmatpush.msra.mxu0 %v2520
  %3091 = vmatpush.msra.mxu0 %v2517
  %3092 = vmatpush.msra.mxu0 %v2514
  %3093 = vmatpush.msra.mxu0 %v2511
  %3094 = vmatpush.msra.mxu0 %v2508
  %3095 = vmatpush.msra.mxu0 %v2505
  %3096 = vmatpush.msra.mxu0 %v2502
  %3097 = vmatpush.msra.mxu0 %v2499
  %3098 = vmatpush.msra.mxu0 %v2496
  %3099 = vmatpush.msra.mxu0 %v2493
  %3100 = vmatpush.msra.mxu0 %v2490
  %3101 = vmatpush.msra.mxu0 %v2487
  %3102 = vmatmul.f32.gmra.mxu0 %v2203
  %v3103 = vpop.f32.mrf.mxu0
  %v3104 = vadd.f32 %v3069, %v3103
  %3105 = vmatmul.f32.gmra.mxu0 %v2211
  %v3106 = vpop.f32.mrf.mxu0
  %v3107 = vadd.f32 %v3072, %v3106
  %3108 = vmatmul.f32.gmra.mxu0 %v2219
  %v3109 = vpop.f32.mrf.mxu0
  %v3110 = vadd.f32 %v3075, %v3109
  %3111 = vmatmul.f32.gmra.mxu0 %v2227
  %v3112 = vpop.f32.mrf.mxu0
  %v3113 = vadd.f32 %v3078, %v3112
  %3114 = vmatmul.f32.gmra.mxu0 %v2235
  %v3115 = vpop.f32.mrf.mxu0
  %v3116 = vadd.f32 %v3081, %v3115
  %3117 = vmatmul.f32.gmra.mxu0 %v2243
  %v3118 = vpop.f32.mrf.mxu0
  %v3119 = vadd.f32 %v3084, %v3118
  %3120 = vdwg.mxu0
  %3121 = vmatpush.msra.mxu0 %v2580
  %3122 = vmatpush.msra.mxu0 %v2577
  %3123 = vmatpush.msra.mxu0 %v2574
  %3124 = vmatpush.msra.mxu0 %v2571
  %3125 = vmatpush.msra.mxu0 %v2568
  %3126 = vmatpush.msra.mxu0 %v2565
  %3127 = vmatpush.msra.mxu0 %v2562
  %3128 = vmatpush.msra.mxu0 %v2559
  %3129 = vmatpush.msra.mxu0 %v2556
  %3130 = vmatpush.msra.mxu0 %v2553
  %3131 = vmatpush.msra.mxu0 %v2550
  %3132 = vmatpush.msra.mxu0 %v2547
  %3133 = vmatpush.msra.mxu0 %v2544
  %3134 = vmatpush.msra.mxu0 %v2541
  %3135 = vmatpush.msra.mxu0 %v2538
  %3136 = vmatpush.msra.mxu0 %v2535
  %3137 = vmatmul.f32.gmra.mxu0 %v2204
  %v3138 = vpop.f32.mrf.mxu0
  %v3139 = vadd.f32 %v3104, %v3138
  %3140 = vmatmul.f32.gmra.mxu0 %v2212
  %v3141 = vpop.f32.mrf.mxu0
  %v3142 = vadd.f32 %v3107, %v3141
  %3143 = vmatmul.f32.gmra.mxu0 %v2220
  %v3144 = vpop.f32.mrf.mxu0
  %v3145 = vadd.f32 %v3110, %v3144
  %3146 = vmatmul.f32.gmra.mxu0 %v2228
  %v3147 = vpop.f32.mrf.mxu0
  %v3148 = vadd.f32 %v3113, %v3147
  %3149 = vmatmul.f32.gmra.mxu0 %v2236
  %v3150 = vpop.f32.mrf.mxu0
  %v3151 = vadd.f32 %v3116, %v3150
  %3152 = vmatmul.f32.gmra.mxu0 %v2244
  %v3153 = vpop.f32.mrf.mxu0
  %v3154 = vadd.f32 %v3119, %v3153
  %3155 = vdwg.mxu0
  %3156 = vmatpush.msra.mxu0 %v2628
  %3157 = vmatpush.msra.mxu0 %v2625
  %3158 = vmatpush.msra.mxu0 %v2622
  %3159 = vmatpush.msra.mxu0 %v2619
  %3160 = vmatpush.msra.mxu0 %v2616
  %3161 = vmatpush.msra.mxu0 %v2613
  %3162 = vmatpush.msra.mxu0 %v2610
  %3163 = vmatpush.msra.mxu0 %v2607
  %3164 = vmatpush.msra.mxu0 %v2604
  %3165 = vmatpush.msra.mxu0 %v2601
  %3166 = vmatpush.msra.mxu0 %v2598
  %3167 = vmatpush.msra.mxu0 %v2595
  %3168 = vmatpush.msra.mxu0 %v2592
  %3169 = vmatpush.msra.mxu0 %v2589
  %3170 = vmatpush.msra.mxu0 %v2586
  %3171 = vmatpush.msra.mxu0 %v2583
  %3172 = vmatmul.f32.gmra.mxu0 %v2205
  %v3173 = vpop.f32.mrf.mxu0
  %v3174 = vadd.f32 %v3139, %v3173
  %3175 = vmatmul.f32.gmra.mxu0 %v2213
  %v3176 = vpop.f32.mrf.mxu0
  %v3177 = vadd.f32 %v3142, %v3176
  %3178 = vmatmul.f32.gmra.mxu0 %v2221
  %v3179 = vpop.f32.mrf.mxu0
  %v3180 = vadd.f32 %v3145, %v3179
  %3181 = vmatmul.f32.gmra.mxu0 %v2229
  %v3182 = vpop.f32.mrf.mxu0
  %v3183 = vadd.f32 %v3148, %v3182
  %3184 = vmatmul.f32.gmra.mxu0 %v2237
  %v3185 = vpop.f32.mrf.mxu0
  %v3186 = vadd.f32 %v3151, %v3185
  %3187 = vmatmul.f32.gmra.mxu0 %v2245
  %v3188 = vpop.f32.mrf.mxu0
  %v3189 = vadd.f32 %v3154, %v3188
  %3190 = vdwg.mxu0
  %3191 = vmatpush.msra.mxu0 %v2293
  %3192 = vmatpush.msra.mxu0 %v2290
  %3193 = vmatpush.msra.mxu0 %v2287
  %3194 = vmatpush.msra.mxu0 %v2284
  %3195 = vmatpush.msra.mxu0 %v2281
  %3196 = vmatpush.msra.mxu0 %v2278
  %3197 = vmatpush.msra.mxu0 %v2275
  %3198 = vmatpush.msra.mxu0 %v2272
  %3199 = vmatpush.msra.mxu0 %v2269
  %3200 = vmatpush.msra.mxu0 %v2266
  %3201 = vmatpush.msra.mxu0 %v2263
  %3202 = vmatpush.msra.mxu0 %v2260
  %3203 = vmatpush.msra.mxu0 %v2257
  %3204 = vmatpush.msra.mxu0 %v2254
  %3205 = vmatpush.msra.mxu0 %v2251
  %3206 = vmatpush.msra.mxu0 %v2248
  %3207 = vmatmul.f32.gmra.mxu0 %v2198
  %v3208 = vpop.f32.mrf.mxu0
  %v3209 = vadd.f32 0.0, %v3208
  %3210 = vmatmul.f32.gmra.mxu0 %v2206
  %v3211 = vpop.f32.mrf.mxu0
  %v3212 = vadd.f32 0.0, %v3211
  %3213 = vmatmul.f32.gmra.mxu0 %v2214
  %v3214 = vpop.f32.mrf.mxu0
  %v3215 = vadd.f32 0.0, %v3214
  %3216 = vmatmul.f32.gmra.mxu0 %v2222
  %v3217 = vpop.f32.mrf.mxu0
  %v3218 = vadd.f32 0.0, %v3217
  %3219 = vmatmul.f32.gmra.mxu0 %v2230
  %v3220 = vpop.f32.mrf.mxu0
  %v3221 = vadd.f32 0.0, %v3220
  %3222 = vmatmul.f32.gmra.mxu0 %v2238
  %v3223 = vpop.f32.mrf.mxu0
  %v3224 = vadd.f32 0.0, %v3223
  %3225 = vdwg.mxu0
  %3226 = vmatpush.msra.mxu0 %v2341
  %3227 = vmatpush.msra.mxu0 %v2338
  %3228 = vmatpush.msra.mxu0 %v2335
  %3229 = vmatpush.msra.mxu0 %v2332
  %3230 = vmatpush.msra.mxu0 %v2329
  %3231 = vmatpush.msra.mxu0 %v2326
  %3232 = vmatpush.msra.mxu0 %v2323
  %3233 = vmatpush.msra.mxu0 %v2320
  %3234 = vmatpush.msra.mxu0 %v2317
  %3235 = vmatpush.msra.mxu0 %v2314
  %3236 = vmatpush.msra.mxu0 %v2311
  %3237 = vmatpush.msra.mxu0 %v2308
  %3238 = vmatpush.msra.mxu0 %v2305
  %3239 = vmatpush.msra.mxu0 %v2302
  %3240 = vmatpush.msra.mxu0 %v2299
  %3241 = vmatpush.msra.mxu0 %v2296
  %3242 = vmatmul.f32.gmra.mxu0 %v2199
  %v3243 = vpop.f32.mrf.mxu0
  %v3244 = vadd.f32 %v3209, %v3243
  %3245 = vmatmul.f32.gmra.mxu0 %v2207
  %v3246 = vpop.f32.mrf.mxu0
  %v3247 = vadd.f32 %v3212, %v3246
  %3248 = vmatmul.f32.gmra.mxu0 %v2215
  %v3249 = vpop.f32.mrf.mxu0
  %v3250 = vadd.f32 %v3215, %v3249
  %3251 = vmatmul.f32.gmra.mxu0 %v2223
  %v3252 = vpop.f32.mrf.mxu0
  %v3253 = vadd.f32 %v3218, %v3252
  %3254 = vmatmul.f32.gmra.mxu0 %v2231
  %v3255 = vpop.f32.mrf.mxu0
  %v3256 = vadd.f32 %v3221, %v3255
  %3257 = vmatmul.f32.gmra.mxu0 %v2239
  %v3258 = vpop.f32.mrf.mxu0
  %v3259 = vadd.f32 %v3224, %v3258
  %3260 = vdwg.mxu0
  %3261 = vmatpush.msra.mxu0 %v2389
  %3262 = vmatpush.msra.mxu0 %v2386
  %3263 = vmatpush.msra.mxu0 %v2383
  %3264 = vmatpush.msra.mxu0 %v2380
  %3265 = vmatpush.msra.mxu0 %v2377
  %3266 = vmatpush.msra.mxu0 %v2374
  %3267 = vmatpush.msra.mxu0 %v2371
  %3268 = vmatpush.msra.mxu0 %v2368
  %3269 = vmatpush.msra.mxu0 %v2365
  %3270 = vmatpush.msra.mxu0 %v2362
  %3271 = vmatpush.msra.mxu0 %v2359
  %3272 = vmatpush.msra.mxu0 %v2356
  %3273 = vmatpush.msra.mxu0 %v2353
  %3274 = vmatpush.msra.mxu0 %v2350
  %3275 = vmatpush.msra.mxu0 %v2347
  %3276 = vmatpush.msra.mxu0 %v2344
  %3277 = vmatmul.f32.gmra.mxu0 %v2200
  %v3278 = vpop.f32.mrf.mxu0
  %v3279 = vadd.f32 %v3244, %v3278
  %3280 = vmatmul.f32.gmra.mxu0 %v2208
  %v3281 = vpop.f32.mrf.mxu0
  %v3282 = vadd.f32 %v3247, %v3281
  %3283 = vmatmul.f32.gmra.mxu0 %v2216
  %v3284 = vpop.f32.mrf.mxu0
  %v3285 = vadd.f32 %v3250, %v3284
  %3286 = vmatmul.f32.gmra.mxu0 %v2224
  %v3287 = vpop.f32.mrf.mxu0
  %v3288 = vadd.f32 %v3253, %v3287
  %3289 = vmatmul.f32.gmra.mxu0 %v2232
  %v3290 = vpop.f32.mrf.mxu0
  %v3291 = vadd.f32 %v3256, %v3290
  %3292 = vmatmul.f32.gmra.mxu0 %v2240
  %v3293 = vpop.f32.mrf.mxu0
  %v3294 = vadd.f32 %v3259, %v3293
  %3295 = vdwg.mxu0
  %3296 = vmatpush.msra.mxu0 %v2437
  %3297 = vmatpush.msra.mxu0 %v2434
  %3298 = vmatpush.msra.mxu0 %v2431
  %3299 = vmatpush.msra.mxu0 %v2428
  %3300 = vmatpush.msra.mxu0 %v2425
  %3301 = vmatpush.msra.mxu0 %v2422
  %3302 = vmatpush.msra.mxu0 %v2419
  %3303 = vmatpush.msra.mxu0 %v2416
  %3304 = vmatpush.msra.mxu0 %v2413
  %3305 = vmatpush.msra.mxu0 %v2410
  %3306 = vmatpush.msra.mxu0 %v2407
  %3307 = vmatpush.msra.mxu0 %v2404
  %3308 = vmatpush.msra.mxu0 %v2401
  %3309 = vmatpush.msra.mxu0 %v2398
  %3310 = vmatpush.msra.mxu0 %v2395
  %3311 = vmatpush.msra.mxu0 %v2392
  %3312 = vmatmul.f32.gmra.mxu0 %v2201
  %v3313 = vpop.f32.mrf.mxu0
  %v3314 = vadd.f32 %v3279, %v3313
  %3315 = vmatmul.f32.gmra.mxu0 %v2209
  %v3316 = vpop.f32.mrf.mxu0
  %v3317 = vadd.f32 %v3282, %v3316
  %3318 = vmatmul.f32.gmra.mxu0 %v2217
  %v3319 = vpop.f32.mrf.mxu0
  %v3320 = vadd.f32 %v3285, %v3319
  %3321 = vmatmul.f32.gmra.mxu0 %v2225
  %v3322 = vpop.f32.mrf.mxu0
  %v3323 = vadd.f32 %v3288, %v3322
  %3324 = vmatmul.f32.gmra.mxu0 %v2233
  %v3325 = vpop.f32.mrf.mxu0
  %v3326 = vadd.f32 %v3291, %v3325
  %3327 = vmatmul.f32.gmra.mxu0 %v2241
  %v3328 = vpop.f32.mrf.mxu0
  %v3329 = vadd.f32 %v3294, %v3328
  %3330 = vdwg.mxu0
  %3331 = vmatpush.msra.mxu0 %v2485
  %3332 = vmatpush.msra.mxu0 %v2482
  %3333 = vmatpush.msra.mxu0 %v2479
  %3334 = vmatpush.msra.mxu0 %v2476
  %3335 = vmatpush.msra.mxu0 %v2473
  %3336 = vmatpush.msra.mxu0 %v2470
  %3337 = vmatpush.msra.mxu0 %v2467
  %3338 = vmatpush.msra.mxu0 %v2464
  %3339 = vmatpush.msra.mxu0 %v2461
  %3340 = vmatpush.msra.mxu0 %v2458
  %3341 = vmatpush.msra.mxu0 %v2455
  %3342 = vmatpush.msra.mxu0 %v2452
  %3343 = vmatpush.msra.mxu0 %v2449
  %3344 = vmatpush.msra.mxu0 %v2446
  %3345 = vmatpush.msra.mxu0 %v2443
  %3346 = vmatpush.msra.mxu0 %v2440
  %3347 = vmatmul.f32.gmra.mxu0 %v2202
  %v3348 = vpop.f32.mrf.mxu0
  %v3349 = vadd.f32 %v3314, %v3348
  %3350 = vmatmul.f32.gmra.mxu0 %v2210
  %v3351 = vpop.f32.mrf.mxu0
  %v3352 = vadd.f32 %v3317, %v3351
  %3353 = vmatmul.f32.gmra.mxu0 %v2218
  %v3354 = vpop.f32.mrf.mxu0
  %v3355 = vadd.f32 %v3320, %v3354
  %3356 = vmatmul.f32.gmra.mxu0 %v2226
  %v3357 = vpop.f32.mrf.mxu0
  %v3358 = vadd.f32 %v3323, %v3357
  %3359 = vmatmul.f32.gmra.mxu0 %v2234
  %v3360 = vpop.f32.mrf.mxu0
  %v3361 = vadd.f32 %v3326, %v3360
  %3362 = vmatmul.f32.gmra.mxu0 %v2242
  %v3363 = vpop.f32.mrf.mxu0
  %v3364 = vadd.f32 %v3329, %v3363
  %3365 = vdwg.mxu0
  %3366 = vmatpush.msra.mxu0 %v2533
  %3367 = vmatpush.msra.mxu0 %v2530
  %3368 = vmatpush.msra.mxu0 %v2527
  %3369 = vmatpush.msra.mxu0 %v2524
  %3370 = vmatpush.msra.mxu0 %v2521
  %3371 = vmatpush.msra.mxu0 %v2518
  %3372 = vmatpush.msra.mxu0 %v2515
  %3373 = vmatpush.msra.mxu0 %v2512
  %3374 = vmatpush.msra.mxu0 %v2509
  %3375 = vmatpush.msra.mxu0 %v2506
  %3376 = vmatpush.msra.mxu0 %v2503
  %3377 = vmatpush.msra.mxu0 %v2500
  %3378 = vmatpush.msra.mxu0 %v2497
  %3379 = vmatpush.msra.mxu0 %v2494
  %3380 = vmatpush.msra.mxu0 %v2491
  %3381 = vmatpush.msra.mxu0 %v2488
  %3382 = vmatmul.f32.gmra.mxu0 %v2203
  %v3383 = vpop.f32.mrf.mxu0
  %v3384 = vadd.f32 %v3349, %v3383
  %3385 = vmatmul.f32.gmra.mxu0 %v2211
  %v3386 = vpop.f32.mrf.mxu0
  %v3387 = vadd.f32 %v3352, %v3386
  %3388 = vmatmul.f32.gmra.mxu0 %v2219
  %v3389 = vpop.f32.mrf.mxu0
  %v3390 = vadd.f32 %v3355, %v3389
  %3391 = vmatmul.f32.gmra.mxu0 %v2227
  %v3392 = vpop.f32.mrf.mxu0
  %v3393 = vadd.f32 %v3358, %v3392
  %3394 = vmatmul.f32.gmra.mxu0 %v2235
  %v3395 = vpop.f32.mrf.mxu0
  %v3396 = vadd.f32 %v3361, %v3395
  %3397 = vmatmul.f32.gmra.mxu0 %v2243
  %v3398 = vpop.f32.mrf.mxu0
  %v3399 = vadd.f32 %v3364, %v3398
  %3400 = vdwg.mxu0
  %3401 = vmatpush.msra.mxu0 %v2581
  %3402 = vmatpush.msra.mxu0 %v2578
  %3403 = vmatpush.msra.mxu0 %v2575
  %3404 = vmatpush.msra.mxu0 %v2572
  %3405 = vmatpush.msra.mxu0 %v2569
  %3406 = vmatpush.msra.mxu0 %v2566
  %3407 = vmatpush.msra.mxu0 %v2563
  %3408 = vmatpush.msra.mxu0 %v2560
  %3409 = vmatpush.msra.mxu0 %v2557
  %3410 = vmatpush.msra.mxu0 %v2554
  %3411 = vmatpush.msra.mxu0 %v2551
  %3412 = vmatpush.msra.mxu0 %v2548
  %3413 = vmatpush.msra.mxu0 %v2545
  %3414 = vmatpush.msra.mxu0 %v2542
  %3415 = vmatpush.msra.mxu0 %v2539
  %3416 = vmatpush.msra.mxu0 %v2536
  %3417 = vmatmul.f32.gmra.mxu0 %v2204
  %v3418 = vpop.f32.mrf.mxu0
  %v3419 = vadd.f32 %v3384, %v3418
  %3420 = vmatmul.f32.gmra.mxu0 %v2212
  %v3421 = vpop.f32.mrf.mxu0
  %v3422 = vadd.f32 %v3387, %v3421
  %3423 = vmatmul.f32.gmra.mxu0 %v2220
  %v3424 = vpop.f32.mrf.mxu0
  %v3425 = vadd.f32 %v3390, %v3424
  %3426 = vmatmul.f32.gmra.mxu0 %v2228
  %v3427 = vpop.f32.mrf.mxu0
  %v3428 = vadd.f32 %v3393, %v3427
  %3429 = vmatmul.f32.gmra.mxu0 %v2236
  %v3430 = vpop.f32.mrf.mxu0
  %v3431 = vadd.f32 %v3396, %v3430
  %3432 = vmatmul.f32.gmra.mxu0 %v2244
  %v3433 = vpop.f32.mrf.mxu0
  %v3434 = vadd.f32 %v3399, %v3433
  %3435 = vdwg.mxu0
  %3436 = vmatpush.msra.mxu0 %v2629
  %3437 = vmatpush.msra.mxu0 %v2626
  %3438 = vmatpush.msra.mxu0 %v2623
  %3439 = vmatpush.msra.mxu0 %v2620
  %3440 = vmatpush.msra.mxu0 %v2617
  %3441 = vmatpush.msra.mxu0 %v2614
  %3442 = vmatpush.msra.mxu0 %v2611
  %3443 = vmatpush.msra.mxu0 %v2608
  %3444 = vmatpush.msra.mxu0 %v2605
  %3445 = vmatpush.msra.mxu0 %v2602
  %3446 = vmatpush.msra.mxu0 %v2599
  %3447 = vmatpush.msra.mxu0 %v2596
  %3448 = vmatpush.msra.mxu0 %v2593
  %3449 = vmatpush.msra.mxu0 %v2590
  %3450 = vmatpush.msra.mxu0 %v2587
  %3451 = vmatpush.msra.mxu0 %v2584
  %3452 = vmatmul.f32.gmra.mxu0 %v2205
  %v3453 = vpop.f32.mrf.mxu0
  %v3454 = vadd.f32 %v3419, %v3453
  %3455 = vmatmul.f32.gmra.mxu0 %v2213
  %v3456 = vpop.f32.mrf.mxu0
  %v3457 = vadd.f32 %v3422, %v3456
  %3458 = vmatmul.f32.gmra.mxu0 %v2221
  %v3459 = vpop.f32.mrf.mxu0
  %v3460 = vadd.f32 %v3425, %v3459
  %3461 = vmatmul.f32.gmra.mxu0 %v2229
  %v3462 = vpop.f32.mrf.mxu0
  %v3463 = vadd.f32 %v3428, %v3462
  %3464 = vmatmul.f32.gmra.mxu0 %v2237
  %v3465 = vpop.f32.mrf.mxu0
  %v3466 = vadd.f32 %v3431, %v3465
  %3467 = vmatmul.f32.gmra.mxu0 %v2245
  %v3468 = vpop.f32.mrf.mxu0
  %v3469 = vadd.f32 %v3434, %v3468
  %3470 = vdwg.mxu0
  %3471 = vxpose.xlu0.b32.start [1/16] %v3454, 128
  %3472 = vxpose.xlu0.b32.cont [2/16] %v3457, 128
  %3473 = vxpose.xlu0.b32.cont [3/16] %v3460, 128
  %3474 = vxpose.xlu0.b32.cont [4/16] %v3463, 128
  %3475 = vxpose.xlu0.b32.cont [5/16] %v3466, 128
  %3476 = vxpose.xlu0.b32.cont [6/16] %v3469, 128
  %3477 = vxpose.xlu0.b32.cont [7/16] 0.0, 128
  %3478 = vxpose.xlu0.b32.cont [8/16] 0.0, 128
  %3479 = vxpose.xlu0.b32.cont [9/16] 0.0, 128
  %3480 = vxpose.xlu0.b32.cont [10/16] 0.0, 128
  %3481 = vxpose.xlu0.b32.cont [11/16] 0.0, 128
  %3482 = vxpose.xlu0.b32.cont [12/16] 0.0, 128
  %3483 = vxpose.xlu0.b32.cont [13/16] 0.0, 128
  %3484 = vxpose.xlu0.b32.cont [14/16] 0.0, 128
  %3485 = vxpose.xlu0.b32.cont [15/16] 0.0, 128
  %3486 = vxpose.xlu0.b32.end [16/16] 0.0, 128
  %v3487 = vpop.trf.xlu0
  %v3488 = vpop.trf.xlu0
  %v3489 = vpop.trf.xlu0
  %v3490 = vpop.trf.xlu0
  %v3491 = vpop.trf.xlu0
  %v3492 = vpop.trf.xlu0
  %v3493 = vpop.trf.xlu0
  %v3494 = vpop.trf.xlu0
  %v3495 = vpop.trf.xlu0
  %v3496 = vpop.trf.xlu0
  %v3497 = vpop.trf.xlu0
  %v3498 = vpop.trf.xlu0
  %v3499 = vpop.trf.xlu0
  %v3500 = vpop.trf.xlu0
  %v3501 = vpop.trf.xlu0
  %v3502 = vpop.trf.xlu0
  %3504 = vset.pattern.permute.xlu0 1
  %3505 = vperm.xlu0 %3504, %v3454
  %v3506 = vpop.permute.xlu0 %3505
  %3509 = vset.pattern.permute.xlu0 1
  %3510 = vperm.xlu0 %3509, %v3457
  %v3511 = vpop.permute.xlu0 %3510
  %3514 = vset.pattern.permute.xlu0 1
  %3515 = vperm.xlu0 %3514, %v3460
  %v3516 = vpop.permute.xlu0 %3515
  %3519 = vset.pattern.permute.xlu0 1
  %3520 = vperm.xlu0 %3519, %v3463
  %v3521 = vpop.permute.xlu0 %3520
  %3524 = vset.pattern.permute.xlu0 1
  %3525 = vperm.xlu0 %3524, %v3466
  %v3526 = vpop.permute.xlu0 %3525
  %3529 = vset.pattern.permute.xlu0 1
  %3530 = vperm.xlu0 %3529, %v3469
  %v3531 = vpop.permute.xlu0 %3530
  %v3533 = vperm.slane %v3487, 0
  %v3534 = vadd.f32 %v3506, %v3533
  %v3535 = vadd.f32 %v3511, %v3533
  %v3536 = vadd.f32 %v3516, %v3533
  %v3537 = vadd.f32 %v3521, %v3533
  %v3538 = vadd.f32 %v3526, %v3533
  %v3539 = vadd.f32 %v3531, %v3533
  %vm3540 = vcmp.gt.f32.partialorder %v3534, 0.0
  %vm3541 = vcmp.gt.f32.partialorder %v3535, 0.0
  %vm3542 = vcmp.gt.f32.partialorder %v3536, 0.0
  %vm3543 = vcmp.gt.f32.partialorder %v3537, 0.0
  %vm3544 = vcmp.gt.f32.partialorder %v3538, 0.0
  %vm3545 = vcmp.gt.f32.partialorder %v3539, 0.0
  %v3546 = vmul.f32 %v3534, 0.2
  %v3547 = vmul.f32 %v3535, 0.2
  %v3548 = vmul.f32 %v3536, 0.2
  %v3549 = vmul.f32 %v3537, 0.2
  %v3550 = vmul.f32 %v3538, 0.2
  %v3551 = vmul.f32 %v3539, 0.2
  %v3552 = vsel %vm3540, %v3534, %v3546
  %v3553 = vsel %vm3541, %v3535, %v3547
  %v3554 = vsel %vm3542, %v3536, %v3548
  %v3555 = vsel %vm3543, %v3537, %v3549
  %v3556 = vsel %vm3544, %v3538, %v3550
  %v3557 = vsel %vm3545, %v3539, %v3551
  %v3558 = vadd.f32 %v3552, %v47
  %v3559 = vadd.f32 %v3553, %v48
  %v3560 = vadd.f32 %v3554, %v49
  %v3561 = vadd.f32 %v3555, %v50
  %v3562 = vadd.f32 %v3556, %v51
  %v3563 = vadd.f32 %v3557, %v52
  %v3564 = vsel %vm229, %v3558, -inf
  %3565 = vmax.xlane.f32.xlu0 %v3564
  %v3566 = vpop.xlane.xlu0 %3565
  %v3567 = vsel %vm229, %v3559, -inf
  %3568 = vmax.xlane.f32.xlu0 %v3567
  %v3569 = vpop.xlane.xlu0 %3568
  %v3570 = vsel %vm229, %v3560, -inf
  %3571 = vmax.xlane.f32.xlu0 %v3570
  %v3572 = vpop.xlane.xlu0 %3571
  %v3573 = vsel %vm229, %v3561, -inf
  %3574 = vmax.xlane.f32.xlu0 %v3573
  %v3575 = vpop.xlane.xlu0 %3574
  %v3576 = vsel %vm229, %v3562, -inf
  %3577 = vmax.xlane.f32.xlu0 %v3576
  %v3578 = vpop.xlane.xlu0 %3577
  %v3579 = vsel %vm245, %v3563, -inf
  %3580 = vmax.xlane.f32.xlu0 %v3579
  %v3581 = vpop.xlane.xlu0 %3580
  %v3582 = vsub.f32 %v3558, %v3566
  %v3583 = vsub.f32 %v3559, %v3569
  %v3584 = vsub.f32 %v3560, %v3572
  %v3585 = vsub.f32 %v3561, %v3575
  %v3586 = vsub.f32 %v3562, %v3578
  %v3587 = vsub.f32 %v3563, %v3581
  %v3588 = vmul.f32 %v3582, 1.442695
  %v3589 = vpow.pop %v3588
  %v3590 = vmul.f32 %v3583, 1.442695
  %v3591 = vpow.pop %v3590
  %v3592 = vmul.f32 %v3584, 1.442695
  %v3593 = vpow.pop %v3592
  %v3594 = vmul.f32 %v3585, 1.442695
  %v3595 = vpow.pop %v3594
  %v3596 = vmul.f32 %v3586, 1.442695
  %v3597 = vpow.pop %v3596
  %v3598 = vmul.f32 %v3587, 1.442695
  %v3599 = vpow.pop %v3598
  %v3600 = vsel %vm229, %v3589, 0.0
  %3601 = vadd.xlane.f32.xlu0 %v3600
  %v3602 = vpop.xlane.xlu0 %3601
  %v3603 = vsel %vm229, %v3591, 0.0
  %3604 = vadd.xlane.f32.xlu0 %v3603
  %v3605 = vpop.xlane.xlu0 %3604
  %v3606 = vsel %vm229, %v3593, 0.0
  %3607 = vadd.xlane.f32.xlu0 %v3606
  %v3608 = vpop.xlane.xlu0 %3607
  %v3609 = vsel %vm229, %v3595, 0.0
  %3610 = vadd.xlane.f32.xlu0 %v3609
  %v3611 = vpop.xlane.xlu0 %3610
  %v3612 = vsel %vm229, %v3597, 0.0
  %3613 = vadd.xlane.f32.xlu0 %v3612
  %v3614 = vpop.xlane.xlu0 %3613
  %v3615 = vsel %vm245, %v3599, 0.0
  %3616 = vadd.xlane.f32.xlu0 %v3615
  %v3617 = vpop.xlane.xlu0 %3616
  %v3618 = vrcp.pop %v3602
  %v3619 = vrcp.pop %v3605
  %v3620 = vrcp.pop %v3608
  %v3621 = vrcp.pop %v3611
  %v3622 = vrcp.pop %v3614
  %v3623 = vrcp.pop %v3617
  %v3624 = vmul.f32 %v3589, %v3618
  %v3625 = vmul.f32 %v3591, %v3619
  %v3626 = vmul.f32 %v3593, %v3620
  %v3627 = vmul.f32 %v3595, %v3621
  %v3628 = vmul.f32 %v3597, %v3622
  %v3629 = vmul.f32 %v3599, %v3623
  %v3631 = vperm.slane %v2630, 0
  %v3632 = vperm.slane %v2630, 1
  %v3636 = vsel %vm229, %v3624, 0
  %v3639 = vsel %vm229, %v3625, 0
  %v3642 = vsel %vm229, %v3626, 0
  %v3645 = vsel %vm229, %v3627, 0
  %v3648 = vsel %vm229, %v3628, 0
  %v3651 = vsel %vm229, %v3629, 0
  %v3654 = vsel %vm318, %v2909, 0
  %v3657 = vsel %vm318, %v3189, 0
  %3659 = vmatpush.msra.mxu0 0.0
  %3660 = vmatpush.msra.mxu0 0.0
  %3661 = vmatpush.msra.mxu0 0.0
  %3662 = vmatpush.msra.mxu0 0.0
  %3663 = vmatpush.msra.mxu0 0.0
  %3664 = vmatpush.msra.mxu0 0.0
  %3665 = vmatpush.msra.mxu0 0.0
  %3666 = vmatpush.msra.mxu0 0.0
  %3667 = vmatpush.msra.mxu0 0.0
  %3668 = vmatpush.msra.mxu0 0.0
  %3669 = vmatpush.msra.mxu0 %v3654
  %3670 = vmatpush.msra.mxu0 %v2906
  %3671 = vmatpush.msra.mxu0 %v2903
  %3672 = vmatpush.msra.mxu0 %v2900
  %3673 = vmatpush.msra.mxu0 %v2897
  %3674 = vmatpush.msra.mxu0 %v2894
  %3675 = vmatmul.f32.gmra.mxu0 %v3636
  %v3676 = vpop.f32.mrf.mxu0
  %v3677 = vadd.f32 %v3631, %v3676
  %3678 = vmatmul.f32.gmra.mxu0 %v3639
  %v3679 = vpop.f32.mrf.mxu0
  %v3680 = vadd.f32 %v3631, %v3679
  %3681 = vmatmul.f32.gmra.mxu0 %v3642
  %v3682 = vpop.f32.mrf.mxu0
  %v3683 = vadd.f32 %v3631, %v3682
  %3684 = vmatmul.f32.gmra.mxu0 %v3645
  %v3685 = vpop.f32.mrf.mxu0
  %v3686 = vadd.f32 %v3631, %v3685
  %3687 = vmatmul.f32.gmra.mxu0 %v3648
  %v3688 = vpop.f32.mrf.mxu0
  %v3689 = vadd.f32 %v3631, %v3688
  %3690 = vmatmul.f32.gmra.mxu0 %v3651
  %v3691 = vpop.f32.mrf.mxu0
  %v3692 = vadd.f32 %v3631, %v3691
  %3693 = vdwg.mxu0
  %3694 = vmatpush.msra.mxu0 0.0
  %3695 = vmatpush.msra.mxu0 0.0
  %3696 = vmatpush.msra.mxu0 0.0
  %3697 = vmatpush.msra.mxu0 0.0
  %3698 = vmatpush.msra.mxu0 0.0
  %3699 = vmatpush.msra.mxu0 0.0
  %3700 = vmatpush.msra.mxu0 0.0
  %3701 = vmatpush.msra.mxu0 0.0
  %3702 = vmatpush.msra.mxu0 0.0
  %3703 = vmatpush.msra.mxu0 0.0
  %3704 = vmatpush.msra.mxu0 %v3657
  %3705 = vmatpush.msra.mxu0 %v3186
  %3706 = vmatpush.msra.mxu0 %v3183
  %3707 = vmatpush.msra.mxu0 %v3180
  %3708 = vmatpush.msra.mxu0 %v3177
  %3709 = vmatpush.msra.mxu0 %v3174
  %3710 = vmatmul.f32.gmra.mxu0 %v3636
  %v3711 = vpop.f32.mrf.mxu0
  %v3712 = vadd.f32 %v3632, %v3711
  %3713 = vmatmul.f32.gmra.mxu0 %v3639
  %v3714 = vpop.f32.mrf.mxu0
  %v3715 = vadd.f32 %v3632, %v3714
  %3716 = vmatmul.f32.gmra.mxu0 %v3642
  %v3717 = vpop.f32.mrf.mxu0
  %v3718 = vadd.f32 %v3632, %v3717
  %3719 = vmatmul.f32.gmra.mxu0 %v3645
  %v3720 = vpop.f32.mrf.mxu0
  %v3721 = vadd.f32 %v3632, %v3720
  %3722 = vmatmul.f32.gmra.mxu0 %v3648
  %v3723 = vpop.f32.mrf.mxu0
  %v3724 = vadd.f32 %v3632, %v3723
  %3725 = vmatmul.f32.gmra.mxu0 %v3651
  %v3726 = vpop.f32.mrf.mxu0
  %v3727 = vadd.f32 %v3632, %v3726
  %3728 = vdwg.mxu0
  %v3729 = vmax.f32 %v3677, 0.0
  %v3730 = vmax.f32 %v3712, 0.0
  %v3731 = vmax.f32 %v3680, 0.0
  %v3732 = vmax.f32 %v3715, 0.0
  %v3733 = vmax.f32 %v3683, 0.0
  %v3734 = vmax.f32 %v3718, 0.0
  %v3735 = vmax.f32 %v3686, 0.0
  %v3736 = vmax.f32 %v3721, 0.0
  %v3737 = vmax.f32 %v3689, 0.0
  %v3738 = vmax.f32 %v3724, 0.0
  %v3739 = vmax.f32 %v3692, 0.0
  %v3740 = vmax.f32 %v3727, 0.0
  %v3741 = vld [vmem:[%s10] sm:$0xff]
  %v3742 = vld [vmem:[%s10 + $0x8] sm:$0xff]
  %v3743 = vld [vmem:[%s10 + $0x10] sm:$0xff]
  %v3744 = vld [vmem:[%s10 + $0x18] sm:$0xff]
  %v3745 = vld [vmem:[%s10 + $0x20] sm:$0xff]
  %v3746 = vld [vmem:[%s10 + $0x28] sm:$0xff]
  %v3747 = vld [vmem:[%s10 + $0x30] sm:$0xff]
  %v3748 = vld [vmem:[%s10 + $0x38] sm:$0xff]
  %v3749 = vld [vmem:[%s10 + $0x40] sm:$0xff]
  %v3750 = vld [vmem:[%s10 + $0x48] sm:$0xff]
  %v3751 = vld [vmem:[%s10 + $0x50] sm:$0xff]
  %v3752 = vld [vmem:[%s10 + $0x58] sm:$0xff]
  %v3753 = vld [vmem:[%s10 + $0x60] sm:$0xff]
  %v3754 = vld [vmem:[%s10 + $0x68] sm:$0xff]
  %v3755 = vld [vmem:[%s10 + $0x70] sm:$0xff]
  %v3756 = vld [vmem:[%s10 + $0x78] sm:$0xff]
  %v3757 = vld [vmem:[%s10 + $0x80] sm:$0xff]
  %v3758 = vld [vmem:[%s10 + $0x88] sm:$0xff]
  %v3759 = vld [vmem:[%s10 + $0x90] sm:$0xff]
  %v3760 = vld [vmem:[%s10 + $0x98] sm:$0xff]
  %v3761 = vld [vmem:[%s10 + $0xa0] sm:$0xff]
  %v3762 = vld [vmem:[%s10 + $0xa8] sm:$0xff]
  %v3763 = vld [vmem:[%s10 + $0xb0] sm:$0xff]
  %v3764 = vld [vmem:[%s10 + $0xb8] sm:$0xff]
  %v3765 = vld [vmem:[%s10 + $0xc0] sm:$0xff]
  %v3766 = vld [vmem:[%s10 + $0xc8] sm:$0xff]
  %v3767 = vld [vmem:[%s10 + $0xd0] sm:$0xff]
  %v3768 = vld [vmem:[%s10 + $0xd8] sm:$0xff]
  %v3769 = vld [vmem:[%s10 + $0xe0] sm:$0xff]
  %v3770 = vld [vmem:[%s10 + $0xe8] sm:$0xff]
  %v3771 = vld [vmem:[%s10 + $0xf0] sm:$0xff]
  %v3772 = vld [vmem:[%s10 + $0xf8] sm:$0xff]
  %v3773 = vld [vmem:[%s11] sm:$0x1]
  %3774 = vmatpush.msra.mxu0 %v3756
  %3775 = vmatpush.msra.mxu0 %v3755
  %3776 = vmatpush.msra.mxu0 %v3754
  %3777 = vmatpush.msra.mxu0 %v3753
  %3778 = vmatpush.msra.mxu0 %v3752
  %3779 = vmatpush.msra.mxu0 %v3751
  %3780 = vmatpush.msra.mxu0 %v3750
  %3781 = vmatpush.msra.mxu0 %v3749
  %3782 = vmatpush.msra.mxu0 %v3748
  %3783 = vmatpush.msra.mxu0 %v3747
  %3784 = vmatpush.msra.mxu0 %v3746
  %3785 = vmatpush.msra.mxu0 %v3745
  %3786 = vmatpush.msra.mxu0 %v3744
  %3787 = vmatpush.msra.mxu0 %v3743
  %3788 = vmatpush.msra.mxu0 %v3742
  %3789 = vmatpush.msra.mxu0 %v3741
  %3790 = vmatmul.f32.gmra.mxu0 %v3729
  %v3791 = vpop.f32.mrf.mxu0
  %v3792 = vadd.f32 0.0, %v3791
  %3793 = vmatmul.f32.gmra.mxu0 %v3731
  %v3794 = vpop.f32.mrf.mxu0
  %v3795 = vadd.f32 0.0, %v3794
  %3796 = vmatmul.f32.gmra.mxu0 %v3733
  %v3797 = vpop.f32.mrf.mxu0
  %v3798 = vadd.f32 0.0, %v3797
  %3799 = vmatmul.f32.gmra.mxu0 %v3735
  %v3800 = vpop.f32.mrf.mxu0
  %v3801 = vadd.f32 0.0, %v3800
  %3802 = vmatmul.f32.gmra.mxu0 %v3737
  %v3803 = vpop.f32.mrf.mxu0
  %v3804 = vadd.f32 0.0, %v3803
  %3805 = vmatmul.f32.gmra.mxu0 %v3739
  %v3806 = vpop.f32.mrf.mxu0
  %v3807 = vadd.f32 0.0, %v3806
  %3808 = vdwg.mxu0
  %3809 = vmatpush.msra.mxu0 %v3772
  %3810 = vmatpush.msra.mxu0 %v3771
  %3811 = vmatpush.msra.mxu0 %v3770
  %3812 = vmatpush.msra.mxu0 %v3769
  %3813 = vmatpush.msra.mxu0 %v3768
  %3814 = vmatpush.msra.mxu0 %v3767
  %3815 = vmatpush.msra.mxu0 %v3766
  %3816 = vmatpush.msra.mxu0 %v3765
  %3817 = vmatpush.msra.mxu0 %v3764
  %3818 = vmatpush.msra.mxu0 %v3763
  %3819 = vmatpush.msra.mxu0 %v3762
  %3820 = vmatpush.msra.mxu0 %v3761
  %3821 = vmatpush.msra.mxu0 %v3760
  %3822 = vmatpush.msra.mxu0 %v3759
  %3823 = vmatpush.msra.mxu0 %v3758
  %3824 = vmatpush.msra.mxu0 %v3757
  %3825 = vmatmul.f32.gmra.mxu0 %v3730
  %v3826 = vpop.f32.mrf.mxu0
  %v3827 = vadd.f32 %v3792, %v3826
  %3828 = vmatmul.f32.gmra.mxu0 %v3732
  %v3829 = vpop.f32.mrf.mxu0
  %v3830 = vadd.f32 %v3795, %v3829
  %3831 = vmatmul.f32.gmra.mxu0 %v3734
  %v3832 = vpop.f32.mrf.mxu0
  %v3833 = vadd.f32 %v3798, %v3832
  %3834 = vmatmul.f32.gmra.mxu0 %v3736
  %v3835 = vpop.f32.mrf.mxu0
  %v3836 = vadd.f32 %v3801, %v3835
  %3837 = vmatmul.f32.gmra.mxu0 %v3738
  %v3838 = vpop.f32.mrf.mxu0
  %v3839 = vadd.f32 %v3804, %v3838
  %3840 = vmatmul.f32.gmra.mxu0 %v3740
  %v3841 = vpop.f32.mrf.mxu0
  %v3842 = vadd.f32 %v3807, %v3841
  %3843 = vdwg.mxu0
  %3850 = vrot.lane.b32.xlu0 %v3827, 64
  %v3851 = vpop.permute.xlu0 %3850
  %3852 = vrot.lane.b32.xlu0 %v3830, 64
  %v3853 = vpop.permute.xlu0 %3852
  %3854 = vrot.lane.b32.xlu0 %v3833, 64
  %v3855 = vpop.permute.xlu0 %3854
  %3856 = vrot.lane.b32.xlu0 %v3836, 64
  %v3857 = vpop.permute.xlu0 %3856
  %3858 = vrot.lane.b32.xlu0 %v3839, 64
  %v3859 = vpop.permute.xlu0 %3858
  %3860 = vrot.lane.b32.xlu0 %v3842, 64
  %v3861 = vpop.permute.xlu0 %3860
  %3868 = vxpose.xlu0.b32.start [1/16] %v3851, 128
  %3869 = vxpose.xlu0.b32.cont [2/16] %v3853, 128
  %3870 = vxpose.xlu0.b32.cont [3/16] %v3855, 128
  %3871 = vxpose.xlu0.b32.cont [4/16] %v3857, 128
  %3872 = vxpose.xlu0.b32.cont [5/16] %v3859, 128
  %3873 = vxpose.xlu0.b32.cont [6/16] %v3861, 128
  %3874 = vxpose.xlu0.b32.cont [7/16] 0.0, 128
  %3875 = vxpose.xlu0.b32.cont [8/16] 0.0, 128
  %3876 = vxpose.xlu0.b32.cont [9/16] 0.0, 128
  %3877 = vxpose.xlu0.b32.cont [10/16] 0.0, 128
  %3878 = vxpose.xlu0.b32.cont [11/16] 0.0, 128
  %3879 = vxpose.xlu0.b32.cont [12/16] 0.0, 128
  %3880 = vxpose.xlu0.b32.cont [13/16] 0.0, 128
  %3881 = vxpose.xlu0.b32.cont [14/16] 0.0, 128
  %3882 = vxpose.xlu0.b32.cont [15/16] 0.0, 128
  %3883 = vxpose.xlu0.b32.end [16/16] 0.0, 128
  %v3884 = vpop.trf.xlu0
  %v3885 = vpop.trf.xlu0
  %v3886 = vpop.trf.xlu0
  %v3887 = vpop.trf.xlu0
  %v3888 = vpop.trf.xlu0
  %v3889 = vpop.trf.xlu0
  %v3890 = vpop.trf.xlu0
  %v3891 = vpop.trf.xlu0
  %v3892 = vpop.trf.xlu0
  %v3893 = vpop.trf.xlu0
  %v3894 = vpop.trf.xlu0
  %v3895 = vpop.trf.xlu0
  %v3896 = vpop.trf.xlu0
  %v3897 = vpop.trf.xlu0
  %v3898 = vpop.trf.xlu0
  %v3899 = vpop.trf.xlu0
  %3900 = vset.pattern.permute.xlu0 65
  %3901 = vperm.xlu0 %3900, %v3827
  %v3902 = vpop.permute.xlu0 %3901
  %3904 = vset.pattern.permute.xlu0 65
  %3905 = vperm.xlu0 %3904, %v3830
  %v3906 = vpop.permute.xlu0 %3905
  %3908 = vset.pattern.permute.xlu0 65
  %3909 = vperm.xlu0 %3908, %v3833
  %v3910 = vpop.permute.xlu0 %3909
  %3912 = vset.pattern.permute.xlu0 65
  %3913 = vperm.xlu0 %3912, %v3836
  %v3914 = vpop.permute.xlu0 %3913
  %3916 = vset.pattern.permute.xlu0 65
  %3917 = vperm.xlu0 %3916, %v3839
  %v3918 = vpop.permute.xlu0 %3917
  %3920 = vset.pattern.permute.xlu0 65
  %3921 = vperm.xlu0 %3920, %v3842
  %v3922 = vpop.permute.xlu0 %3921
  %v3924 = vperm.slane %v3884, 0
  %v3925 = vadd.f32 %v3902, %v3924
  %v3926 = vadd.f32 %v3906, %v3924
  %v3927 = vadd.f32 %v3910, %v3924
  %v3928 = vadd.f32 %v3914, %v3924
  %v3929 = vadd.f32 %v3918, %v3924
  %v3930 = vadd.f32 %v3922, %v3924
  %vm3931 = vcmp.gt.f32.partialorder %v3925, 0.0
  %vm3932 = vcmp.gt.f32.partialorder %v3926, 0.0
  %vm3933 = vcmp.gt.f32.partialorder %v3927, 0.0
  %vm3934 = vcmp.gt.f32.partialorder %v3928, 0.0
  %vm3935 = vcmp.gt.f32.partialorder %v3929, 0.0
  %vm3936 = vcmp.gt.f32.partialorder %v3930, 0.0
  %v3937 = vmul.f32 %v3925, 0.2
  %v3938 = vmul.f32 %v3926, 0.2
  %v3939 = vmul.f32 %v3927, 0.2
  %v3940 = vmul.f32 %v3928, 0.2
  %v3941 = vmul.f32 %v3929, 0.2
  %v3942 = vmul.f32 %v3930, 0.2
  %v3943 = vsel %vm3931, %v3925, %v3937
  %v3944 = vsel %vm3932, %v3926, %v3938
  %v3945 = vsel %vm3933, %v3927, %v3939
  %v3946 = vsel %vm3934, %v3928, %v3940
  %v3947 = vsel %vm3935, %v3929, %v3941
  %v3948 = vsel %vm3936, %v3930, %v3942
  %v3949 = vadd.f32 %v3943, %v47
  %v3950 = vadd.f32 %v3944, %v48
  %v3951 = vadd.f32 %v3945, %v49
  %v3952 = vadd.f32 %v3946, %v50
  %v3953 = vadd.f32 %v3947, %v51
  %v3954 = vadd.f32 %v3948, %v52
  %v3955 = vsel %vm229, %v3949, -inf
  %3956 = vmax.xlane.f32.xlu0 %v3955
  %v3957 = vpop.xlane.xlu0 %3956
  %v3958 = vsel %vm229, %v3950, -inf
  %3959 = vmax.xlane.f32.xlu0 %v3958
  %v3960 = vpop.xlane.xlu0 %3959
  %v3961 = vsel %vm229, %v3951, -inf
  %3962 = vmax.xlane.f32.xlu0 %v3961
  %v3963 = vpop.xlane.xlu0 %3962
  %v3964 = vsel %vm229, %v3952, -inf
  %3965 = vmax.xlane.f32.xlu0 %v3964
  %v3966 = vpop.xlane.xlu0 %3965
  %v3967 = vsel %vm229, %v3953, -inf
  %3968 = vmax.xlane.f32.xlu0 %v3967
  %v3969 = vpop.xlane.xlu0 %3968
  %v3970 = vsel %vm245, %v3954, -inf
  %3971 = vmax.xlane.f32.xlu0 %v3970
  %v3972 = vpop.xlane.xlu0 %3971
  %v3973 = vsub.f32 %v3949, %v3957
  %v3974 = vsub.f32 %v3950, %v3960
  %v3975 = vsub.f32 %v3951, %v3963
  %v3976 = vsub.f32 %v3952, %v3966
  %v3977 = vsub.f32 %v3953, %v3969
  %v3978 = vsub.f32 %v3954, %v3972
  %v3979 = vmul.f32 %v3973, 1.442695
  %v3980 = vpow.pop %v3979
  %v3981 = vmul.f32 %v3974, 1.442695
  %v3982 = vpow.pop %v3981
  %v3983 = vmul.f32 %v3975, 1.442695
  %v3984 = vpow.pop %v3983
  %v3985 = vmul.f32 %v3976, 1.442695
  %v3986 = vpow.pop %v3985
  %v3987 = vmul.f32 %v3977, 1.442695
  %v3988 = vpow.pop %v3987
  %v3989 = vmul.f32 %v3978, 1.442695
  %v3990 = vpow.pop %v3989
  %v3991 = vsel %vm229, %v3980, 0.0
  %3992 = vadd.xlane.f32.xlu0 %v3991
  %v3993 = vpop.xlane.xlu0 %3992
  %v3994 = vsel %vm229, %v3982, 0.0
  %3995 = vadd.xlane.f32.xlu0 %v3994
  %v3996 = vpop.xlane.xlu0 %3995
  %v3997 = vsel %vm229, %v3984, 0.0
  %3998 = vadd.xlane.f32.xlu0 %v3997
  %v3999 = vpop.xlane.xlu0 %3998
  %v4000 = vsel %vm229, %v3986, 0.0
  %4001 = vadd.xlane.f32.xlu0 %v4000
  %v4002 = vpop.xlane.xlu0 %4001
  %v4003 = vsel %vm229, %v3988, 0.0
  %4004 = vadd.xlane.f32.xlu0 %v4003
  %v4005 = vpop.xlane.xlu0 %4004
  %v4006 = vsel %vm245, %v3990, 0.0
  %4007 = vadd.xlane.f32.xlu0 %v4006
  %v4008 = vpop.xlane.xlu0 %4007
  %v4009 = vrcp.pop %v3993
  %v4010 = vrcp.pop %v3996
  %v4011 = vrcp.pop %v3999
  %v4012 = vrcp.pop %v4002
  %v4013 = vrcp.pop %v4005
  %v4014 = vrcp.pop %v4008
  %v4015 = vmul.f32 %v3980, %v4009
  %v4016 = vmul.f32 %v3982, %v4010
  %v4017 = vmul.f32 %v3984, %v4011
  %v4018 = vmul.f32 %v3986, %v4012
  %v4019 = vmul.f32 %v3988, %v4013
  %v4020 = vmul.f32 %v3990, %v4014
  %v4022 = vperm.slane %v3773, 0
  %v4025 = vsel %vm229, %v4015, 0
  %v4028 = vsel %vm229, %v4016, 0
  %v4031 = vsel %vm229, %v4017, 0
  %v4034 = vsel %vm229, %v4018, 0
  %v4037 = vsel %vm229, %v4019, 0
  %v4040 = vsel %vm229, %v4020, 0
  %v4042 = vsel %vm318, %v3842, 0
  %4044 = vmatpush.msra.mxu0 0.0
  %4045 = vmatpush.msra.mxu0 0.0
  %4046 = vmatpush.msra.mxu0 0.0
  %4047 = vmatpush.msra.mxu0 0.0
  %4048 = vmatpush.msra.mxu0 0.0
  %4049 = vmatpush.msra.mxu0 0.0
  %4050 = vmatpush.msra.mxu0 0.0
  %4051 = vmatpush.msra.mxu0 0.0
  %4052 = vmatpush.msra.mxu0 0.0
  %4053 = vmatpush.msra.mxu0 0.0
  %4054 = vmatpush.msra.mxu0 %v4042
  %4055 = vmatpush.msra.mxu0 %v3839
  %4056 = vmatpush.msra.mxu0 %v3836
  %4057 = vmatpush.msra.mxu0 %v3833
  %4058 = vmatpush.msra.mxu0 %v3830
  %4059 = vmatpush.msra.mxu0 %v3827
  %4060 = vmatmul.f32.gmra.mxu0 %v4025
  %v4061 = vpop.f32.mrf.mxu0
  %v4062 = vadd.f32 %v4022, %v4061
  %4063 = vmatmul.f32.gmra.mxu0 %v4028
  %v4064 = vpop.f32.mrf.mxu0
  %v4065 = vadd.f32 %v4022, %v4064
  %4066 = vmatmul.f32.gmra.mxu0 %v4031
  %v4067 = vpop.f32.mrf.mxu0
  %v4068 = vadd.f32 %v4022, %v4067
  %4069 = vmatmul.f32.gmra.mxu0 %v4034
  %v4070 = vpop.f32.mrf.mxu0
  %v4071 = vadd.f32 %v4022, %v4070
  %4072 = vmatmul.f32.gmra.mxu0 %v4037
  %v4073 = vpop.f32.mrf.mxu0
  %v4074 = vadd.f32 %v4022, %v4073
  %4075 = vmatmul.f32.gmra.mxu0 %v4040
  %v4076 = vpop.f32.mrf.mxu0
  %v4077 = vadd.f32 %v4022, %v4076
  %4078 = vdwg.mxu0
  %v4079 = vmax.f32 %v4062, 0.0
  %v4080 = vmax.f32 %v4065, 0.0
  %v4081 = vmax.f32 %v4068, 0.0
  %v4082 = vmax.f32 %v4071, 0.0
  %v4083 = vmax.f32 %v4074, 0.0
  %v4084 = vmax.f32 %v4077, 0.0
  %v4085 = vld [vmem:[%s12] sm:$0xff]
  %v4086 = vld [vmem:[%s12 + $0x8] sm:$0xff]
  %v4087 = vld [vmem:[%s12 + $0x10] sm:$0xff]
  %v4088 = vld [vmem:[%s12 + $0x18] sm:$0xff]
  %v4089 = vld [vmem:[%s12 + $0x20] sm:$0xff]
  %v4090 = vld [vmem:[%s12 + $0x28] sm:$0xff]
  %v4091 = vld [vmem:[%s12 + $0x30] sm:$0xff]
  %v4092 = vld [vmem:[%s12 + $0x38] sm:$0xff]
  %v4093 = vld [vmem:[%s13] sm:$0x1]
  %v4095 = vsel %vm387, %v4079, 0
  %v4098 = vsel %vm387, %v4080, 0
  %v4101 = vsel %vm387, %v4081, 0
  %v4104 = vsel %vm387, %v4082, 0
  %v4107 = vsel %vm387, %v4083, 0
  %v4110 = vsel %vm387, %v4084, 0
  %4112 = vmatpush.msra.mxu0 0.0
  %4113 = vmatpush.msra.mxu0 0.0
  %4114 = vmatpush.msra.mxu0 0.0
  %4115 = vmatpush.msra.mxu0 0.0
  %4116 = vmatpush.msra.mxu0 0.0
  %4117 = vmatpush.msra.mxu0 0.0
  %4118 = vmatpush.msra.mxu0 0.0
  %4119 = vmatpush.msra.mxu0 0.0
  %4120 = vmatpush.msra.mxu0 %v4092
  %4121 = vmatpush.msra.mxu0 %v4091
  %4122 = vmatpush.msra.mxu0 %v4090
  %4123 = vmatpush.msra.mxu0 %v4089
  %4124 = vmatpush.msra.mxu0 %v4088
  %4125 = vmatpush.msra.mxu0 %v4087
  %4126 = vmatpush.msra.mxu0 %v4086
  %4127 = vmatpush.msra.mxu0 %v4085
  %4128 = vmatmul.f32.gmra.mxu0 %v4095
  %v4129 = vpop.f32.mrf.mxu0
  %v4130 = vadd.f32 0.0, %v4129
  %4131 = vmatmul.f32.gmra.mxu0 %v4098
  %v4132 = vpop.f32.mrf.mxu0
  %v4133 = vadd.f32 0.0, %v4132
  %4134 = vmatmul.f32.gmra.mxu0 %v4101
  %v4135 = vpop.f32.mrf.mxu0
  %v4136 = vadd.f32 0.0, %v4135
  %4137 = vmatmul.f32.gmra.mxu0 %v4104
  %v4138 = vpop.f32.mrf.mxu0
  %v4139 = vadd.f32 0.0, %v4138
  %4140 = vmatmul.f32.gmra.mxu0 %v4107
  %v4141 = vpop.f32.mrf.mxu0
  %v4142 = vadd.f32 0.0, %v4141
  %4143 = vmatmul.f32.gmra.mxu0 %v4110
  %v4144 = vpop.f32.mrf.mxu0
  %v4145 = vadd.f32 0.0, %v4144
  %4146 = vdwg.mxu0
  %4153 = vrot.lane.b32.xlu0 %v4130, 125
  %v4154 = vpop.permute.xlu0 %4153
  %4155 = vrot.lane.b32.xlu0 %v4133, 125
  %v4156 = vpop.permute.xlu0 %4155
  %4157 = vrot.lane.b32.xlu0 %v4136, 125
  %v4158 = vpop.permute.xlu0 %4157
  %4159 = vrot.lane.b32.xlu0 %v4139, 125
  %v4160 = vpop.permute.xlu0 %4159
  %4161 = vrot.lane.b32.xlu0 %v4142, 125
  %v4162 = vpop.permute.xlu0 %4161
  %4163 = vrot.lane.b32.xlu0 %v4145, 125
  %v4164 = vpop.permute.xlu0 %4163
  %4171 = vxpose.xlu0.b32.start [1/16] %v4154, 128
  %4172 = vxpose.xlu0.b32.cont [2/16] %v4156, 128
  %4173 = vxpose.xlu0.b32.cont [3/16] %v4158, 128
  %4174 = vxpose.xlu0.b32.cont [4/16] %v4160, 128
  %4175 = vxpose.xlu0.b32.cont [5/16] %v4162, 128
  %4176 = vxpose.xlu0.b32.cont [6/16] %v4164, 128
  %4177 = vxpose.xlu0.b32.cont [7/16] 0.0, 128
  %4178 = vxpose.xlu0.b32.cont [8/16] 0.0, 128
  %4179 = vxpose.xlu0.b32.cont [9/16] 0.0, 128
  %4180 = vxpose.xlu0.b32.cont [10/16] 0.0, 128
  %4181 = vxpose.xlu0.b32.cont [11/16] 0.0, 128
  %4182 = vxpose.xlu0.b32.cont [12/16] 0.0, 128
  %4183 = vxpose.xlu0.b32.cont [13/16] 0.0, 128
  %4184 = vxpose.xlu0.b32.cont [14/16] 0.0, 128
  %4185 = vxpose.xlu0.b32.cont [15/16] 0.0, 128
  %4186 = vxpose.xlu0.b32.end [16/16] 0.0, 128
  %v4187 = vpop.trf.xlu0
  %v4188 = vpop.trf.xlu0
  %v4189 = vpop.trf.xlu0
  %v4190 = vpop.trf.xlu0
  %v4191 = vpop.trf.xlu0
  %v4192 = vpop.trf.xlu0
  %v4193 = vpop.trf.xlu0
  %v4194 = vpop.trf.xlu0
  %v4195 = vpop.trf.xlu0
  %v4196 = vpop.trf.xlu0
  %v4197 = vpop.trf.xlu0
  %v4198 = vpop.trf.xlu0
  %v4199 = vpop.trf.xlu0
  %v4200 = vpop.trf.xlu0
  %v4201 = vpop.trf.xlu0
  %v4202 = vpop.trf.xlu0
  %4203 = vset.pattern.permute.xlu0 4
  %4204 = vperm.xlu0 %4203, %v4130
  %v4205 = vpop.permute.xlu0 %4204
  %4207 = vset.pattern.permute.xlu0 4
  %4208 = vperm.xlu0 %4207, %v4133
  %v4209 = vpop.permute.xlu0 %4208
  %4211 = vset.pattern.permute.xlu0 4
  %4212 = vperm.xlu0 %4211, %v4136
  %v4213 = vpop.permute.xlu0 %4212
  %4215 = vset.pattern.permute.xlu0 4
  %4216 = vperm.xlu0 %4215, %v4139
  %v4217 = vpop.permute.xlu0 %4216
  %4219 = vset.pattern.permute.xlu0 4
  %4220 = vperm.xlu0 %4219, %v4142
  %v4221 = vpop.permute.xlu0 %4220
  %4223 = vset.pattern.permute.xlu0 4
  %4224 = vperm.xlu0 %4223, %v4145
  %v4225 = vpop.permute.xlu0 %4224
  %v4227 = vperm.slane %v4187, 0
  %v4228 = vadd.f32 %v4205, %v4227
  %v4229 = vadd.f32 %v4209, %v4227
  %v4230 = vadd.f32 %v4213, %v4227
  %v4231 = vadd.f32 %v4217, %v4227
  %v4232 = vadd.f32 %v4221, %v4227
  %v4233 = vadd.f32 %v4225, %v4227
  %vm4234 = vcmp.gt.f32.partialorder %v4228, 0.0
  %vm4235 = vcmp.gt.f32.partialorder %v4229, 0.0
  %vm4236 = vcmp.gt.f32.partialorder %v4230, 0.0
  %vm4237 = vcmp.gt.f32.partialorder %v4231, 0.0
  %vm4238 = vcmp.gt.f32.partialorder %v4232, 0.0
  %vm4239 = vcmp.gt.f32.partialorder %v4233, 0.0
  %v4240 = vmul.f32 %v4228, 0.2
  %v4241 = vmul.f32 %v4229, 0.2
  %v4242 = vmul.f32 %v4230, 0.2
  %v4243 = vmul.f32 %v4231, 0.2
  %v4244 = vmul.f32 %v4232, 0.2
  %v4245 = vmul.f32 %v4233, 0.2
  %v4246 = vsel %vm4234, %v4228, %v4240
  %v4247 = vsel %vm4235, %v4229, %v4241
  %v4248 = vsel %vm4236, %v4230, %v4242
  %v4249 = vsel %vm4237, %v4231, %v4243
  %v4250 = vsel %vm4238, %v4232, %v4244
  %v4251 = vsel %vm4239, %v4233, %v4245
  %v4252 = vadd.f32 %v4246, %v47
  %v4253 = vadd.f32 %v4247, %v48
  %v4254 = vadd.f32 %v4248, %v49
  %v4255 = vadd.f32 %v4249, %v50
  %v4256 = vadd.f32 %v4250, %v51
  %v4257 = vadd.f32 %v4251, %v52
  %v4258 = vsel %vm229, %v4252, -inf
  %4259 = vmax.xlane.f32.xlu0 %v4258
  %v4260 = vpop.xlane.xlu0 %4259
  %v4261 = vsel %vm229, %v4253, -inf
  %4262 = vmax.xlane.f32.xlu0 %v4261
  %v4263 = vpop.xlane.xlu0 %4262
  %v4264 = vsel %vm229, %v4254, -inf
  %4265 = vmax.xlane.f32.xlu0 %v4264
  %v4266 = vpop.xlane.xlu0 %4265
  %v4267 = vsel %vm229, %v4255, -inf
  %4268 = vmax.xlane.f32.xlu0 %v4267
  %v4269 = vpop.xlane.xlu0 %4268
  %v4270 = vsel %vm229, %v4256, -inf
  %4271 = vmax.xlane.f32.xlu0 %v4270
  %v4272 = vpop.xlane.xlu0 %4271
  %v4273 = vsel %vm245, %v4257, -inf
  %4274 = vmax.xlane.f32.xlu0 %v4273
  %v4275 = vpop.xlane.xlu0 %4274
  %v4276 = vsub.f32 %v4252, %v4260
  %v4277 = vsub.f32 %v4253, %v4263
  %v4278 = vsub.f32 %v4254, %v4266
  %v4279 = vsub.f32 %v4255, %v4269
  %v4280 = vsub.f32 %v4256, %v4272
  %v4281 = vsub.f32 %v4257, %v4275
  %v4282 = vmul.f32 %v4276, 1.442695
  %v4283 = vpow.pop %v4282
  %v4284 = vmul.f32 %v4277, 1.442695
  %v4285 = vpow.pop %v4284
  %v4286 = vmul.f32 %v4278, 1.442695
  %v4287 = vpow.pop %v4286
  %v4288 = vmul.f32 %v4279, 1.442695
  %v4289 = vpow.pop %v4288
  %v4290 = vmul.f32 %v4280, 1.442695
  %v4291 = vpow.pop %v4290
  %v4292 = vmul.f32 %v4281, 1.442695
  %v4293 = vpow.pop %v4292
  %v4294 = vsel %vm229, %v4283, 0.0
  %4295 = vadd.xlane.f32.xlu0 %v4294
  %v4296 = vpop.xlane.xlu0 %4295
  %v4297 = vsel %vm229, %v4285, 0.0
  %4298 = vadd.xlane.f32.xlu0 %v4297
  %v4299 = vpop.xlane.xlu0 %4298
  %v4300 = vsel %vm229, %v4287, 0.0
  %4301 = vadd.xlane.f32.xlu0 %v4300
  %v4302 = vpop.xlane.xlu0 %4301
  %v4303 = vsel %vm229, %v4289, 0.0
  %4304 = vadd.xlane.f32.xlu0 %v4303
  %v4305 = vpop.xlane.xlu0 %4304
  %v4306 = vsel %vm229, %v4291, 0.0
  %4307 = vadd.xlane.f32.xlu0 %v4306
  %v4308 = vpop.xlane.xlu0 %4307
  %v4309 = vsel %vm245, %v4293, 0.0
  %4310 = vadd.xlane.f32.xlu0 %v4309
  %v4311 = vpop.xlane.xlu0 %4310
  %v4312 = vrcp.pop %v4296
  %v4313 = vrcp.pop %v4299
  %v4314 = vrcp.pop %v4302
  %v4315 = vrcp.pop %v4305
  %v4316 = vrcp.pop %v4308
  %v4317 = vrcp.pop %v4311
  %v4319 = vsel %vm229, %v4283, 0
  %v4322 = vsel %vm229, %v4285, 0
  %v4325 = vsel %vm229, %v4287, 0
  %v4328 = vsel %vm229, %v4289, 0
  %v4331 = vsel %vm229, %v4291, 0
  %v4334 = vsel %vm229, %v4293, 0
  %v4336 = vsel %vm318, %v4145, 0
  %4338 = vmatpush.msra.mxu0 0.0
  %4339 = vmatpush.msra.mxu0 0.0
  %4340 = vmatpush.msra.mxu0 0.0
  %4341 = vmatpush.msra.mxu0 0.0
  %4342 = vmatpush.msra.mxu0 0.0
  %4343 = vmatpush.msra.mxu0 0.0
  %4344 = vmatpush.msra.mxu0 0.0
  %4345 = vmatpush.msra.mxu0 0.0
  %4346 = vmatpush.msra.mxu0 0.0
  %4347 = vmatpush.msra.mxu0 0.0
  %4348 = vmatpush.msra.mxu0 %v4336
  %4349 = vmatpush.msra.mxu0 %v4142
  %4350 = vmatpush.msra.mxu0 %v4139
  %4351 = vmatpush.msra.mxu0 %v4136
  %4352 = vmatpush.msra.mxu0 %v4133
  %4353 = vmatpush.msra.mxu0 %v4130
  %4354 = vmatmul.f32.gmra.mxu0 %v4319
  %v4355 = vpop.f32.mrf.mxu0
  %v4356 = vadd.f32 0.0, %v4355
  %4357 = vmatmul.f32.gmra.mxu0 %v4322
  %v4358 = vpop.f32.mrf.mxu0
  %v4359 = vadd.f32 0.0, %v4358
  %4360 = vmatmul.f32.gmra.mxu0 %v4325
  %v4361 = vpop.f32.mrf.mxu0
  %v4362 = vadd.f32 0.0, %v4361
  %4363 = vmatmul.f32.gmra.mxu0 %v4328
  %v4364 = vpop.f32.mrf.mxu0
  %v4365 = vadd.f32 0.0, %v4364
  %4366 = vmatmul.f32.gmra.mxu0 %v4331
  %v4367 = vpop.f32.mrf.mxu0
  %v4368 = vadd.f32 0.0, %v4367
  %4369 = vmatmul.f32.gmra.mxu0 %v4334
  %v4370 = vpop.f32.mrf.mxu0
  %v4371 = vadd.f32 0.0, %v4370
  %4372 = vdwg.mxu0
  %v4373 = vmul.f32 %v4356, %v4312
  %v4374 = vmul.f32 %v4359, %v4313
  %v4375 = vmul.f32 %v4362, %v4314
  %v4376 = vmul.f32 %v4365, %v4315
  %v4377 = vmul.f32 %v4368, %v4316
  %v4378 = vmul.f32 %v4371, %v4317
  %v4380 = vperm.slane %v4093, 0
  %v4382 = vadd.f32 %v4373, %v4380
  %v4383 = vadd.f32 %v4374, %v4380
  %v4384 = vadd.f32 %v4375, %v4380
  %v4385 = vadd.f32 %v4376, %v4380
  %v4386 = vadd.f32 %v4377, %v4380
  %v4387 = vadd.f32 %v4378, %v4380
  %vm4388 = vcmask 23552
  %4389 = vst.msk [vmem:[%s14] sm:$0xff] %vm4388, %v4382
  %4390 = vst.msk [vmem:[%s14 + $0x8] sm:$0xff] %vm4388, %v4383
  %4391 = vst.msk [vmem:[%s14 + $0x10] sm:$0xff] %vm4388, %v4384
  %4392 = vst.msk [vmem:[%s14 + $0x18] sm:$0xff] %vm4388, %v4385
  %4393 = vst.msk [vmem:[%s14 + $0x20] sm:$0xff] %vm4388, %v4386
  %vm4394 = vcmask 17408
  %4395 = vst.msk [vmem:[%s14 + $0x28] sm:$0x3] %vm4394, %v4387
  // Predicated region
  $region58: #{gat_model_forward.1} parent=0 // pred_check
    _
  $region59: #{gat_model_forward.1} parent=0 // pred_check_branch
    %4397 = sbr.rel (0) target = $region61
  $region60: #{gat_model_forward.1} parent=0 // pred_region
    _
  $region61: #{gat_model_forward.1} parent=0 // pred_fallthru
    _
  // Predicated region
  $region62: #{gat_model_forward.1} parent=0 // pred_check
    _
  $region63: #{gat_model_forward.1} parent=0 // pred_check_branch
    %4399 = sbr.rel (0) target = $region65
  $region64: #{gat_model_forward.1} parent=0 // pred_region
    _
  $region65: #{gat_model_forward.1} parent=0 // pred_fallthru
    _

</llo_original>
